<compile_context>
chip_gen: v7x
topology: tpu7x:2x2x1
jax: 0.10.0
libtpu: 0.0.40
codegen_flags: <defaults>
</compile_context>

<pallas_src>
import functools

import jax
import jax.numpy as jnp
from jax.experimental import pallas as pl
from jax.experimental.pallas import tpu as pltpu

LANE = 128
SUBLANE = 8
MAX_BATCH_TILE = 32          # keep the per-step working batch tile <= 32 rows
GATE_PERM = (0, 1, 3, 2)     # kernel gate slot k holds logical gate GATE_PERM[k]
                             # logical (PyTorch) order: (i, f, g, o)


def _round_up(x, m):
    return (x + m - 1) // m * m


def _recommend_split_k():
    """On v5e/v5p (128-deep MXU) split the fused K=2*Hp dot into two K=Hp dots."""
    try:
        kind = jax.devices()[0].device_kind.lower()
    except Exception:
        return False
    return "v5" in kind


def make_lstm_kernel(T, Bt, layer_dim, Hp, split_k):
    n_mid = 2 * (layer_dim - 1)
    unroll = T if T <= 16 else 8     # bound unroll for long recurrences

    def kernel(*refs):
        # refs = x2d, wih0, b0, whh0, (W_l, b_l) for l=1..L-1, wfc, bfc,
        #        out_ref, gih0_scratch
        x2d_ref = refs[0]
        wih0_ref, b0_ref, whh0_ref = refs[1], refs[2], refs[3]
        mid_refs = refs[4:4 + n_mid]
        wfc_ref = refs[4 + n_mid]
        bfc_ref = refs[5 + n_mid]
        out_ref = refs[6 + n_mid]
        gih0_sc = refs[7 + n_mid]

        # Hoisted layer-0 input projection: one (T*Bt, D_in) x (D_in, 4*Hp)
        # bf16 matmul (f32 accumulation) for the whole sequence, bias folded
        # in, off the serial recurrence path.
        # TODO(synk): for very long T on v7x (64 MiB VMEM) store this bf16 or
        # compute it in T-chunks instead of one f32 slab.
        gih0_sc[...] = (jnp.dot(x2d_ref[...], wih0_ref[...],
                                preferred_element_type=jnp.float32)
                        + b0_ref[...])

        def sigmoid(x):
            # One EUP tanh per sigmoid instead of exp + full-precision divide.
            return 0.5 * jnp.tanh(0.5 * x) + 0.5

        def cell(gates, c_prev):
            # Gate order (i, f, o, g): one contiguous lane-aligned sigmoid slab.
            sig = sigmoid(gates[:, :3 * Hp])
            i_g = sig[:, 0 * Hp:1 * Hp]
            f_g = sig[:, 1 * Hp:2 * Hp]
            o_g = sig[:, 2 * Hp:3 * Hp]
            g_g = jnp.tanh(gates[:, 3 * Hp:4 * Hp])
            c_new = f_g * c_prev + i_g * g_g
            h_new = o_g * jnp.tanh(c_new)
            return h_new, c_new

        # Hoist loop-invariant weight reads and bias broadcasts out of the
        # (unrolled) recurrence.
        whh0 = whh0_ref[...]                                    # (Hp, 4Hp) bf16
        mids = []
        for l in range(1, layer_dim):
            W = mid_refs[2 * (l - 1)][...]                      # (2Hp, 4Hp) bf16
            b = jnp.broadcast_to(mid_refs[2 * (l - 1) + 1][...],
                                 (Bt, 4 * Hp)).astype(jnp.float32)
            if split_k:
                mids.append((W[:Hp, :], W[Hp:, :], b))
            else:
                mids.append((W, b))

        zeros = jnp.zeros((Bt, Hp), jnp.float32)
        init = (tuple(zeros for _ in range(layer_dim)),
                tuple(zeros for _ in range(layer_dim)))

        # TODO(synk): recurrent weights are still re-streamed through the MXU
        # each step; weight-stationary driving (pltpu.matmul_push_rhs /
        # matmul_acc_lhs / matmul_pop) would cut per-step MXU occupancy ~K/M
        # but needs per-generation staging-register tiling of the wide RHS.
        def step(t, carry):
            h, c = carry
            h, c = list(h), list(c)
            # Layer 0: input projection precomputed; only the h-recurrence here.
            row = pl.multiple_of(t * Bt, Bt)
            gates = (gih0_sc[pl.ds(row, Bt), :]
                     + jnp.dot(h[0].astype(jnp.bfloat16), whh0,
                               preferred_element_type=jnp.float32))
            h[0], c[0] = cell(gates, c[0])
            inp = h[0]
            # Layers >= 1.
            for l in range(1, layer_dim):
                xl = inp.astype(jnp.bfloat16)
                hl = h[l].astype(jnp.bfloat16)
                if split_k:
                    Wx, Wh, b = mids[l - 1]
                    gates = (jnp.dot(xl, Wx, preferred_element_type=jnp.float32)
                             + jnp.dot(hl, Wh, preferred_element_type=jnp.float32)
                             + b)
                else:
                    W, b = mids[l - 1]
                    xh = jnp.concatenate([xl, hl], axis=1)       # (Bt, 2Hp)
                    gates = jnp.dot(xh, W,
                                    preferred_element_type=jnp.float32) + b
                h[l], c[l] = cell(gates, c[l])
                inp = h[l]
            return tuple(h), tuple(c)

        h_fin, _ = jax.lax.fori_loop(0, T, step, init, unroll=unroll)

        out_ref[...] = (jnp.dot(h_fin[layer_dim - 1].astype(jnp.bfloat16),
                                wfc_ref[...],
                                preferred_element_type=jnp.float32)
                        + bfc_ref[...])

    return kernel


def lstm_traj_batch(seq3d, kparams, *, nb, T, Bt, layer_dim, Hp, Op):
    """seq3d: (nb, T*Bt, D_in) bf16; within a block, row index = t*Bt + b."""
    D_in = seq3d.shape[-1]
    split_k = _recommend_split_k()
    kernel = make_lstm_kernel(T, Bt, layer_dim, Hp, split_k)

    flat = [seq3d, kparams["wih0"], kparams["b0"], kparams["whh0"]]
    for (W, b) in kparams["layers"]:
        flat += [W, b]
    flat += [kparams["wfc"], kparams["bfc"]]

    def resident(a):
        # Weights / biases: full-array block, constant index -> stays in VMEM.
        nd = a.ndim
        return pl.BlockSpec(a.shape, lambda i, _nd=nd: (0,) * _nd)

    in_specs = [pl.BlockSpec((None, T * Bt, D_in), lambda i: (i, 0, 0))]
    in_specs += [resident(a) for a in flat[1:]]
    out_spec = pl.BlockSpec((Bt, Op), lambda i: (i, 0))

    scratch_bytes = 4 * T * Bt * 4 * Hp
    in_bytes = sum(int(a.size) * a.dtype.itemsize for a in flat)
    out_bytes = 4 * nb * Bt * Op
    footprint = 2 * (in_bytes + out_bytes) + scratch_bytes
    vmem_limit = int(max(32 << 20, min(96 << 20, 2 * footprint + (8 << 20))))

    flops = 2 * nb * (T * Bt * D_in * 4 * Hp            # hoisted input projection
                      + T * Bt * Hp * 4 * Hp            # layer-0 recurrence
                      + (layer_dim - 1) * T * Bt * 2 * Hp * 4 * Hp
                      + Bt * Hp * Op)                   # fc
    transcendentals = nb * T * layer_dim * Bt * Hp * 5
    bytes_accessed = in_bytes + out_bytes

    return pl.pallas_call(
        kernel,
        out_shape=jax.ShapeDtypeStruct((nb * Bt, Op), jnp.float32),
        grid_spec=pltpu.PrefetchScalarGridSpec(
            num_scalar_prefetch=0,
            grid=(nb,),
            in_specs=in_specs,
            out_specs=out_spec,
            scratch_shapes=[pltpu.VMEM((T * Bt, 4 * Hp), jnp.float32)]),
        compiler_params=pltpu.CompilerParams(
            dimension_semantics=("parallel",),
            vmem_limit_bytes=vmem_limit),
        cost_estimate=pl.CostEstimate(flops=flops,
                                      transcendentals=transcendentals,
                                      bytes_accessed=bytes_accessed),
    )(*flat)


def pack_params(params, *, hidden_dim, output_dim):
    """Pad/stack logical params into lane-aligned, gate-reordered bf16 layout."""
    H = hidden_dim
    Hp = _round_up(max(H, 1), LANE)
    Op = _round_up(max(output_dim, 1), LANE)

    def pad_gates(w):
        # (D, 4H) logical (i,f,g,o) -> (D, 4*Hp) kernel order (i,f,o,g);
        # gate k occupies lanes [k*Hp, k*Hp + H); padded lanes stay zero so
        # padded h/c lanes remain exactly zero through the recurrence.
        D = w.shape[0]
        out = jnp.zeros((D, 4 * Hp), jnp.float32)
        for k_dst, k_src in enumerate(GATE_PERM):
            out = out.at[:, k_dst * Hp:k_dst * Hp + H].set(
                w[:, k_src * H:(k_src + 1) * H])
        return out

    def pad_rows(w, Dp):
        return jnp.zeros((Dp, w.shape[1]), w.dtype).at[:w.shape[0]].set(w)

    wih0, whh0, b0 = params["layers"][0]
    kp = {
        "wih0": pad_gates(wih0).astype(jnp.bfloat16),             # (D_in, 4Hp)
        "b0": pad_gates(b0),                                      # (1, 4Hp) f32
        "whh0": pad_rows(pad_gates(whh0), Hp).astype(jnp.bfloat16),  # (Hp, 4Hp)
        "layers": [],
    }
    for l in range(1, len(params["layers"])):
        wih, whh, b = params["layers"][l]
        W = jnp.concatenate([pad_rows(pad_gates(wih), Hp),
                             pad_rows(pad_gates(whh), Hp)],
                            axis=0).astype(jnp.bfloat16)          # (2Hp, 4Hp)
        kp["layers"].append((W, pad_gates(b)))
    wfc, bfc = params["fc"]
    kp["wfc"] = (jnp.zeros((Hp, Op), jnp.float32)
                 .at[:H, :output_dim].set(wfc).astype(jnp.bfloat16))
    kp["bfc"] = jnp.zeros((1, Op), jnp.float32).at[:, :output_dim].set(bfc)
    return kp, Hp, Op


def lstm_model_forward(x, params, *, num_ids, input_dim, hidden_dim,
                       layer_dim, output_dim):
    """Mirrors LSTMModel.forward: group rows by id (col 0), run LSTM per id."""
    # torch.unique returns sorted ids; within an id the masked rows keep their
    # original order -> stable sort on the id column reproduces the grouping.
    order = jnp.argsort(x[:, 0], stable=True)
    xs = x[order][:, 1:]
    T = x.shape[0] // num_ids
    # TODO(synk): assumes equal-length trajectories (T rows per id).
    grouped = xs.reshape(num_ids, T, input_dim)       # (B, T, D)
    seq = jnp.transpose(grouped, (1, 0, 2))           # (T, B, D) time-major

    B = num_ids
    Bt = min(MAX_BATCH_TILE, max(SUBLANE, _round_up(B, SUBLANE)))
    nb = (B + Bt - 1) // Bt
    Bp = nb * Bt
    seq = jnp.pad(seq, ((0, 0), (0, Bp - B), (0, 0)))
    # (T, nb, Bt, D) -> (nb, T, Bt, D) -> (nb, T*Bt, D); in-block row = t*Bt+b.
    seq3d = (seq.reshape(T, nb, Bt, input_dim)
             .transpose(1, 0, 2, 3)
             .reshape(nb, T * Bt, input_dim)
             .astype(jnp.bfloat16))

    kparams, Hp, Op = pack_params(params, hidden_dim=hidden_dim,
                                  output_dim=output_dim)
    out_p = lstm_traj_batch(seq3d, kparams, nb=nb, T=T, Bt=Bt,
                            layer_dim=layer_dim, Hp=Hp, Op=Op)
    return out_p[:B, :output_dim]


def init_params(key, input_dim, hidden_dim, layer_dim, output_dim):
    """Deterministic U(-1/sqrt(H), 1/sqrt(H)) init (matches PyTorch LSTM/Linear)."""
    H = hidden_dim
    bound = 1.0 / jnp.sqrt(jnp.array(H, jnp.float32))
    layers = []
    for l in range(layer_dim):
        d_in = input_dim if l == 0 else hidden_dim
        key, k1, k2, k3, k4 = jax.random.split(key, 5)
        wih = jax.random.uniform(k1, (d_in, 4 * H), jnp.float32, -bound, bound)
        whh = jax.random.uniform(k2, (H, 4 * H), jnp.float32, -bound, bound)
        b_ih = jax.random.uniform(k3, (4 * H,), jnp.float32, -bound, bound)
        b_hh = jax.random.uniform(k4, (4 * H,), jnp.float32, -bound, bound)
        layers.append((wih, whh, (b_ih + b_hh).reshape(1, 4 * H)))
    key, k5, k6 = jax.random.split(key, 3)
    wfc = jax.random.uniform(k5, (H, output_dim), jnp.float32, -bound, bound)
    bfc = jax.random.uniform(k6, (output_dim,), jnp.float32,
                             -bound, bound).reshape(1, output_dim)
    return {"layers": layers, "fc": (wfc, bfc)}


def reference_forward(x, params, *, num_ids, input_dim, hidden_dim,
                      layer_dim, output_dim):
    """Pure-JAX f32 reference for correctness checking."""
    order = jnp.argsort(x[:, 0], stable=True)
    xs = x[order][:, 1:]
    T = x.shape[0] // num_ids
    grouped = xs.reshape(num_ids, T, input_dim)
    B, H = num_ids, hidden_dim
    h = jnp.zeros((layer_dim, B, H), jnp.float32)
    c = jnp.zeros((layer_dim, B, H), jnp.float32)
    for t in range(T):
        inp = grouped[:, t, :]
        for l in range(layer_dim):
            wih, whh, b = params["layers"][l]
            g = inp @ wih + h[l] @ whh + b
            i_g = jax.nn.sigmoid(g[:, 0:H])
            f_g = jax.nn.sigmoid(g[:, H:2 * H])
            g_g = jnp.tanh(g[:, 2 * H:3 * H])
            o_g = jax.nn.sigmoid(g[:, 3 * H:4 * H])
            c_new = f_g * c[l] + i_g * g_g
            h_new = o_g * jnp.tanh(c_new)
            c = c.at[l].set(c_new)
            h = h.at[l].set(h_new)
            inp = h_new
    wfc, bfc = params["fc"]
    return h[layer_dim - 1] @ wfc + bfc


if __name__ == "__main__":
    input_dim = 8
    hidden_dim = 32
    layer_dim = 2
    output_dim = 2
    num_ids = 4     # number of unique trajectory ids
    seq_len = 8     # rows per id

    key = jax.random.PRNGKey(0)
    kp, kx = jax.random.split(key)
    params = init_params(kp, input_dim, hidden_dim, layer_dim, output_dim)

    # Build x: (num_ids*seq_len, 1 + input_dim); col 0 = id, ids interleaved.
    feats = jax.random.normal(kx, (num_ids * seq_len, input_dim), jnp.float32)
    ids = jnp.tile(jnp.arange(num_ids, dtype=jnp.float32), seq_len)
    x = jnp.concatenate([ids[:, None], feats], axis=1)

    fwd = functools.partial(lstm_model_forward, num_ids=num_ids,
                            input_dim=input_dim, hidden_dim=hidden_dim,
                            layer_dim=layer_dim, output_dim=output_dim)
    out = jax.block_until_ready(fwd(x, params))

    ref = reference_forward(x, params, num_ids=num_ids, input_dim=input_dim,
                            hidden_dim=hidden_dim, layer_dim=layer_dim,
                            output_dim=output_dim)
    assert out.shape == (num_ids, output_dim)
    # bf16 matmul operands (f32 accumulation) vs f32 reference -> looser tol.
    assert jnp.allclose(out, ref, atol=3e-2, rtol=3e-2), (out, ref)
    print("KERNEL_OK")
</pallas_src>

<mosaic_0001>
module attributes {stable_mosaic.version = 11 : i64} {
  func.func @kernel(%arg0: i32, %arg1: memref<1x64x8xbf16, #tpu.memory_space<vmem>>, %arg2: memref<8x512xbf16, #tpu.memory_space<vmem>>, %arg3: memref<1x512xf32, #tpu.memory_space<vmem>>, %arg4: memref<128x512xbf16, #tpu.memory_space<vmem>>, %arg5: memref<256x512xbf16, #tpu.memory_space<vmem>>, %arg6: memref<1x512xf32, #tpu.memory_space<vmem>>, %arg7: memref<128x128xbf16, #tpu.memory_space<vmem>>, %arg8: memref<1x128xf32, #tpu.memory_space<vmem>>, %arg9: memref<8x128xf32, #tpu.memory_space<vmem>>, %arg10: memref<64x512xf32, #tpu.memory_space<vmem>>) attributes {dimension_semantics = [#tpu.dimension_semantics<parallel>], iteration_bounds = array<i64: 1>, scalar_prefetch = 0 : i64, scratch_operands = 1 : i64, tpu.core_type = #tpu.core_type<tc>, window_params = [{transform_indices = @transform_0, window_bounds = array<i64: 1, 64, 8>}, {pipeline_mode = #tpu.pipeline_mode<synchronous>, transform_indices = @transform_1, window_bounds = array<i64: 8, 512>}, {pipeline_mode = #tpu.pipeline_mode<synchronous>, transform_indices = @transform_2, window_bounds = array<i64: 1, 512>}, {pipeline_mode = #tpu.pipeline_mode<synchronous>, transform_indices = @transform_3, window_bounds = array<i64: 128, 512>}, {pipeline_mode = #tpu.pipeline_mode<synchronous>, transform_indices = @transform_4, window_bounds = array<i64: 256, 512>}, {pipeline_mode = #tpu.pipeline_mode<synchronous>, transform_indices = @transform_5, window_bounds = array<i64: 1, 512>}, {pipeline_mode = #tpu.pipeline_mode<synchronous>, transform_indices = @transform_6, window_bounds = array<i64: 128, 128>}, {pipeline_mode = #tpu.pipeline_mode<synchronous>, transform_indices = @transform_7, window_bounds = array<i64: 1, 128>}, {transform_indices = @transform_8, window_bounds = array<i64: 8, 128>}]} {
    %c0 = arith.constant 0 : index
    %c0_0 = arith.constant 0 : index
    %c0_1 = arith.constant 0 : index
    %0 = vector.load %arg1[%c0, %c0_0, %c0_1] : memref<1x64x8xbf16, #tpu.memory_space<vmem>>, vector<1x64x8xbf16>
    %1 = vector.shape_cast %0 : vector<1x64x8xbf16> to vector<64x8xbf16>
    %c0_2 = arith.constant 0 : index
    %c0_3 = arith.constant 0 : index
    %2 = vector.load %arg2[%c0_2, %c0_3] : memref<8x512xbf16, #tpu.memory_space<vmem>>, vector<8x512xbf16>
    %cst = arith.constant dense<0.000000e+00> : vector<64x512xf32>
    %3 = tpu.matmul %1, %2, %cst {dimension_numbers = #tpu.dot_dimension_numbers<[1], [0], [0], [1], [0, 0, 1, 1], [], []>} : vector<64x8xbf16>, vector<8x512xbf16>, vector<64x512xf32> -> vector<64x512xf32>
    %c0_4 = arith.constant 0 : index
    %c0_5 = arith.constant 0 : index
    %4 = vector.load %arg3[%c0_4, %c0_5] : memref<1x512xf32, #tpu.memory_space<vmem>>, vector<1x512xf32>
    %5 = vector.broadcast %4 : vector<1x512xf32> to vector<64x512xf32>
    %6 = arith.addf %3, %5 : vector<64x512xf32>
    %c0_6 = arith.constant 0 : index
    %c0_7 = arith.constant 0 : index
    %7 = vector.load %arg10[%c0_6, %c0_7] : memref<64x512xf32, #tpu.memory_space<vmem>>, vector<64x512xf32>
    tpu.vector_store %arg10[%c0_6, %c0_7], %6 {strides = array<i32>} : memref<64x512xf32, #tpu.memory_space<vmem>>, vector<64x512xf32>,
    %c0_8 = arith.constant 0 : index
    %c0_9 = arith.constant 0 : index
    %8 = vector.load %arg4[%c0_8, %c0_9] : memref<128x512xbf16, #tpu.memory_space<vmem>>, vector<128x512xbf16>
    %c0_10 = arith.constant 0 : index
    %c0_11 = arith.constant 0 : index
    %9 = vector.load %arg5[%c0_10, %c0_11] : memref<256x512xbf16, #tpu.memory_space<vmem>>, vector<256x512xbf16>
    %c0_12 = arith.constant 0 : index
    %c0_13 = arith.constant 0 : index
    %10 = vector.load %arg6[%c0_12, %c0_13] : memref<1x512xf32, #tpu.memory_space<vmem>>, vector<1x512xf32>
    %11 = vector.shape_cast %10 : vector<1x512xf32> to vector<1x512xf32>
    %12 = vector.broadcast %11 : vector<1x512xf32> to vector<8x512xf32>
    %cst_14 = arith.constant 0.000000e+00 : f32
    %13 = vector.broadcast %cst_14 : f32 to vector<8x128xf32>
    %c0_i32 = arith.constant 0 : i32
    %c8_i32 = arith.constant 8 : i32
    %14 = arith.muli %c0_i32, %c8_i32 : i32
    %15 = tpu.assume_multiple %14, 8 : i32
    %16 = arith.index_cast %15 : i32 to index
    %c0_15 = arith.constant 0 : index
    %17 = vector.load %arg10[%16, %c0_15] : memref<64x512xf32, #tpu.memory_space<vmem>>, vector<8x512xf32>
    %18 = arith.truncf %13 : vector<8x128xf32> to vector<8x128xbf16>
    %cst_16 = arith.constant dense<0.000000e+00> : vector<8x512xf32>
    %19 = tpu.matmul %18, %8, %cst_16 {dimension_numbers = #tpu.dot_dimension_numbers<[1], [0], [0], [1], [0, 0, 1, 1], [], []>} : vector<8x128xbf16>, vector<128x512xbf16>, vector<8x512xf32> -> vector<8x512xf32>
    %20 = arith.addf %17, %19 : vector<8x512xf32>
    %21 = vector.extract_strided_slice %20 {offsets = [0, 0], sizes = [8, 384], strides = [1, 1]} : vector<8x512xf32> to vector<8x384xf32>
    %cst_17 = arith.constant 5.000000e-01 : f32
    %22 = vector.broadcast %cst_17 : f32 to vector<8x384xf32>
    %23 = arith.mulf %22, %21 : vector<8x384xf32>
    %24 = math.tanh %23 : vector<8x384xf32>
    %cst_18 = arith.constant 5.000000e-01 : f32
    %25 = vector.broadcast %cst_18 : f32 to vector<8x384xf32>
    %26 = arith.mulf %25, %24 : vector<8x384xf32>
    %cst_19 = arith.constant 5.000000e-01 : f32
    %27 = vector.broadcast %cst_19 : f32 to vector<8x384xf32>
    %28 = arith.addf %26, %27 : vector<8x384xf32>
    %29 = vector.extract_strided_slice %28 {offsets = [0, 0], sizes = [8, 128], strides = [1, 1]} : vector<8x384xf32> to vector<8x128xf32>
    %30 = vector.extract_strided_slice %28 {offsets = [0, 128], sizes = [8, 128], strides = [1, 1]} : vector<8x384xf32> to vector<8x128xf32>
    %31 = vector.extract_strided_slice %28 {offsets = [0, 256], sizes = [8, 128], strides = [1, 1]} : vector<8x384xf32> to vector<8x128xf32>
    %32 = vector.extract_strided_slice %20 {offsets = [0, 384], sizes = [8, 128], strides = [1, 1]} : vector<8x512xf32> to vector<8x128xf32>
    %33 = math.tanh %32 : vector<8x128xf32>
    %34 = arith.mulf %30, %13 : vector<8x128xf32>
    %35 = arith.mulf %29, %33 : vector<8x128xf32>
    %36 = arith.addf %34, %35 : vector<8x128xf32>
    %37 = math.tanh %36 : vector<8x128xf32>
    %38 = arith.mulf %31, %37 : vector<8x128xf32>
    %39 = arith.truncf %38 : vector<8x128xf32> to vector<8x128xbf16>
    %40 = arith.truncf %13 : vector<8x128xf32> to vector<8x128xbf16>
    %41 = tpu.concatenate %39, %40 in 1 : vector<8x128xbf16>, vector<8x128xbf16> -> vector<8x256xbf16>
    %cst_20 = arith.constant dense<0.000000e+00> : vector<8x512xf32>
    %42 = tpu.matmul %41, %9, %cst_20 {dimension_numbers = #tpu.dot_dimension_numbers<[1], [0], [0], [1], [0, 0, 1, 1], [], []>} : vector<8x256xbf16>, vector<256x512xbf16>, vector<8x512xf32> -> vector<8x512xf32>
    %43 = arith.addf %42, %12 : vector<8x512xf32>
    %44 = vector.extract_strided_slice %43 {offsets = [0, 0], sizes = [8, 384], strides = [1, 1]} : vector<8x512xf32> to vector<8x384xf32>
    %cst_21 = arith.constant 5.000000e-01 : f32
    %45 = vector.broadcast %cst_21 : f32 to vector<8x384xf32>
    %46 = arith.mulf %45, %44 : vector<8x384xf32>
    %47 = math.tanh %46 : vector<8x384xf32>
    %cst_22 = arith.constant 5.000000e-01 : f32
    %48 = vector.broadcast %cst_22 : f32 to vector<8x384xf32>
    %49 = arith.mulf %48, %47 : vector<8x384xf32>
    %cst_23 = arith.constant 5.000000e-01 : f32
    %50 = vector.broadcast %cst_23 : f32 to vector<8x384xf32>
    %51 = arith.addf %49, %50 : vector<8x384xf32>
    %52 = vector.extract_strided_slice %51 {offsets = [0, 0], sizes = [8, 128], strides = [1, 1]} : vector<8x384xf32> to vector<8x128xf32>
    %53 = vector.extract_strided_slice %51 {offsets = [0, 128], sizes = [8, 128], strides = [1, 1]} : vector<8x384xf32> to vector<8x128xf32>
    %54 = vector.extract_strided_slice %51 {offsets = [0, 256], sizes = [8, 128], strides = [1, 1]} : vector<8x384xf32> to vector<8x128xf32>
    %55 = vector.extract_strided_slice %43 {offsets = [0, 384], sizes = [8, 128], strides = [1, 1]} : vector<8x512xf32> to vector<8x128xf32>
    %56 = math.tanh %55 : vector<8x128xf32>
    %57 = arith.mulf %53, %13 : vector<8x128xf32>
    %58 = arith.mulf %52, %56 : vector<8x128xf32>
    %59 = arith.addf %57, %58 : vector<8x128xf32>
    %60 = math.tanh %59 : vector<8x128xf32>
    %61 = arith.mulf %54, %60 : vector<8x128xf32>
    %c1_i32 = arith.constant 1 : i32
    %c8_i32_24 = arith.constant 8 : i32
    %62 = arith.muli %c1_i32, %c8_i32_24 : i32
    %63 = tpu.assume_multiple %62, 8 : i32
    %64 = arith.index_cast %63 : i32 to index
    %c0_25 = arith.constant 0 : index
    %65 = vector.load %arg10[%64, %c0_25] : memref<64x512xf32, #tpu.memory_space<vmem>>, vector<8x512xf32>
    %66 = arith.truncf %38 : vector<8x128xf32> to vector<8x128xbf16>
    %cst_26 = arith.constant dense<0.000000e+00> : vector<8x512xf32>
    %67 = tpu.matmul %66, %8, %cst_26 {dimension_numbers = #tpu.dot_dimension_numbers<[1], [0], [0], [1], [0, 0, 1, 1], [], []>} : vector<8x128xbf16>, vector<128x512xbf16>, vector<8x512xf32> -> vector<8x512xf32>
    %68 = arith.addf %65, %67 : vector<8x512xf32>
    %69 = vector.extract_strided_slice %68 {offsets = [0, 0], sizes = [8, 384], strides = [1, 1]} : vector<8x512xf32> to vector<8x384xf32>
    %cst_27 = arith.constant 5.000000e-01 : f32
    %70 = vector.broadcast %cst_27 : f32 to vector<8x384xf32>
    %71 = arith.mulf %70, %69 : vector<8x384xf32>
    %72 = math.tanh %71 : vector<8x384xf32>
    %cst_28 = arith.constant 5.000000e-01 : f32
    %73 = vector.broadcast %cst_28 : f32 to vector<8x384xf32>
    %74 = arith.mulf %73, %72 : vector<8x384xf32>
    %cst_29 = arith.constant 5.000000e-01 : f32
    %75 = vector.broadcast %cst_29 : f32 to vector<8x384xf32>
    %76 = arith.addf %74, %75 : vector<8x384xf32>
    %77 = vector.extract_strided_slice %76 {offsets = [0, 0], sizes = [8, 128], strides = [1, 1]} : vector<8x384xf32> to vector<8x128xf32>
    %78 = vector.extract_strided_slice %76 {offsets = [0, 128], sizes = [8, 128], strides = [1, 1]} : vector<8x384xf32> to vector<8x128xf32>
    %79 = vector.extract_strided_slice %76 {offsets = [0, 256], sizes = [8, 128], strides = [1, 1]} : vector<8x384xf32> to vector<8x128xf32>
    %80 = vector.extract_strided_slice %68 {offsets = [0, 384], sizes = [8, 128], strides = [1, 1]} : vector<8x512xf32> to vector<8x128xf32>
    %81 = math.tanh %80 : vector<8x128xf32>
    %82 = arith.mulf %78, %36 : vector<8x128xf32>
    %83 = arith.mulf %77, %81 : vector<8x128xf32>
    %84 = arith.addf %82, %83 : vector<8x128xf32>
    %85 = math.tanh %84 : vector<8x128xf32>
    %86 = arith.mulf %79, %85 : vector<8x128xf32>
    %87 = arith.truncf %86 : vector<8x128xf32> to vector<8x128xbf16>
    %88 = arith.truncf %61 : vector<8x128xf32> to vector<8x128xbf16>
    %89 = tpu.concatenate %87, %88 in 1 : vector<8x128xbf16>, vector<8x128xbf16> -> vector<8x256xbf16>
    %cst_30 = arith.constant dense<0.000000e+00> : vector<8x512xf32>
    %90 = tpu.matmul %89, %9, %cst_30 {dimension_numbers = #tpu.dot_dimension_numbers<[1], [0], [0], [1], [0, 0, 1, 1], [], []>} : vector<8x256xbf16>, vector<256x512xbf16>, vector<8x512xf32> -> vector<8x512xf32>
    %91 = arith.addf %90, %12 : vector<8x512xf32>
    %92 = vector.extract_strided_slice %91 {offsets = [0, 0], sizes = [8, 384], strides = [1, 1]} : vector<8x512xf32> to vector<8x384xf32>
    %cst_31 = arith.constant 5.000000e-01 : f32
    %93 = vector.broadcast %cst_31 : f32 to vector<8x384xf32>
    %94 = arith.mulf %93, %92 : vector<8x384xf32>
    %95 = math.tanh %94 : vector<8x384xf32>
    %cst_32 = arith.constant 5.000000e-01 : f32
    %96 = vector.broadcast %cst_32 : f32 to vector<8x384xf32>
    %97 = arith.mulf %96, %95 : vector<8x384xf32>
    %cst_33 = arith.constant 5.000000e-01 : f32
    %98 = vector.broadcast %cst_33 : f32 to vector<8x384xf32>
    %99 = arith.addf %97, %98 : vector<8x384xf32>
    %100 = vector.extract_strided_slice %99 {offsets = [0, 0], sizes = [8, 128], strides = [1, 1]} : vector<8x384xf32> to vector<8x128xf32>
    %101 = vector.extract_strided_slice %99 {offsets = [0, 128], sizes = [8, 128], strides = [1, 1]} : vector<8x384xf32> to vector<8x128xf32>
    %102 = vector.extract_strided_slice %99 {offsets = [0, 256], sizes = [8, 128], strides = [1, 1]} : vector<8x384xf32> to vector<8x128xf32>
    %103 = vector.extract_strided_slice %91 {offsets = [0, 384], sizes = [8, 128], strides = [1, 1]} : vector<8x512xf32> to vector<8x128xf32>
    %104 = math.tanh %103 : vector<8x128xf32>
    %105 = arith.mulf %101, %59 : vector<8x128xf32>
    %106 = arith.mulf %100, %104 : vector<8x128xf32>
    %107 = arith.addf %105, %106 : vector<8x128xf32>
    %108 = math.tanh %107 : vector<8x128xf32>
    %109 = arith.mulf %102, %108 : vector<8x128xf32>
    %c2_i32 = arith.constant 2 : i32
    %c8_i32_34 = arith.constant 8 : i32
    %110 = arith.muli %c2_i32, %c8_i32_34 : i32
    %111 = tpu.assume_multiple %110, 8 : i32
    %112 = arith.index_cast %111 : i32 to index
    %c0_35 = arith.constant 0 : index
    %113 = vector.load %arg10[%112, %c0_35] : memref<64x512xf32, #tpu.memory_space<vmem>>, vector<8x512xf32>
    %114 = arith.truncf %86 : vector<8x128xf32> to vector<8x128xbf16>
    %cst_36 = arith.constant dense<0.000000e+00> : vector<8x512xf32>
    %115 = tpu.matmul %114, %8, %cst_36 {dimension_numbers = #tpu.dot_dimension_numbers<[1], [0], [0], [1], [0, 0, 1, 1], [], []>} : vector<8x128xbf16>, vector<128x512xbf16>, vector<8x512xf32> -> vector<8x512xf32>
    %116 = arith.addf %113, %115 : vector<8x512xf32>
    %117 = vector.extract_strided_slice %116 {offsets = [0, 0], sizes = [8, 384], strides = [1, 1]} : vector<8x512xf32> to vector<8x384xf32>
    %cst_37 = arith.constant 5.000000e-01 : f32
    %118 = vector.broadcast %cst_37 : f32 to vector<8x384xf32>
    %119 = arith.mulf %118, %117 : vector<8x384xf32>
    %120 = math.tanh %119 : vector<8x384xf32>
    %cst_38 = arith.constant 5.000000e-01 : f32
    %121 = vector.broadcast %cst_38 : f32 to vector<8x384xf32>
    %122 = arith.mulf %121, %120 : vector<8x384xf32>
    %cst_39 = arith.constant 5.000000e-01 : f32
    %123 = vector.broadcast %cst_39 : f32 to vector<8x384xf32>
    %124 = arith.addf %122, %123 : vector<8x384xf32>
    %125 = vector.extract_strided_slice %124 {offsets = [0, 0], sizes = [8, 128], strides = [1, 1]} : vector<8x384xf32> to vector<8x128xf32>
    %126 = vector.extract_strided_slice %124 {offsets = [0, 128], sizes = [8, 128], strides = [1, 1]} : vector<8x384xf32> to vector<8x128xf32>
    %127 = vector.extract_strided_slice %124 {offsets = [0, 256], sizes = [8, 128], strides = [1, 1]} : vector<8x384xf32> to vector<8x128xf32>
    %128 = vector.extract_strided_slice %116 {offsets = [0, 384], sizes = [8, 128], strides = [1, 1]} : vector<8x512xf32> to vector<8x128xf32>
    %129 = math.tanh %128 : vector<8x128xf32>
    %130 = arith.mulf %126, %84 : vector<8x128xf32>
    %131 = arith.mulf %125, %129 : vector<8x128xf32>
    %132 = arith.addf %130, %131 : vector<8x128xf32>
    %133 = math.tanh %132 : vector<8x128xf32>
    %134 = arith.mulf %127, %133 : vector<8x128xf32>
    %135 = arith.truncf %134 : vector<8x128xf32> to vector<8x128xbf16>
    %136 = arith.truncf %109 : vector<8x128xf32> to vector<8x128xbf16>
    %137 = tpu.concatenate %135, %136 in 1 : vector<8x128xbf16>, vector<8x128xbf16> -> vector<8x256xbf16>
    %cst_40 = arith.constant dense<0.000000e+00> : vector<8x512xf32>
    %138 = tpu.matmul %137, %9, %cst_40 {dimension_numbers = #tpu.dot_dimension_numbers<[1], [0], [0], [1], [0, 0, 1, 1], [], []>} : vector<8x256xbf16>, vector<256x512xbf16>, vector<8x512xf32> -> vector<8x512xf32>
    %139 = arith.addf %138, %12 : vector<8x512xf32>
    %140 = vector.extract_strided_slice %139 {offsets = [0, 0], sizes = [8, 384], strides = [1, 1]} : vector<8x512xf32> to vector<8x384xf32>
    %cst_41 = arith.constant 5.000000e-01 : f32
    %141 = vector.broadcast %cst_41 : f32 to vector<8x384xf32>
    %142 = arith.mulf %141, %140 : vector<8x384xf32>
    %143 = math.tanh %142 : vector<8x384xf32>
    %cst_42 = arith.constant 5.000000e-01 : f32
    %144 = vector.broadcast %cst_42 : f32 to vector<8x384xf32>
    %145 = arith.mulf %144, %143 : vector<8x384xf32>
    %cst_43 = arith.constant 5.000000e-01 : f32
    %146 = vector.broadcast %cst_43 : f32 to vector<8x384xf32>
    %147 = arith.addf %145, %146 : vector<8x384xf32>
    %148 = vector.extract_strided_slice %147 {offsets = [0, 0], sizes = [8, 128], strides = [1, 1]} : vector<8x384xf32> to vector<8x128xf32>
    %149 = vector.extract_strided_slice %147 {offsets = [0, 128], sizes = [8, 128], strides = [1, 1]} : vector<8x384xf32> to vector<8x128xf32>
    %150 = vector.extract_strided_slice %147 {offsets = [0, 256], sizes = [8, 128], strides = [1, 1]} : vector<8x384xf32> to vector<8x128xf32>
    %151 = vector.extract_strided_slice %139 {offsets = [0, 384], sizes = [8, 128], strides = [1, 1]} : vector<8x512xf32> to vector<8x128xf32>
    %152 = math.tanh %151 : vector<8x128xf32>
    %153 = arith.mulf %149, %107 : vector<8x128xf32>
    %154 = arith.mulf %148, %152 : vector<8x128xf32>
    %155 = arith.addf %153, %154 : vector<8x128xf32>
    %156 = math.tanh %155 : vector<8x128xf32>
    %157 = arith.mulf %150, %156 : vector<8x128xf32>
    %c3_i32 = arith.constant 3 : i32
    %c8_i32_44 = arith.constant 8 : i32
    %158 = arith.muli %c3_i32, %c8_i32_44 : i32
    %159 = tpu.assume_multiple %158, 8 : i32
    %160 = arith.index_cast %159 : i32 to index
    %c0_45 = arith.constant 0 : index
    %161 = vector.load %arg10[%160, %c0_45] : memref<64x512xf32, #tpu.memory_space<vmem>>, vector<8x512xf32>
    %162 = arith.truncf %134 : vector<8x128xf32> to vector<8x128xbf16>
    %cst_46 = arith.constant dense<0.000000e+00> : vector<8x512xf32>
    %163 = tpu.matmul %162, %8, %cst_46 {dimension_numbers = #tpu.dot_dimension_numbers<[1], [0], [0], [1], [0, 0, 1, 1], [], []>} : vector<8x128xbf16>, vector<128x512xbf16>, vector<8x512xf32> -> vector<8x512xf32>
    %164 = arith.addf %161, %163 : vector<8x512xf32>
    %165 = vector.extract_strided_slice %164 {offsets = [0, 0], sizes = [8, 384], strides = [1, 1]} : vector<8x512xf32> to vector<8x384xf32>
    %cst_47 = arith.constant 5.000000e-01 : f32
    %166 = vector.broadcast %cst_47 : f32 to vector<8x384xf32>
    %167 = arith.mulf %166, %165 : vector<8x384xf32>
    %168 = math.tanh %167 : vector<8x384xf32>
    %cst_48 = arith.constant 5.000000e-01 : f32
    %169 = vector.broadcast %cst_48 : f32 to vector<8x384xf32>
    %170 = arith.mulf %169, %168 : vector<8x384xf32>
    %cst_49 = arith.constant 5.000000e-01 : f32
    %171 = vector.broadcast %cst_49 : f32 to vector<8x384xf32>
    %172 = arith.addf %170, %171 : vector<8x384xf32>
    %173 = vector.extract_strided_slice %172 {offsets = [0, 0], sizes = [8, 128], strides = [1, 1]} : vector<8x384xf32> to vector<8x128xf32>
    %174 = vector.extract_strided_slice %172 {offsets = [0, 128], sizes = [8, 128], strides = [1, 1]} : vector<8x384xf32> to vector<8x128xf32>
    %175 = vector.extract_strided_slice %172 {offsets = [0, 256], sizes = [8, 128], strides = [1, 1]} : vector<8x384xf32> to vector<8x128xf32>
    %176 = vector.extract_strided_slice %164 {offsets = [0, 384], sizes = [8, 128], strides = [1, 1]} : vector<8x512xf32> to vector<8x128xf32>
    %177 = math.tanh %176 : vector<8x128xf32>
    %178 = arith.mulf %174, %132 : vector<8x128xf32>
    %179 = arith.mulf %173, %177 : vector<8x128xf32>
    %180 = arith.addf %178, %179 : vector<8x128xf32>
    %181 = math.tanh %180 : vector<8x128xf32>
    %182 = arith.mulf %175, %181 : vector<8x128xf32>
    %183 = arith.truncf %182 : vector<8x128xf32> to vector<8x128xbf16>
    %184 = arith.truncf %157 : vector<8x128xf32> to vector<8x128xbf16>
    %185 = tpu.concatenate %183, %184 in 1 : vector<8x128xbf16>, vector<8x128xbf16> -> vector<8x256xbf16>
    %cst_50 = arith.constant dense<0.000000e+00> : vector<8x512xf32>
    %186 = tpu.matmul %185, %9, %cst_50 {dimension_numbers = #tpu.dot_dimension_numbers<[1], [0], [0], [1], [0, 0, 1, 1], [], []>} : vector<8x256xbf16>, vector<256x512xbf16>, vector<8x512xf32> -> vector<8x512xf32>
    %187 = arith.addf %186, %12 : vector<8x512xf32>
    %188 = vector.extract_strided_slice %187 {offsets = [0, 0], sizes = [8, 384], strides = [1, 1]} : vector<8x512xf32> to vector<8x384xf32>
    %cst_51 = arith.constant 5.000000e-01 : f32
    %189 = vector.broadcast %cst_51 : f32 to vector<8x384xf32>
    %190 = arith.mulf %189, %188 : vector<8x384xf32>
    %191 = math.tanh %190 : vector<8x384xf32>
    %cst_52 = arith.constant 5.000000e-01 : f32
    %192 = vector.broadcast %cst_52 : f32 to vector<8x384xf32>
    %193 = arith.mulf %192, %191 : vector<8x384xf32>
    %cst_53 = arith.constant 5.000000e-01 : f32
    %194 = vector.broadcast %cst_53 : f32 to vector<8x384xf32>
    %195 = arith.addf %193, %194 : vector<8x384xf32>
    %196 = vector.extract_strided_slice %195 {offsets = [0, 0], sizes = [8, 128], strides = [1, 1]} : vector<8x384xf32> to vector<8x128xf32>
    %197 = vector.extract_strided_slice %195 {offsets = [0, 128], sizes = [8, 128], strides = [1, 1]} : vector<8x384xf32> to vector<8x128xf32>
    %198 = vector.extract_strided_slice %195 {offsets = [0, 256], sizes = [8, 128], strides = [1, 1]} : vector<8x384xf32> to vector<8x128xf32>
    %199 = vector.extract_strided_slice %187 {offsets = [0, 384], sizes = [8, 128], strides = [1, 1]} : vector<8x512xf32> to vector<8x128xf32>
    %200 = math.tanh %199 : vector<8x128xf32>
    %201 = arith.mulf %197, %155 : vector<8x128xf32>
    %202 = arith.mulf %196, %200 : vector<8x128xf32>
    %203 = arith.addf %201, %202 : vector<8x128xf32>
    %204 = math.tanh %203 : vector<8x128xf32>
    %205 = arith.mulf %198, %204 : vector<8x128xf32>
    %c4_i32 = arith.constant 4 : i32
    %c8_i32_54 = arith.constant 8 : i32
    %206 = arith.muli %c4_i32, %c8_i32_54 : i32
    %207 = tpu.assume_multiple %206, 8 : i32
    %208 = arith.index_cast %207 : i32 to index
    %c0_55 = arith.constant 0 : index
    %209 = vector.load %arg10[%208, %c0_55] : memref<64x512xf32, #tpu.memory_space<vmem>>, vector<8x512xf32>
    %210 = arith.truncf %182 : vector<8x128xf32> to vector<8x128xbf16>
    %cst_56 = arith.constant dense<0.000000e+00> : vector<8x512xf32>
    %211 = tpu.matmul %210, %8, %cst_56 {dimension_numbers = #tpu.dot_dimension_numbers<[1], [0], [0], [1], [0, 0, 1, 1], [], []>} : vector<8x128xbf16>, vector<128x512xbf16>, vector<8x512xf32> -> vector<8x512xf32>
    %212 = arith.addf %209, %211 : vector<8x512xf32>
    %213 = vector.extract_strided_slice %212 {offsets = [0, 0], sizes = [8, 384], strides = [1, 1]} : vector<8x512xf32> to vector<8x384xf32>
    %cst_57 = arith.constant 5.000000e-01 : f32
    %214 = vector.broadcast %cst_57 : f32 to vector<8x384xf32>
    %215 = arith.mulf %214, %213 : vector<8x384xf32>
    %216 = math.tanh %215 : vector<8x384xf32>
    %cst_58 = arith.constant 5.000000e-01 : f32
    %217 = vector.broadcast %cst_58 : f32 to vector<8x384xf32>
    %218 = arith.mulf %217, %216 : vector<8x384xf32>
    %cst_59 = arith.constant 5.000000e-01 : f32
    %219 = vector.broadcast %cst_59 : f32 to vector<8x384xf32>
    %220 = arith.addf %218, %219 : vector<8x384xf32>
    %221 = vector.extract_strided_slice %220 {offsets = [0, 0], sizes = [8, 128], strides = [1, 1]} : vector<8x384xf32> to vector<8x128xf32>
    %222 = vector.extract_strided_slice %220 {offsets = [0, 128], sizes = [8, 128], strides = [1, 1]} : vector<8x384xf32> to vector<8x128xf32>
    %223 = vector.extract_strided_slice %220 {offsets = [0, 256], sizes = [8, 128], strides = [1, 1]} : vector<8x384xf32> to vector<8x128xf32>
    %224 = vector.extract_strided_slice %212 {offsets = [0, 384], sizes = [8, 128], strides = [1, 1]} : vector<8x512xf32> to vector<8x128xf32>
    %225 = math.tanh %224 : vector<8x128xf32>
    %226 = arith.mulf %222, %180 : vector<8x128xf32>
    %227 = arith.mulf %221, %225 : vector<8x128xf32>
    %228 = arith.addf %226, %227 : vector<8x128xf32>
    %229 = math.tanh %228 : vector<8x128xf32>
    %230 = arith.mulf %223, %229 : vector<8x128xf32>
    %231 = arith.truncf %230 : vector<8x128xf32> to vector<8x128xbf16>
    %232 = arith.truncf %205 : vector<8x128xf32> to vector<8x128xbf16>
    %233 = tpu.concatenate %231, %232 in 1 : vector<8x128xbf16>, vector<8x128xbf16> -> vector<8x256xbf16>
    %cst_60 = arith.constant dense<0.000000e+00> : vector<8x512xf32>
    %234 = tpu.matmul %233, %9, %cst_60 {dimension_numbers = #tpu.dot_dimension_numbers<[1], [0], [0], [1], [0, 0, 1, 1], [], []>} : vector<8x256xbf16>, vector<256x512xbf16>, vector<8x512xf32> -> vector<8x512xf32>
    %235 = arith.addf %234, %12 : vector<8x512xf32>
    %236 = vector.extract_strided_slice %235 {offsets = [0, 0], sizes = [8, 384], strides = [1, 1]} : vector<8x512xf32> to vector<8x384xf32>
    %cst_61 = arith.constant 5.000000e-01 : f32
    %237 = vector.broadcast %cst_61 : f32 to vector<8x384xf32>
    %238 = arith.mulf %237, %236 : vector<8x384xf32>
    %239 = math.tanh %238 : vector<8x384xf32>
    %cst_62 = arith.constant 5.000000e-01 : f32
    %240 = vector.broadcast %cst_62 : f32 to vector<8x384xf32>
    %241 = arith.mulf %240, %239 : vector<8x384xf32>
    %cst_63 = arith.constant 5.000000e-01 : f32
    %242 = vector.broadcast %cst_63 : f32 to vector<8x384xf32>
    %243 = arith.addf %241, %242 : vector<8x384xf32>
    %244 = vector.extract_strided_slice %243 {offsets = [0, 0], sizes = [8, 128], strides = [1, 1]} : vector<8x384xf32> to vector<8x128xf32>
    %245 = vector.extract_strided_slice %243 {offsets = [0, 128], sizes = [8, 128], strides = [1, 1]} : vector<8x384xf32> to vector<8x128xf32>
    %246 = vector.extract_strided_slice %243 {offsets = [0, 256], sizes = [8, 128], strides = [1, 1]} : vector<8x384xf32> to vector<8x128xf32>
    %247 = vector.extract_strided_slice %235 {offsets = [0, 384], sizes = [8, 128], strides = [1, 1]} : vector<8x512xf32> to vector<8x128xf32>
    %248 = math.tanh %247 : vector<8x128xf32>
    %249 = arith.mulf %245, %203 : vector<8x128xf32>
    %250 = arith.mulf %244, %248 : vector<8x128xf32>
    %251 = arith.addf %249, %250 : vector<8x128xf32>
    %252 = math.tanh %251 : vector<8x128xf32>
    %253 = arith.mulf %246, %252 : vector<8x128xf32>
    %c5_i32 = arith.constant 5 : i32
    %c8_i32_64 = arith.constant 8 : i32
    %254 = arith.muli %c5_i32, %c8_i32_64 : i32
    %255 = tpu.assume_multiple %254, 8 : i32
    %256 = arith.index_cast %255 : i32 to index
    %c0_65 = arith.constant 0 : index
    %257 = vector.load %arg10[%256, %c0_65] : memref<64x512xf32, #tpu.memory_space<vmem>>, vector<8x512xf32>
    %258 = arith.truncf %230 : vector<8x128xf32> to vector<8x128xbf16>
    %cst_66 = arith.constant dense<0.000000e+00> : vector<8x512xf32>
    %259 = tpu.matmul %258, %8, %cst_66 {dimension_numbers = #tpu.dot_dimension_numbers<[1], [0], [0], [1], [0, 0, 1, 1], [], []>} : vector<8x128xbf16>, vector<128x512xbf16>, vector<8x512xf32> -> vector<8x512xf32>
    %260 = arith.addf %257, %259 : vector<8x512xf32>
    %261 = vector.extract_strided_slice %260 {offsets = [0, 0], sizes = [8, 384], strides = [1, 1]} : vector<8x512xf32> to vector<8x384xf32>
    %cst_67 = arith.constant 5.000000e-01 : f32
    %262 = vector.broadcast %cst_67 : f32 to vector<8x384xf32>
    %263 = arith.mulf %262, %261 : vector<8x384xf32>
    %264 = math.tanh %263 : vector<8x384xf32>
    %cst_68 = arith.constant 5.000000e-01 : f32
    %265 = vector.broadcast %cst_68 : f32 to vector<8x384xf32>
    %266 = arith.mulf %265, %264 : vector<8x384xf32>
    %cst_69 = arith.constant 5.000000e-01 : f32
    %267 = vector.broadcast %cst_69 : f32 to vector<8x384xf32>
    %268 = arith.addf %266, %267 : vector<8x384xf32>
    %269 = vector.extract_strided_slice %268 {offsets = [0, 0], sizes = [8, 128], strides = [1, 1]} : vector<8x384xf32> to vector<8x128xf32>
    %270 = vector.extract_strided_slice %268 {offsets = [0, 128], sizes = [8, 128], strides = [1, 1]} : vector<8x384xf32> to vector<8x128xf32>
    %271 = vector.extract_strided_slice %268 {offsets = [0, 256], sizes = [8, 128], strides = [1, 1]} : vector<8x384xf32> to vector<8x128xf32>
    %272 = vector.extract_strided_slice %260 {offsets = [0, 384], sizes = [8, 128], strides = [1, 1]} : vector<8x512xf32> to vector<8x128xf32>
    %273 = math.tanh %272 : vector<8x128xf32>
    %274 = arith.mulf %270, %228 : vector<8x128xf32>
    %275 = arith.mulf %269, %273 : vector<8x128xf32>
    %276 = arith.addf %274, %275 : vector<8x128xf32>
    %277 = math.tanh %276 : vector<8x128xf32>
    %278 = arith.mulf %271, %277 : vector<8x128xf32>
    %279 = arith.truncf %278 : vector<8x128xf32> to vector<8x128xbf16>
    %280 = arith.truncf %253 : vector<8x128xf32> to vector<8x128xbf16>
    %281 = tpu.concatenate %279, %280 in 1 : vector<8x128xbf16>, vector<8x128xbf16> -> vector<8x256xbf16>
    %cst_70 = arith.constant dense<0.000000e+00> : vector<8x512xf32>
    %282 = tpu.matmul %281, %9, %cst_70 {dimension_numbers = #tpu.dot_dimension_numbers<[1], [0], [0], [1], [0, 0, 1, 1], [], []>} : vector<8x256xbf16>, vector<256x512xbf16>, vector<8x512xf32> -> vector<8x512xf32>
    %283 = arith.addf %282, %12 : vector<8x512xf32>
    %284 = vector.extract_strided_slice %283 {offsets = [0, 0], sizes = [8, 384], strides = [1, 1]} : vector<8x512xf32> to vector<8x384xf32>
    %cst_71 = arith.constant 5.000000e-01 : f32
    %285 = vector.broadcast %cst_71 : f32 to vector<8x384xf32>
    %286 = arith.mulf %285, %284 : vector<8x384xf32>
    %287 = math.tanh %286 : vector<8x384xf32>
    %cst_72 = arith.constant 5.000000e-01 : f32
    %288 = vector.broadcast %cst_72 : f32 to vector<8x384xf32>
    %289 = arith.mulf %288, %287 : vector<8x384xf32>
    %cst_73 = arith.constant 5.000000e-01 : f32
    %290 = vector.broadcast %cst_73 : f32 to vector<8x384xf32>
    %291 = arith.addf %289, %290 : vector<8x384xf32>
    %292 = vector.extract_strided_slice %291 {offsets = [0, 0], sizes = [8, 128], strides = [1, 1]} : vector<8x384xf32> to vector<8x128xf32>
    %293 = vector.extract_strided_slice %291 {offsets = [0, 128], sizes = [8, 128], strides = [1, 1]} : vector<8x384xf32> to vector<8x128xf32>
    %294 = vector.extract_strided_slice %291 {offsets = [0, 256], sizes = [8, 128], strides = [1, 1]} : vector<8x384xf32> to vector<8x128xf32>
    %295 = vector.extract_strided_slice %283 {offsets = [0, 384], sizes = [8, 128], strides = [1, 1]} : vector<8x512xf32> to vector<8x128xf32>
    %296 = math.tanh %295 : vector<8x128xf32>
    %297 = arith.mulf %293, %251 : vector<8x128xf32>
    %298 = arith.mulf %292, %296 : vector<8x128xf32>
    %299 = arith.addf %297, %298 : vector<8x128xf32>
    %300 = math.tanh %299 : vector<8x128xf32>
    %301 = arith.mulf %294, %300 : vector<8x128xf32>
    %c6_i32 = arith.constant 6 : i32
    %c8_i32_74 = arith.constant 8 : i32
    %302 = arith.muli %c6_i32, %c8_i32_74 : i32
    %303 = tpu.assume_multiple %302, 8 : i32
    %304 = arith.index_cast %303 : i32 to index
    %c0_75 = arith.constant 0 : index
    %305 = vector.load %arg10[%304, %c0_75] : memref<64x512xf32, #tpu.memory_space<vmem>>, vector<8x512xf32>
    %306 = arith.truncf %278 : vector<8x128xf32> to vector<8x128xbf16>
    %cst_76 = arith.constant dense<0.000000e+00> : vector<8x512xf32>
    %307 = tpu.matmul %306, %8, %cst_76 {dimension_numbers = #tpu.dot_dimension_numbers<[1], [0], [0], [1], [0, 0, 1, 1], [], []>} : vector<8x128xbf16>, vector<128x512xbf16>, vector<8x512xf32> -> vector<8x512xf32>
    %308 = arith.addf %305, %307 : vector<8x512xf32>
    %309 = vector.extract_strided_slice %308 {offsets = [0, 0], sizes = [8, 384], strides = [1, 1]} : vector<8x512xf32> to vector<8x384xf32>
    %cst_77 = arith.constant 5.000000e-01 : f32
    %310 = vector.broadcast %cst_77 : f32 to vector<8x384xf32>
    %311 = arith.mulf %310, %309 : vector<8x384xf32>
    %312 = math.tanh %311 : vector<8x384xf32>
    %cst_78 = arith.constant 5.000000e-01 : f32
    %313 = vector.broadcast %cst_78 : f32 to vector<8x384xf32>
    %314 = arith.mulf %313, %312 : vector<8x384xf32>
    %cst_79 = arith.constant 5.000000e-01 : f32
    %315 = vector.broadcast %cst_79 : f32 to vector<8x384xf32>
    %316 = arith.addf %314, %315 : vector<8x384xf32>
    %317 = vector.extract_strided_slice %316 {offsets = [0, 0], sizes = [8, 128], strides = [1, 1]} : vector<8x384xf32> to vector<8x128xf32>
    %318 = vector.extract_strided_slice %316 {offsets = [0, 128], sizes = [8, 128], strides = [1, 1]} : vector<8x384xf32> to vector<8x128xf32>
    %319 = vector.extract_strided_slice %316 {offsets = [0, 256], sizes = [8, 128], strides = [1, 1]} : vector<8x384xf32> to vector<8x128xf32>
    %320 = vector.extract_strided_slice %308 {offsets = [0, 384], sizes = [8, 128], strides = [1, 1]} : vector<8x512xf32> to vector<8x128xf32>
    %321 = math.tanh %320 : vector<8x128xf32>
    %322 = arith.mulf %318, %276 : vector<8x128xf32>
    %323 = arith.mulf %317, %321 : vector<8x128xf32>
    %324 = arith.addf %322, %323 : vector<8x128xf32>
    %325 = math.tanh %324 : vector<8x128xf32>
    %326 = arith.mulf %319, %325 : vector<8x128xf32>
    %327 = arith.truncf %326 : vector<8x128xf32> to vector<8x128xbf16>
    %328 = arith.truncf %301 : vector<8x128xf32> to vector<8x128xbf16>
    %329 = tpu.concatenate %327, %328 in 1 : vector<8x128xbf16>, vector<8x128xbf16> -> vector<8x256xbf16>
    %cst_80 = arith.constant dense<0.000000e+00> : vector<8x512xf32>
    %330 = tpu.matmul %329, %9, %cst_80 {dimension_numbers = #tpu.dot_dimension_numbers<[1], [0], [0], [1], [0, 0, 1, 1], [], []>} : vector<8x256xbf16>, vector<256x512xbf16>, vector<8x512xf32> -> vector<8x512xf32>
    %331 = arith.addf %330, %12 : vector<8x512xf32>
    %332 = vector.extract_strided_slice %331 {offsets = [0, 0], sizes = [8, 384], strides = [1, 1]} : vector<8x512xf32> to vector<8x384xf32>
    %cst_81 = arith.constant 5.000000e-01 : f32
    %333 = vector.broadcast %cst_81 : f32 to vector<8x384xf32>
    %334 = arith.mulf %333, %332 : vector<8x384xf32>
    %335 = math.tanh %334 : vector<8x384xf32>
    %cst_82 = arith.constant 5.000000e-01 : f32
    %336 = vector.broadcast %cst_82 : f32 to vector<8x384xf32>
    %337 = arith.mulf %336, %335 : vector<8x384xf32>
    %cst_83 = arith.constant 5.000000e-01 : f32
    %338 = vector.broadcast %cst_83 : f32 to vector<8x384xf32>
    %339 = arith.addf %337, %338 : vector<8x384xf32>
    %340 = vector.extract_strided_slice %339 {offsets = [0, 0], sizes = [8, 128], strides = [1, 1]} : vector<8x384xf32> to vector<8x128xf32>
    %341 = vector.extract_strided_slice %339 {offsets = [0, 128], sizes = [8, 128], strides = [1, 1]} : vector<8x384xf32> to vector<8x128xf32>
    %342 = vector.extract_strided_slice %339 {offsets = [0, 256], sizes = [8, 128], strides = [1, 1]} : vector<8x384xf32> to vector<8x128xf32>
    %343 = vector.extract_strided_slice %331 {offsets = [0, 384], sizes = [8, 128], strides = [1, 1]} : vector<8x512xf32> to vector<8x128xf32>
    %344 = math.tanh %343 : vector<8x128xf32>
    %345 = arith.mulf %341, %299 : vector<8x128xf32>
    %346 = arith.mulf %340, %344 : vector<8x128xf32>
    %347 = arith.addf %345, %346 : vector<8x128xf32>
    %348 = math.tanh %347 : vector<8x128xf32>
    %349 = arith.mulf %342, %348 : vector<8x128xf32>
    %c7_i32 = arith.constant 7 : i32
    %c8_i32_84 = arith.constant 8 : i32
    %350 = arith.muli %c7_i32, %c8_i32_84 : i32
    %351 = tpu.assume_multiple %350, 8 : i32
    %352 = arith.index_cast %351 : i32 to index
    %c0_85 = arith.constant 0 : index
    %353 = vector.load %arg10[%352, %c0_85] : memref<64x512xf32, #tpu.memory_space<vmem>>, vector<8x512xf32>
    %354 = arith.truncf %326 : vector<8x128xf32> to vector<8x128xbf16>
    %cst_86 = arith.constant dense<0.000000e+00> : vector<8x512xf32>
    %355 = tpu.matmul %354, %8, %cst_86 {dimension_numbers = #tpu.dot_dimension_numbers<[1], [0], [0], [1], [0, 0, 1, 1], [], []>} : vector<8x128xbf16>, vector<128x512xbf16>, vector<8x512xf32> -> vector<8x512xf32>
    %356 = arith.addf %353, %355 : vector<8x512xf32>
    %357 = vector.extract_strided_slice %356 {offsets = [0, 0], sizes = [8, 384], strides = [1, 1]} : vector<8x512xf32> to vector<8x384xf32>
    %cst_87 = arith.constant 5.000000e-01 : f32
    %358 = vector.broadcast %cst_87 : f32 to vector<8x384xf32>
    %359 = arith.mulf %358, %357 : vector<8x384xf32>
    %360 = math.tanh %359 : vector<8x384xf32>
    %cst_88 = arith.constant 5.000000e-01 : f32
    %361 = vector.broadcast %cst_88 : f32 to vector<8x384xf32>
    %362 = arith.mulf %361, %360 : vector<8x384xf32>
    %cst_89 = arith.constant 5.000000e-01 : f32
    %363 = vector.broadcast %cst_89 : f32 to vector<8x384xf32>
    %364 = arith.addf %362, %363 : vector<8x384xf32>
    %365 = vector.extract_strided_slice %364 {offsets = [0, 0], sizes = [8, 128], strides = [1, 1]} : vector<8x384xf32> to vector<8x128xf32>
    %366 = vector.extract_strided_slice %364 {offsets = [0, 128], sizes = [8, 128], strides = [1, 1]} : vector<8x384xf32> to vector<8x128xf32>
    %367 = vector.extract_strided_slice %364 {offsets = [0, 256], sizes = [8, 128], strides = [1, 1]} : vector<8x384xf32> to vector<8x128xf32>
    %368 = vector.extract_strided_slice %356 {offsets = [0, 384], sizes = [8, 128], strides = [1, 1]} : vector<8x512xf32> to vector<8x128xf32>
    %369 = math.tanh %368 : vector<8x128xf32>
    %370 = arith.mulf %366, %324 : vector<8x128xf32>
    %371 = arith.mulf %365, %369 : vector<8x128xf32>
    %372 = arith.addf %370, %371 : vector<8x128xf32>
    %373 = math.tanh %372 : vector<8x128xf32>
    %374 = arith.mulf %367, %373 : vector<8x128xf32>
    %375 = arith.truncf %374 : vector<8x128xf32> to vector<8x128xbf16>
    %376 = arith.truncf %349 : vector<8x128xf32> to vector<8x128xbf16>
    %377 = tpu.concatenate %375, %376 in 1 : vector<8x128xbf16>, vector<8x128xbf16> -> vector<8x256xbf16>
    %cst_90 = arith.constant dense<0.000000e+00> : vector<8x512xf32>
    %378 = tpu.matmul %377, %9, %cst_90 {dimension_numbers = #tpu.dot_dimension_numbers<[1], [0], [0], [1], [0, 0, 1, 1], [], []>} : vector<8x256xbf16>, vector<256x512xbf16>, vector<8x512xf32> -> vector<8x512xf32>
    %379 = arith.addf %378, %12 : vector<8x512xf32>
    %380 = vector.extract_strided_slice %379 {offsets = [0, 0], sizes = [8, 384], strides = [1, 1]} : vector<8x512xf32> to vector<8x384xf32>
    %cst_91 = arith.constant 5.000000e-01 : f32
    %381 = vector.broadcast %cst_91 : f32 to vector<8x384xf32>
    %382 = arith.mulf %381, %380 : vector<8x384xf32>
    %383 = math.tanh %382 : vector<8x384xf32>
    %cst_92 = arith.constant 5.000000e-01 : f32
    %384 = vector.broadcast %cst_92 : f32 to vector<8x384xf32>
    %385 = arith.mulf %384, %383 : vector<8x384xf32>
    %cst_93 = arith.constant 5.000000e-01 : f32
    %386 = vector.broadcast %cst_93 : f32 to vector<8x384xf32>
    %387 = arith.addf %385, %386 : vector<8x384xf32>
    %388 = vector.extract_strided_slice %387 {offsets = [0, 0], sizes = [8, 128], strides = [1, 1]} : vector<8x384xf32> to vector<8x128xf32>
    %389 = vector.extract_strided_slice %387 {offsets = [0, 128], sizes = [8, 128], strides = [1, 1]} : vector<8x384xf32> to vector<8x128xf32>
    %390 = vector.extract_strided_slice %387 {offsets = [0, 256], sizes = [8, 128], strides = [1, 1]} : vector<8x384xf32> to vector<8x128xf32>
    %391 = vector.extract_strided_slice %379 {offsets = [0, 384], sizes = [8, 128], strides = [1, 1]} : vector<8x512xf32> to vector<8x128xf32>
    %392 = math.tanh %391 : vector<8x128xf32>
    %393 = arith.mulf %389, %347 : vector<8x128xf32>
    %394 = arith.mulf %388, %392 : vector<8x128xf32>
    %395 = arith.addf %393, %394 : vector<8x128xf32>
    %396 = math.tanh %395 : vector<8x128xf32>
    %397 = arith.mulf %390, %396 : vector<8x128xf32>
    %c8_i32_94 = arith.constant 8 : i32
    %398 = arith.truncf %397 : vector<8x128xf32> to vector<8x128xbf16>
    %c0_95 = arith.constant 0 : index
    %c0_96 = arith.constant 0 : index
    %399 = vector.load %arg7[%c0_95, %c0_96] : memref<128x128xbf16, #tpu.memory_space<vmem>>, vector<128x128xbf16>
    %cst_97 = arith.constant dense<0.000000e+00> : vector<8x128xf32>
    %400 = tpu.matmul %398, %399, %cst_97 {dimension_numbers = #tpu.dot_dimension_numbers<[1], [0], [0], [1], [0, 0, 1, 1], [], []>} : vector<8x128xbf16>, vector<128x128xbf16>, vector<8x128xf32> -> vector<8x128xf32>
    %c0_98 = arith.constant 0 : index
    %c0_99 = arith.constant 0 : index
    %401 = vector.load %arg8[%c0_98, %c0_99] : memref<1x128xf32, #tpu.memory_space<vmem>>, vector<1x128xf32>
    %402 = vector.broadcast %401 : vector<1x128xf32> to vector<8x128xf32>
    %403 = arith.addf %400, %402 : vector<8x128xf32>
    %c0_100 = arith.constant 0 : index
    %c0_101 = arith.constant 0 : index
    %404 = vector.load %arg9[%c0_100, %c0_101] : memref<8x128xf32, #tpu.memory_space<vmem>>, vector<8x128xf32>
    tpu.vector_store %arg9[%c0_100, %c0_101], %403 {strides = array<i32>} : memref<8x128xf32, #tpu.memory_space<vmem>>, vector<8x128xf32>,
    return
  }
  func.func @transform_0(%arg0: i32) -> (i32, i32, i32) {
    %c0_i32 = arith.constant 0 : i32
    %c0_i32_0 = arith.constant 0 : i32
    %c0_i32_1 = arith.constant 0 : i32
    return %arg0, %c0_i32, %c0_i32_0 : i32, i32, i32
  }
  func.func @transform_1(%arg0: i32) -> (i32, i32) {
    %c0_i32 = arith.constant 0 : i32
    %c0_i32_0 = arith.constant 0 : i32
    %c0_i32_1 = arith.constant 0 : i32
    return %c0_i32, %c0_i32_0 : i32, i32
  }
  func.func @transform_2(%arg0: i32) -> (i32, i32) {
    %c0_i32 = arith.constant 0 : i32
    %c0_i32_0 = arith.constant 0 : i32
    %c0_i32_1 = arith.constant 0 : i32
    return %c0_i32, %c0_i32_0 : i32, i32
  }
  func.func @transform_3(%arg0: i32) -> (i32, i32) {
    %c0_i32 = arith.constant 0 : i32
    %c0_i32_0 = arith.constant 0 : i32
    %c0_i32_1 = arith.constant 0 : i32
    return %c0_i32, %c0_i32_0 : i32, i32
  }
  func.func @transform_4(%arg0: i32) -> (i32, i32) {
    %c0_i32 = arith.constant 0 : i32
    %c0_i32_0 = arith.constant 0 : i32
    %c0_i32_1 = arith.constant 0 : i32
    return %c0_i32, %c0_i32_0 : i32, i32
  }
  func.func @transform_5(%arg0: i32) -> (i32, i32) {
    %c0_i32 = arith.constant 0 : i32
    %c0_i32_0 = arith.constant 0 : i32
    %c0_i32_1 = arith.constant 0 : i32
    return %c0_i32, %c0_i32_0 : i32, i32
  }
  func.func @transform_6(%arg0: i32) -> (i32, i32) {
    %c0_i32 = arith.constant 0 : i32
    %c0_i32_0 = arith.constant 0 : i32
    %c0_i32_1 = arith.constant 0 : i32
    return %c0_i32, %c0_i32_0 : i32, i32
  }
  func.func @transform_7(%arg0: i32) -> (i32, i32) {
    %c0_i32 = arith.constant 0 : i32
    %c0_i32_0 = arith.constant 0 : i32
    %c0_i32_1 = arith.constant 0 : i32
    return %c0_i32, %c0_i32_0 : i32, i32
  }
  func.func @transform_8(%arg0: i32) -> (i32, i32) {
    %c0_i32 = arith.constant 0 : i32
    %c0_i32_0 = arith.constant 0 : i32
    return %arg0, %c0_i32 : i32, i32
  }
}

</mosaic_0001>

<llo_original>
// kernel: tpu_custom_call.1
$region0: #{tpu_custom_call.1}
  #allocation0 [shape = 'u32[]', space=smem, size = 0x4, offset = 0x4, fixed_abs, tag = 'smem constant byte address 0x4 - core index']
  #allocation1 [shape = 'u32[144,128]{1,0:T(1,128)}', space=vmem, size = 0x12000, scoped, tag = 'internal scratch']
  #allocation2 [shape = 'f32[64,512]{1,0:T(8,128)}', space=vmem, size = 0x20000, scoped, tag = 'scratch operand']
  %s0 = inlined_call_operand.vmem [shape: bf16[1,64,8], index: 0, kind: input, shape index: {}]
  %s1 = inlined_call_operand.vmem [shape: bf16[8,512], index: 1, kind: input, shape index: {}]
  %s2 = inlined_call_operand.vmem [shape: f32[1,512], index: 2, kind: input, shape index: {}]
  %s3 = inlined_call_operand.hbm [shape: bf16[128,512], index: 3, kind: input, shape index: {}]
  %s4 = inlined_call_operand.hbm [shape: bf16[256,512], index: 4, kind: input, shape index: {}]
  %s5 = inlined_call_operand.vmem [shape: f32[1,512], index: 5, kind: input, shape index: {}]
  %s6 = inlined_call_operand.hbm [shape: bf16[128,128], index: 6, kind: input, shape index: {}]
  %s7 = inlined_call_operand.vmem [shape: f32[1,128], index: 7, kind: input, shape index: {}]
  %s8 = inlined_call_operand.hbm [shape: f32[8,128], index: 8, kind: output, shape index: {}]
  %s9 = sld [smem:[#allocation0]]
  $region54: #{tpu_custom_call.1} parent=0
    _
  %s11 = ssub.s32 1, %s9
  %s12 = scalar_select 0, %s11, %s9
  $region1: #{tpu_custom_call.1} parent=0
    #allocation3 [shape = 'u8[131072]{0}', space=vmem, size = 0x20000, scoped, tag = 'input window, operand 3, single buffered']
    #allocation4 [shape = 's32[1]{0}', space=sflag, size = 0x4, scoped, tag = 'scoped memory for tpu_custom_call.1']
    #allocation5 [shape = 's32[1]{0}', space=sflag, size = 0x4, scoped, tag = 'scoped memory for tpu_custom_call.1']
    #allocation6 [shape = 'u8[262144]{0}', space=vmem, size = 0x40000, scoped, tag = 'input window, operand 4, single buffered']
    #allocation7 [shape = 's32[1]{0}', space=sflag, size = 0x4, scoped, tag = 'scoped memory for tpu_custom_call.1']
    #allocation8 [shape = 'u8[32768]{0}', space=vmem, size = 0x8000, scoped, tag = 'input window, operand 6, single buffered']
    #allocation9 [shape = 'u8[4096]{0}', space=vmem, size = 0x1000, scoped, tag = 'output window, operand 0, single buffered']
    %13 = vsyncpa [#allocation4], 0
    %14 = vsyncpa [#allocation7], 0
    %15 = vsyncpa [#allocation5], 0
    // Predicated region
    $region2: #{tpu_custom_call.1} parent=1 // pred_check
      _
    $region3: #{tpu_custom_call.1} parent=1 // pred_check_branch
      %17 = sbr.rel (0) target = $region5
    $region4: #{tpu_custom_call.1} parent=1 // pred_region
      _
    $region5: #{tpu_custom_call.1} parent=1 // pred_fallthru
      _
    // Predicated region
    $region6: #{tpu_custom_call.1} parent=1 // pred_check
      _
    $region7: #{tpu_custom_call.1} parent=1 // pred_check_branch
      %19 = sbr.rel (0) target = $region9
    $region8: #{tpu_custom_call.1} parent=1 // pred_region
      _
    $region9: #{tpu_custom_call.1} parent=1 // pred_fallthru
      _
    // Predicated region
    $region10: #{tpu_custom_call.1} parent=1 // pred_check
      _
    $region11: #{tpu_custom_call.1} parent=1 // pred_check_branch
      %21 = sbr.rel (0) target = $region13
    $region12: #{tpu_custom_call.1} parent=1 // pred_region
      _
    $region13: #{tpu_custom_call.1} parent=1 // pred_fallthru
      _
    // Predicated region
    $region14: #{tpu_custom_call.1} parent=1 // pred_check
      _
    $region15: #{tpu_custom_call.1} parent=1 // pred_check_branch
      %23 = sbr.rel (0) target = $region17
    $region16: #{tpu_custom_call.1} parent=1 // pred_region
      %s25 = ssub.s32 4096, 4096
      %26 = vsyncadd [#allocation4], %s25
      %s27 = sshll.u32 [#allocation3], 4
      %s28 = int_to_ptr.vmem [resolvable:$true] %s27
      %33 = dma.hbm_to_vmem [thread:$0]  %s3, 4096, %s28, [#allocation4], 256, 256, 16
    $region17: #{tpu_custom_call.1} parent=1 // pred_fallthru
      _
    // Predicated region
    $region18: #{tpu_custom_call.1} parent=1 // pred_check
      _
    $region19: #{tpu_custom_call.1} parent=1 // pred_check_branch
      %35 = sbr.rel (0) target = $region21
    $region20: #{tpu_custom_call.1} parent=1 // pred_region
      %s37 = ssub.s32 8192, 8192
      %38 = vsyncadd [#allocation7], %s37
      %s39 = sshll.u32 [#allocation6], 4
      %s40 = int_to_ptr.vmem [resolvable:$true] %s39
      %45 = dma.hbm_to_vmem [thread:$0]  %s4, 8192, %s40, [#allocation7], 256, 256, 16
    $region21: #{tpu_custom_call.1} parent=1 // pred_fallthru
      _
    // Predicated region
    $region22: #{tpu_custom_call.1} parent=1 // pred_check
      _
    $region23: #{tpu_custom_call.1} parent=1 // pred_check_branch
      %47 = sbr.rel (0) target = $region25
    $region24: #{tpu_custom_call.1} parent=1 // pred_region
      _
    $region25: #{tpu_custom_call.1} parent=1 // pred_fallthru
      _
    // Predicated region
    $region26: #{tpu_custom_call.1} parent=1 // pred_check
      _
    $region27: #{tpu_custom_call.1} parent=1 // pred_check_branch
      %49 = sbr.rel (0) target = $region29
    $region28: #{tpu_custom_call.1} parent=1 // pred_region
      %s51 = ssub.s32 1024, 1024
      %52 = vsyncadd [#allocation7], %s51
      %s53 = sshll.u32 [#allocation8], 4
      %s54 = int_to_ptr.vmem [resolvable:$true] %s53
      %59 = dma.hbm_to_vmem [thread:$0]  %s6, 1024, %s54, [#allocation7], 64, 64, 4
    $region29: #{tpu_custom_call.1} parent=1 // pred_fallthru
      _
    // Predicated region
    $region30: #{tpu_custom_call.1} parent=1 // pred_check
      _
    $region31: #{tpu_custom_call.1} parent=1 // pred_check_branch
      %61 = sbr.rel (0) target = $region33
    $region32: #{tpu_custom_call.1} parent=1 // pred_region
      _
    $region33: #{tpu_custom_call.1} parent=1 // pred_fallthru
      _
    // Predicated region
    $region34: #{tpu_custom_call.1} parent=1 // pred_check
      _
    $region35: #{tpu_custom_call.1} parent=1 // pred_check_branch
      %63 = sbr.rel (0) target = $region37
    $region36: #{tpu_custom_call.1} parent=1 // pred_region
      %64 = dma.done [#allocation4], 4096
    $region37: #{tpu_custom_call.1} parent=1 // pred_fallthru
      _
    // Predicated region
    $region38: #{tpu_custom_call.1} parent=1 // pred_check
      _
    $region39: #{tpu_custom_call.1} parent=1 // pred_check_branch
      %66 = sbr.rel (0) target = $region41
    $region40: #{tpu_custom_call.1} parent=1 // pred_region
      %67 = dma.done [#allocation7], 8192
    $region41: #{tpu_custom_call.1} parent=1 // pred_fallthru
      _
    // Predicated region
    $region42: #{tpu_custom_call.1} parent=1 // pred_check
      _
    $region43: #{tpu_custom_call.1} parent=1 // pred_check_branch
      %69 = sbr.rel (0) target = $region45
    $region44: #{tpu_custom_call.1} parent=1 // pred_region
      %70 = dma.done [#allocation7], 1024
    $region45: #{tpu_custom_call.1} parent=1 // pred_fallthru
      _
    %v72 = vld [vmem:[%s0] sm:$0xf]
    %v73 = vld [vmem:[%s0 + $0x4] sm:$0xf]
    %v74 = vld [vmem:[%s0 + $0x8] sm:$0xf]
    %v75 = vld [vmem:[%s0 + $0xc] sm:$0xf]
    %v76 = vld [vmem:[%s0 + $0x10] sm:$0xf]
    %v77 = vld [vmem:[%s0 + $0x14] sm:$0xf]
    %v78 = vld [vmem:[%s0 + $0x18] sm:$0xf]
    %v79 = vld [vmem:[%s0 + $0x1c] sm:$0xf]
    %v80 = vld [vmem:[%s1] sm:$0xff]
    %v81 = vld [vmem:[%s1 + $0x8] sm:$0xff]
    %v82 = vld [vmem:[%s2] sm:$0xf]
    %v84 = vlaneseq
    %v85 = vshrl.u32 %v84, 7
    %v86 = vsub.s32 0, %v85
    %v87 = vrot.slane %v82, %v86
    %v88 = vlaneseq
    %v89 = vshrl.u32 %v88, 7
    %v90 = vsub.s32 1, %v89
    %v91 = vrot.slane %v82, %v90
    %v92 = vlaneseq
    %v93 = vshrl.u32 %v92, 7
    %v94 = vsub.s32 2, %v93
    %v95 = vrot.slane %v82, %v94
    %v96 = vlaneseq
    %v97 = vshrl.u32 %v96, 7
    %v98 = vsub.s32 3, %v97
    %v99 = vrot.slane %v82, %v98
    %v112 = vunpack.c.l.b16 %v72
    %v113 = vunpack.c.l.b16 %v73
    %v114 = vunpack.c.l.b16 %v74
    %v115 = vunpack.c.l.b16 %v75
    %v116 = vunpack.c.l.b16 %v76
    %v117 = vunpack.c.l.b16 %v77
    %v118 = vunpack.c.l.b16 %v78
    %v119 = vunpack.c.l.b16 %v79
    %v120 = vpack.c.b16 %v113, %v112
    %v121 = vpack.c.b16 %v115, %v114
    %v122 = vpack.c.b16 %v117, %v116
    %v123 = vpack.c.b16 %v119, %v118
    %v126 = vunpack.c.l.b16 %v80
    %v127 = vunpack.c.h.b16 %v80
    %v128 = vunpack.c.l.b16 %v81
    %v129 = vunpack.c.h.b16 %v81
    %v130 = vpack.c.b16 %v126, %v126
    %v131 = vpack.c.b16 %v127, %v127
    %v132 = vpack.c.b16 %v128, %v128
    %v133 = vpack.c.b16 %v129, %v129
    %vm134 = vcmask 64512
    %v136 = vsel %vm134, %v120, 0
    %v139 = vsel %vm134, %v121, 0
    %v142 = vsel %vm134, %v122, 0
    %v145 = vsel %vm134, %v123, 0
    %vm147 = vcmask 1043456
    %v149 = vsel %vm147, %v130, 0
    %v152 = vsel %vm147, %v131, 0
    %v155 = vsel %vm147, %v132, 0
    %v158 = vsel %vm147, %v133, 0
    %160 = vmatprep.subr.bf16.mxu0 %v152
    %161 = vmatpush1.bf16.msra.mxu0 %v149
    %162 = vmatprep.subr.bf16.mxu0 0
    %163 = vmatpush1.bf16.msra.mxu0 0
    %164 = vmatprep.subr.bf16.mxu0 0
    %165 = vmatpush1.bf16.msra.mxu0 0
    %166 = vmatprep.subr.bf16.mxu0 0
    %167 = vmatpush1.bf16.msra.mxu0 0
    %168 = vmatprep.subr.bf16.mxu0 0
    %169 = vmatpush1.bf16.msra.mxu0 0
    %170 = vmatprep.subr.bf16.mxu0 0
    %171 = vmatpush1.bf16.msra.mxu0 0
    %172 = vmatprep.subr.bf16.mxu0 0
    %173 = vmatpush1.bf16.msra.mxu0 0
    %174 = vmatprep.subr.bf16.mxu0 0
    %175 = vmatpush1.bf16.msra.mxu0 0
    %176 = vmatprep.subr.bf16.mxu0 0
    %177 = vmatpush1.bf16.msra.mxu0 0
    %178 = vmatprep.subr.bf16.mxu0 0
    %179 = vmatpush1.bf16.msra.mxu0 0
    %180 = vmatprep.subr.bf16.mxu0 0
    %181 = vmatpush1.bf16.msra.mxu0 0
    %182 = vmatprep.subr.bf16.mxu0 0
    %183 = vmatpush1.bf16.msra.mxu0 0
    %184 = vmatprep.subr.bf16.mxu0 0
    %185 = vmatpush1.bf16.msra.mxu0 0
    %186 = vmatprep.subr.bf16.mxu0 0
    %187 = vmatpush1.bf16.msra.mxu0 0
    %188 = vmatprep.subr.bf16.mxu0 0
    %189 = vmatpush1.bf16.msra.mxu0 0
    %190 = vmatprep.subr.bf16.mxu0 0
    %191 = vmatpush1.bf16.msra.mxu0 0
    %192 = vmatprep.mubr.bf16.mxu0 0
    %193 = vmatmul.mubr.bf16.gmra.mrb[0].mxu0 %v136
    %v194 = vpop.f32.mrb[0].mxu0
    %v195 = vadd.f32 %v87, %v194
    %v196 = vpop.f32.mrb[0].mxu0
    %v197 = vadd.f32 %v91, %v196
    %v198 = vpop.f32.mrb[0].mxu0
    %v199 = vadd.f32 %v87, %v198
    %v200 = vpop.f32.mrb[0].mxu0
    %v201 = vadd.f32 %v91, %v200
    %202 = vmatprep.mubr.bf16.mxu0 0
    %203 = vmatmul.mubr.bf16.gmra.mrb[0].mxu0 %v139
    %v204 = vpop.f32.mrb[0].mxu0
    %v205 = vadd.f32 %v87, %v204
    %v206 = vpop.f32.mrb[0].mxu0
    %v207 = vadd.f32 %v91, %v206
    %v208 = vpop.f32.mrb[0].mxu0
    %v209 = vadd.f32 %v87, %v208
    %v210 = vpop.f32.mrb[0].mxu0
    %v211 = vadd.f32 %v91, %v210
    %212 = vmatprep.mubr.bf16.mxu0 0
    %213 = vmatmul.mubr.bf16.gmra.mrb[0].mxu0 %v142
    %v214 = vpop.f32.mrb[0].mxu0
    %v215 = vadd.f32 %v87, %v214
    %v216 = vpop.f32.mrb[0].mxu0
    %v217 = vadd.f32 %v91, %v216
    %v218 = vpop.f32.mrb[0].mxu0
    %v219 = vadd.f32 %v87, %v218
    %v220 = vpop.f32.mrb[0].mxu0
    %v221 = vadd.f32 %v91, %v220
    %222 = vmatprep.mubr.bf16.mxu0 0
    %223 = vmatmul.mubr.bf16.gmra.mrb[0].mxu0 %v145
    %v224 = vpop.f32.mrb[0].mxu0
    %v225 = vadd.f32 %v87, %v224
    %v226 = vpop.f32.mrb[0].mxu0
    %v227 = vadd.f32 %v91, %v226
    %v228 = vpop.f32.mrb[0].mxu0
    %v229 = vadd.f32 %v87, %v228
    %v230 = vpop.f32.mrb[0].mxu0
    %v231 = vadd.f32 %v91, %v230
    %232 = vdwg.mxu0
    %233 = vmatprep.subr.bf16.mxu0 %v158
    %234 = vmatpush1.bf16.msra.mxu0 %v155
    %235 = vmatprep.subr.bf16.mxu0 0
    %236 = vmatpush1.bf16.msra.mxu0 0
    %237 = vmatprep.subr.bf16.mxu0 0
    %238 = vmatpush1.bf16.msra.mxu0 0
    %239 = vmatprep.subr.bf16.mxu0 0
    %240 = vmatpush1.bf16.msra.mxu0 0
    %241 = vmatprep.subr.bf16.mxu0 0
    %242 = vmatpush1.bf16.msra.mxu0 0
    %243 = vmatprep.subr.bf16.mxu0 0
    %244 = vmatpush1.bf16.msra.mxu0 0
    %245 = vmatprep.subr.bf16.mxu0 0
    %246 = vmatpush1.bf16.msra.mxu0 0
    %247 = vmatprep.subr.bf16.mxu0 0
    %248 = vmatpush1.bf16.msra.mxu0 0
    %249 = vmatprep.subr.bf16.mxu0 0
    %250 = vmatpush1.bf16.msra.mxu0 0
    %251 = vmatprep.subr.bf16.mxu0 0
    %252 = vmatpush1.bf16.msra.mxu0 0
    %253 = vmatprep.subr.bf16.mxu0 0
    %254 = vmatpush1.bf16.msra.mxu0 0
    %255 = vmatprep.subr.bf16.mxu0 0
    %256 = vmatpush1.bf16.msra.mxu0 0
    %257 = vmatprep.subr.bf16.mxu0 0
    %258 = vmatpush1.bf16.msra.mxu0 0
    %259 = vmatprep.subr.bf16.mxu0 0
    %260 = vmatpush1.bf16.msra.mxu0 0
    %261 = vmatprep.subr.bf16.mxu0 0
    %262 = vmatpush1.bf16.msra.mxu0 0
    %263 = vmatprep.subr.bf16.mxu0 0
    %264 = vmatpush1.bf16.msra.mxu0 0
    %265 = vmatprep.mubr.bf16.mxu0 0
    %266 = vmatmul.mubr.bf16.gmra.mrb[0].mxu0 %v136
    %v267 = vpop.f32.mrb[0].mxu0
    %v268 = vadd.f32 %v95, %v267
    %v269 = vpop.f32.mrb[0].mxu0
    %v270 = vadd.f32 %v99, %v269
    %v271 = vpop.f32.mrb[0].mxu0
    %v272 = vadd.f32 %v95, %v271
    %v273 = vpop.f32.mrb[0].mxu0
    %v274 = vadd.f32 %v99, %v273
    %275 = vmatprep.mubr.bf16.mxu0 0
    %276 = vmatmul.mubr.bf16.gmra.mrb[0].mxu0 %v139
    %v277 = vpop.f32.mrb[0].mxu0
    %v278 = vadd.f32 %v95, %v277
    %v279 = vpop.f32.mrb[0].mxu0
    %v280 = vadd.f32 %v99, %v279
    %v281 = vpop.f32.mrb[0].mxu0
    %v282 = vadd.f32 %v95, %v281
    %v283 = vpop.f32.mrb[0].mxu0
    %v284 = vadd.f32 %v99, %v283
    %285 = vmatprep.mubr.bf16.mxu0 0
    %286 = vmatmul.mubr.bf16.gmra.mrb[0].mxu0 %v142
    %v287 = vpop.f32.mrb[0].mxu0
    %v288 = vadd.f32 %v95, %v287
    %v289 = vpop.f32.mrb[0].mxu0
    %v290 = vadd.f32 %v99, %v289
    %v291 = vpop.f32.mrb[0].mxu0
    %v292 = vadd.f32 %v95, %v291
    %v293 = vpop.f32.mrb[0].mxu0
    %v294 = vadd.f32 %v99, %v293
    %295 = vmatprep.mubr.bf16.mxu0 0
    %296 = vmatmul.mubr.bf16.gmra.mrb[0].mxu0 %v145
    %v297 = vpop.f32.mrb[0].mxu0
    %v298 = vadd.f32 %v95, %v297
    %v299 = vpop.f32.mrb[0].mxu0
    %v300 = vadd.f32 %v99, %v299
    %v301 = vpop.f32.mrb[0].mxu0
    %v302 = vadd.f32 %v95, %v301
    %v303 = vpop.f32.mrb[0].mxu0
    %v304 = vadd.f32 %v99, %v303
    %305 = vdwg.mxu0
    %306 = vst [vmem:[#allocation2] sm:$0xff] %v195
    %307 = vst [vmem:[#allocation2 + $0x8] sm:$0xff] %v197
    %308 = vst [vmem:[#allocation2 + $0x10] sm:$0xff] %v268
    %309 = vst [vmem:[#allocation2 + $0x18] sm:$0xff] %v270
    %310 = vst [vmem:[#allocation2 + $0x20] sm:$0xff] %v199
    %311 = vst [vmem:[#allocation2 + $0x28] sm:$0xff] %v201
    %312 = vst [vmem:[#allocation2 + $0x30] sm:$0xff] %v272
    %313 = vst [vmem:[#allocation2 + $0x38] sm:$0xff] %v274
    %314 = vst [vmem:[#allocation2 + $0x40] sm:$0xff] %v205
    %315 = vst [vmem:[#allocation2 + $0x48] sm:$0xff] %v207
    %316 = vst [vmem:[#allocation2 + $0x50] sm:$0xff] %v278
    %317 = vst [vmem:[#allocation2 + $0x58] sm:$0xff] %v280
    %318 = vst [vmem:[#allocation2 + $0x60] sm:$0xff] %v209
    %319 = vst [vmem:[#allocation2 + $0x68] sm:$0xff] %v211
    %320 = vst [vmem:[#allocation2 + $0x70] sm:$0xff] %v282
    %321 = vst [vmem:[#allocation2 + $0x78] sm:$0xff] %v284
    %322 = vst [vmem:[#allocation2 + $0x80] sm:$0xff] %v215
    %323 = vst [vmem:[#allocation2 + $0x88] sm:$0xff] %v217
    %324 = vst [vmem:[#allocation2 + $0x90] sm:$0xff] %v288
    %325 = vst [vmem:[#allocation2 + $0x98] sm:$0xff] %v290
    %326 = vst [vmem:[#allocation2 + $0xa0] sm:$0xff] %v219
    %327 = vst [vmem:[#allocation2 + $0xa8] sm:$0xff] %v221
    %328 = vst [vmem:[#allocation2 + $0xb0] sm:$0xff] %v292
    %329 = vst [vmem:[#allocation2 + $0xb8] sm:$0xff] %v294
    %330 = vst [vmem:[#allocation2 + $0xc0] sm:$0xff] %v225
    %331 = vst [vmem:[#allocation2 + $0xc8] sm:$0xff] %v227
    %332 = vst [vmem:[#allocation2 + $0xd0] sm:$0xff] %v298
    %333 = vst [vmem:[#allocation2 + $0xd8] sm:$0xff] %v300
    %334 = vst [vmem:[#allocation2 + $0xe0] sm:$0xff] %v229
    %335 = vst [vmem:[#allocation2 + $0xe8] sm:$0xff] %v231
    %336 = vst [vmem:[#allocation2 + $0xf0] sm:$0xff] %v302
    %337 = vst [vmem:[#allocation2 + $0xf8] sm:$0xff] %v304
    %v338 = vld [vmem:[#allocation3] sm:$0xff]
    %v339 = vld [vmem:[#allocation3 + $0x8] sm:$0xff]
    %v340 = vld [vmem:[#allocation3 + $0x10] sm:$0xff]
    %v341 = vld [vmem:[#allocation3 + $0x18] sm:$0xff]
    %v342 = vld [vmem:[#allocation3 + $0x20] sm:$0xff]
    %v343 = vld [vmem:[#allocation3 + $0x28] sm:$0xff]
    %v344 = vld [vmem:[#allocation3 + $0x30] sm:$0xff]
    %v345 = vld [vmem:[#allocation3 + $0x38] sm:$0xff]
    %v346 = vld [vmem:[#allocation3 + $0x40] sm:$0xff]
    %v347 = vld [vmem:[#allocation3 + $0x48] sm:$0xff]
    %v348 = vld [vmem:[#allocation3 + $0x50] sm:$0xff]
    %v349 = vld [vmem:[#allocation3 + $0x58] sm:$0xff]
    %v350 = vld [vmem:[#allocation3 + $0x60] sm:$0xff]
    %v351 = vld [vmem:[#allocation3 + $0x68] sm:$0xff]
    %v352 = vld [vmem:[#allocation3 + $0x70] sm:$0xff]
    %v353 = vld [vmem:[#allocation3 + $0x78] sm:$0xff]
    %v354 = vld [vmem:[#allocation3 + $0x80] sm:$0xff]
    %v355 = vld [vmem:[#allocation3 + $0x88] sm:$0xff]
    %v356 = vld [vmem:[#allocation3 + $0x90] sm:$0xff]
    %v357 = vld [vmem:[#allocation3 + $0x98] sm:$0xff]
    %v358 = vld [vmem:[#allocation3 + $0xa0] sm:$0xff]
    %v359 = vld [vmem:[#allocation3 + $0xa8] sm:$0xff]
    %v360 = vld [vmem:[#allocation3 + $0xb0] sm:$0xff]
    %v361 = vld [vmem:[#allocation3 + $0xb8] sm:$0xff]
    %v362 = vld [vmem:[#allocation3 + $0xc0] sm:$0xff]
    %v363 = vld [vmem:[#allocation3 + $0xc8] sm:$0xff]
    %v364 = vld [vmem:[#allocation3 + $0xd0] sm:$0xff]
    %v365 = vld [vmem:[#allocation3 + $0xd8] sm:$0xff]
    %v366 = vld [vmem:[#allocation3 + $0xe0] sm:$0xff]
    %v367 = vld [vmem:[#allocation3 + $0xe8] sm:$0xff]
    %v368 = vld [vmem:[#allocation3 + $0xf0] sm:$0xff]
    %v369 = vld [vmem:[#allocation3 + $0xf8] sm:$0xff]
    %v370 = vld [vmem:[#allocation6] sm:$0xff]
    %v371 = vld [vmem:[#allocation6 + $0x8] sm:$0xff]
    %v372 = vld [vmem:[#allocation6 + $0x10] sm:$0xff]
    %v373 = vld [vmem:[#allocation6 + $0x18] sm:$0xff]
    %v374 = vld [vmem:[#allocation6 + $0x20] sm:$0xff]
    %v375 = vld [vmem:[#allocation6 + $0x28] sm:$0xff]
    %v376 = vld [vmem:[#allocation6 + $0x30] sm:$0xff]
    %v377 = vld [vmem:[#allocation6 + $0x38] sm:$0xff]
    %v378 = vld [vmem:[#allocation6 + $0x40] sm:$0xff]
    %v379 = vld [vmem:[#allocation6 + $0x48] sm:$0xff]
    %v380 = vld [vmem:[#allocation6 + $0x50] sm:$0xff]
    %v381 = vld [vmem:[#allocation6 + $0x58] sm:$0xff]
    %v382 = vld [vmem:[#allocation6 + $0x60] sm:$0xff]
    %v383 = vld [vmem:[#allocation6 + $0x68] sm:$0xff]
    %v384 = vld [vmem:[#allocation6 + $0x70] sm:$0xff]
    %v385 = vld [vmem:[#allocation6 + $0x78] sm:$0xff]
    %v386 = vld [vmem:[#allocation6 + $0x80] sm:$0xff]
    %v387 = vld [vmem:[#allocation6 + $0x88] sm:$0xff]
    %v388 = vld [vmem:[#allocation6 + $0x90] sm:$0xff]
    %v389 = vld [vmem:[#allocation6 + $0x98] sm:$0xff]
    %v390 = vld [vmem:[#allocation6 + $0xa0] sm:$0xff]
    %v391 = vld [vmem:[#allocation6 + $0xa8] sm:$0xff]
    %v392 = vld [vmem:[#allocation6 + $0xb0] sm:$0xff]
    %v393 = vld [vmem:[#allocation6 + $0xb8] sm:$0xff]
    %v394 = vld [vmem:[#allocation6 + $0xc0] sm:$0xff]
    %v395 = vld [vmem:[#allocation6 + $0xc8] sm:$0xff]
    %v396 = vld [vmem:[#allocation6 + $0xd0] sm:$0xff]
    %v397 = vld [vmem:[#allocation6 + $0xd8] sm:$0xff]
    %v398 = vld [vmem:[#allocation6 + $0xe0] sm:$0xff]
    %v399 = vld [vmem:[#allocation6 + $0xe8] sm:$0xff]
    %v400 = vld [vmem:[#allocation6 + $0xf0] sm:$0xff]
    %v401 = vld [vmem:[#allocation6 + $0xf8] sm:$0xff]
    %v402 = vld [vmem:[#allocation6 + $0x100] sm:$0xff]
    %v403 = vld [vmem:[#allocation6 + $0x108] sm:$0xff]
    %v404 = vld [vmem:[#allocation6 + $0x110] sm:$0xff]
    %v405 = vld [vmem:[#allocation6 + $0x118] sm:$0xff]
    %v406 = vld [vmem:[#allocation6 + $0x120] sm:$0xff]
    %v407 = vld [vmem:[#allocation6 + $0x128] sm:$0xff]
    %v408 = vld [vmem:[#allocation6 + $0x130] sm:$0xff]
    %v409 = vld [vmem:[#allocation6 + $0x138] sm:$0xff]
    %v410 = vld [vmem:[#allocation6 + $0x140] sm:$0xff]
    %v411 = vld [vmem:[#allocation6 + $0x148] sm:$0xff]
    %v412 = vld [vmem:[#allocation6 + $0x150] sm:$0xff]
    %v413 = vld [vmem:[#allocation6 + $0x158] sm:$0xff]
    %v414 = vld [vmem:[#allocation6 + $0x160] sm:$0xff]
    %v415 = vld [vmem:[#allocation6 + $0x168] sm:$0xff]
    %v416 = vld [vmem:[#allocation6 + $0x170] sm:$0xff]
    %v417 = vld [vmem:[#allocation6 + $0x178] sm:$0xff]
    %v418 = vld [vmem:[#allocation6 + $0x180] sm:$0xff]
    %v419 = vld [vmem:[#allocation6 + $0x188] sm:$0xff]
    %v420 = vld [vmem:[#allocation6 + $0x190] sm:$0xff]
    %v421 = vld [vmem:[#allocation6 + $0x198] sm:$0xff]
    %v422 = vld [vmem:[#allocation6 + $0x1a0] sm:$0xff]
    %v423 = vld [vmem:[#allocation6 + $0x1a8] sm:$0xff]
    %v424 = vld [vmem:[#allocation6 + $0x1b0] sm:$0xff]
    %v425 = vld [vmem:[#allocation6 + $0x1b8] sm:$0xff]
    %v426 = vld [vmem:[#allocation6 + $0x1c0] sm:$0xff]
    %v427 = vld [vmem:[#allocation6 + $0x1c8] sm:$0xff]
    %v428 = vld [vmem:[#allocation6 + $0x1d0] sm:$0xff]
    %v429 = vld [vmem:[#allocation6 + $0x1d8] sm:$0xff]
    %v430 = vld [vmem:[#allocation6 + $0x1e0] sm:$0xff]
    %v431 = vld [vmem:[#allocation6 + $0x1e8] sm:$0xff]
    %v432 = vld [vmem:[#allocation6 + $0x1f0] sm:$0xff]
    %v433 = vld [vmem:[#allocation6 + $0x1f8] sm:$0xff]
    %v434 = vld [vmem:[%s5] sm:$0xf]
    %v436 = vlaneseq
    %v437 = vshrl.u32 %v436, 7
    %v438 = vsub.s32 0, %v437
    %v439 = vrot.slane %v434, %v438
    %v440 = vlaneseq
    %v441 = vshrl.u32 %v440, 7
    %v442 = vsub.s32 1, %v441
    %v443 = vrot.slane %v434, %v442
    %v444 = vlaneseq
    %v445 = vshrl.u32 %v444, 7
    %v446 = vsub.s32 2, %v445
    %v447 = vrot.slane %v434, %v446
    %v448 = vlaneseq
    %v449 = vshrl.u32 %v448, 7
    %v450 = vsub.s32 3, %v449
    %v451 = vrot.slane %v434, %v450
    %s456 = smul.u32 0, 4
    %s457 = smul.addr %s456, 8
    %s458 = scalar_lea.vmem [#allocation2], %s457
    %v459 = vld [vmem:[%s458] sm:$0xff]
    %v460 = vld [vmem:[%s458 + $0x8] sm:$0xff]
    %v461 = vld [vmem:[%s458 + $0x10] sm:$0xff]
    %v462 = vld [vmem:[%s458 + $0x18] sm:$0xff]
    %v495 = vunpack.c.l.b16 %v338
    %v496 = vunpack.c.h.b16 %v338
    %v497 = vunpack.c.l.b16 %v339
    %v498 = vunpack.c.h.b16 %v339
    %v499 = vunpack.c.l.b16 %v340
    %v500 = vunpack.c.h.b16 %v340
    %v501 = vunpack.c.l.b16 %v341
    %v502 = vunpack.c.h.b16 %v341
    %v503 = vunpack.c.l.b16 %v342
    %v504 = vunpack.c.h.b16 %v342
    %v505 = vunpack.c.l.b16 %v343
    %v506 = vunpack.c.h.b16 %v343
    %v507 = vunpack.c.l.b16 %v344
    %v508 = vunpack.c.h.b16 %v344
    %v509 = vunpack.c.l.b16 %v345
    %v510 = vunpack.c.h.b16 %v345
    %v511 = vunpack.c.l.b16 %v346
    %v512 = vunpack.c.h.b16 %v346
    %v513 = vunpack.c.l.b16 %v347
    %v514 = vunpack.c.h.b16 %v347
    %v515 = vunpack.c.l.b16 %v348
    %v516 = vunpack.c.h.b16 %v348
    %v517 = vunpack.c.l.b16 %v349
    %v518 = vunpack.c.h.b16 %v349
    %v519 = vunpack.c.l.b16 %v350
    %v520 = vunpack.c.h.b16 %v350
    %v521 = vunpack.c.l.b16 %v351
    %v522 = vunpack.c.h.b16 %v351
    %v523 = vunpack.c.l.b16 %v352
    %v524 = vunpack.c.h.b16 %v352
    %v525 = vunpack.c.l.b16 %v353
    %v526 = vunpack.c.h.b16 %v353
    %v527 = vunpack.c.l.b16 %v354
    %v528 = vunpack.c.h.b16 %v354
    %v529 = vunpack.c.l.b16 %v355
    %v530 = vunpack.c.h.b16 %v355
    %v531 = vunpack.c.l.b16 %v356
    %v532 = vunpack.c.h.b16 %v356
    %v533 = vunpack.c.l.b16 %v357
    %v534 = vunpack.c.h.b16 %v357
    %v535 = vunpack.c.l.b16 %v358
    %v536 = vunpack.c.h.b16 %v358
    %v537 = vunpack.c.l.b16 %v359
    %v538 = vunpack.c.h.b16 %v359
    %v539 = vunpack.c.l.b16 %v360
    %v540 = vunpack.c.h.b16 %v360
    %v541 = vunpack.c.l.b16 %v361
    %v542 = vunpack.c.h.b16 %v361
    %v543 = vunpack.c.l.b16 %v362
    %v544 = vunpack.c.h.b16 %v362
    %v545 = vunpack.c.l.b16 %v363
    %v546 = vunpack.c.h.b16 %v363
    %v547 = vunpack.c.l.b16 %v364
    %v548 = vunpack.c.h.b16 %v364
    %v549 = vunpack.c.l.b16 %v365
    %v550 = vunpack.c.h.b16 %v365
    %v551 = vunpack.c.l.b16 %v366
    %v552 = vunpack.c.h.b16 %v366
    %v553 = vunpack.c.l.b16 %v367
    %v554 = vunpack.c.h.b16 %v367
    %v555 = vunpack.c.l.b16 %v368
    %v556 = vunpack.c.h.b16 %v368
    %v557 = vunpack.c.l.b16 %v369
    %v558 = vunpack.c.h.b16 %v369
    %v559 = vpack.c.b16 %v499, %v495
    %v560 = vpack.c.b16 %v500, %v496
    %v561 = vpack.c.b16 %v501, %v497
    %v562 = vpack.c.b16 %v502, %v498
    %v563 = vpack.c.b16 %v507, %v503
    %v564 = vpack.c.b16 %v508, %v504
    %v565 = vpack.c.b16 %v509, %v505
    %v566 = vpack.c.b16 %v510, %v506
    %v567 = vpack.c.b16 %v515, %v511
    %v568 = vpack.c.b16 %v516, %v512
    %v569 = vpack.c.b16 %v517, %v513
    %v570 = vpack.c.b16 %v518, %v514
    %v571 = vpack.c.b16 %v523, %v519
    %v572 = vpack.c.b16 %v524, %v520
    %v573 = vpack.c.b16 %v525, %v521
    %v574 = vpack.c.b16 %v526, %v522
    %v575 = vpack.c.b16 %v531, %v527
    %v576 = vpack.c.b16 %v532, %v528
    %v577 = vpack.c.b16 %v533, %v529
    %v578 = vpack.c.b16 %v534, %v530
    %v579 = vpack.c.b16 %v539, %v535
    %v580 = vpack.c.b16 %v540, %v536
    %v581 = vpack.c.b16 %v541, %v537
    %v582 = vpack.c.b16 %v542, %v538
    %v583 = vpack.c.b16 %v547, %v543
    %v584 = vpack.c.b16 %v548, %v544
    %v585 = vpack.c.b16 %v549, %v545
    %v586 = vpack.c.b16 %v550, %v546
    %v587 = vpack.c.b16 %v555, %v551
    %v588 = vpack.c.b16 %v556, %v552
    %v589 = vpack.c.b16 %v557, %v553
    %v590 = vpack.c.b16 %v558, %v554
    %623 = vmatprep.subr.bf16.mxu0 %v560
    %624 = vmatpush1.bf16.msra.mxu0 %v559
    %625 = vmatprep.subr.bf16.mxu0 %v564
    %626 = vmatpush1.bf16.msra.mxu0 %v563
    %627 = vmatprep.subr.bf16.mxu0 %v568
    %628 = vmatpush1.bf16.msra.mxu0 %v567
    %629 = vmatprep.subr.bf16.mxu0 %v572
    %630 = vmatpush1.bf16.msra.mxu0 %v571
    %631 = vmatprep.subr.bf16.mxu0 %v576
    %632 = vmatpush1.bf16.msra.mxu0 %v575
    %633 = vmatprep.subr.bf16.mxu0 %v580
    %634 = vmatpush1.bf16.msra.mxu0 %v579
    %635 = vmatprep.subr.bf16.mxu0 %v584
    %636 = vmatpush1.bf16.msra.mxu0 %v583
    %637 = vmatprep.subr.bf16.mxu0 %v588
    %638 = vmatpush1.bf16.msra.mxu0 %v587
    %639 = vmatprep.subr.bf16.mxu0 0
    %640 = vmatpush1.bf16.msra.mxu0 0
    %641 = vmatprep.subr.bf16.mxu0 0
    %642 = vmatpush1.bf16.msra.mxu0 0
    %643 = vmatprep.subr.bf16.mxu0 0
    %644 = vmatpush1.bf16.msra.mxu0 0
    %645 = vmatprep.subr.bf16.mxu0 0
    %646 = vmatpush1.bf16.msra.mxu0 0
    %647 = vmatprep.subr.bf16.mxu0 0
    %648 = vmatpush1.bf16.msra.mxu0 0
    %649 = vmatprep.subr.bf16.mxu0 0
    %650 = vmatpush1.bf16.msra.mxu0 0
    %651 = vmatprep.subr.bf16.mxu0 0
    %652 = vmatpush1.bf16.msra.mxu0 0
    %653 = vmatprep.subr.bf16.mxu0 0
    %654 = vmatpush1.bf16.msra.mxu0 0
    %655 = vmatprep.mubr.bf16.mxu0 0
    %656 = vmatmul.mubr.bf16.gmra.mrb[0].mxu0 0
    %v657 = vpop.f32.mrb[0].mxu0
    %v658 = vadd.f32 0.0, %v657
    %v659 = vpop.f32.mrb[0].mxu0
    %v660 = vadd.f32 0.0, %v659
    %v661 = vpop.f32.mrb[0].mxu0
    %v662 = vpop.f32.mrb[0].mxu0
    %663 = vdwg.mxu0
    %664 = vmatprep.subr.bf16.mxu0 %v562
    %665 = vmatpush1.bf16.msra.mxu0 %v561
    %666 = vmatprep.subr.bf16.mxu0 %v566
    %667 = vmatpush1.bf16.msra.mxu0 %v565
    %668 = vmatprep.subr.bf16.mxu0 %v570
    %669 = vmatpush1.bf16.msra.mxu0 %v569
    %670 = vmatprep.subr.bf16.mxu0 %v574
    %671 = vmatpush1.bf16.msra.mxu0 %v573
    %672 = vmatprep.subr.bf16.mxu0 %v578
    %673 = vmatpush1.bf16.msra.mxu0 %v577
    %674 = vmatprep.subr.bf16.mxu0 %v582
    %675 = vmatpush1.bf16.msra.mxu0 %v581
    %676 = vmatprep.subr.bf16.mxu0 %v586
    %677 = vmatpush1.bf16.msra.mxu0 %v585
    %678 = vmatprep.subr.bf16.mxu0 %v590
    %679 = vmatpush1.bf16.msra.mxu0 %v589
    %680 = vmatprep.subr.bf16.mxu0 0
    %681 = vmatpush1.bf16.msra.mxu0 0
    %682 = vmatprep.subr.bf16.mxu0 0
    %683 = vmatpush1.bf16.msra.mxu0 0
    %684 = vmatprep.subr.bf16.mxu0 0
    %685 = vmatpush1.bf16.msra.mxu0 0
    %686 = vmatprep.subr.bf16.mxu0 0
    %687 = vmatpush1.bf16.msra.mxu0 0
    %688 = vmatprep.subr.bf16.mxu0 0
    %689 = vmatpush1.bf16.msra.mxu0 0
    %690 = vmatprep.subr.bf16.mxu0 0
    %691 = vmatpush1.bf16.msra.mxu0 0
    %692 = vmatprep.subr.bf16.mxu0 0
    %693 = vmatpush1.bf16.msra.mxu0 0
    %694 = vmatprep.subr.bf16.mxu0 0
    %695 = vmatpush1.bf16.msra.mxu0 0
    %696 = vmatprep.mubr.bf16.mxu0 0
    %697 = vmatmul.mubr.bf16.gmra.mrb[0].mxu0 0
    %v698 = vpop.f32.mrb[0].mxu0
    %v699 = vadd.f32 0.0, %v698
    %v700 = vpop.f32.mrb[0].mxu0
    %v701 = vadd.f32 0.0, %v700
    %v702 = vpop.f32.mrb[0].mxu0
    %v703 = vpop.f32.mrb[0].mxu0
    %704 = vdwg.mxu0
    %v705 = vadd.f32 %v459, %v658
    %v706 = vadd.f32 %v460, %v660
    %v707 = vadd.f32 %v461, %v699
    %v708 = vadd.f32 %v462, %v701
    %v709 = vmul.f32 %v705, 0.5
    %v710 = vmul.f32 %v706, 0.5
    %v711 = vmul.f32 %v707, 0.5
    %v712 = vtanh.pop %v709
    %v713 = vtanh.pop %v710
    %v714 = vtanh.pop %v711
    %v715 = vmul.f32 %v712, 0.5
    %v716 = vmul.f32 %v713, 0.5
    %v717 = vmul.f32 %v714, 0.5
    %v718 = vadd.f32 %v715, 0.5
    %v719 = vadd.f32 %v716, 0.5
    %v720 = vadd.f32 %v717, 0.5
    %v721 = vtanh.pop %v708
    %v722 = vmul.f32 %v719, 0.0
    %v723 = vmul.f32 %v718, %v721
    %v724 = vadd.f32 %v722, %v723
    %v725 = vtanh.pop %v724
    %v726 = vmul.f32 %v720, %v725
    %v727 = vpack.c.bf16 %v726, %v726
    %v792 = vunpack.c.l.b16 %v370
    %v793 = vunpack.c.h.b16 %v370
    %v794 = vunpack.c.l.b16 %v371
    %v795 = vunpack.c.h.b16 %v371
    %v796 = vunpack.c.l.b16 %v372
    %v797 = vunpack.c.h.b16 %v372
    %v798 = vunpack.c.l.b16 %v373
    %v799 = vunpack.c.h.b16 %v373
    %v800 = vunpack.c.l.b16 %v374
    %v801 = vunpack.c.h.b16 %v374
    %v802 = vunpack.c.l.b16 %v375
    %v803 = vunpack.c.h.b16 %v375
    %v804 = vunpack.c.l.b16 %v376
    %v805 = vunpack.c.h.b16 %v376
    %v806 = vunpack.c.l.b16 %v377
    %v807 = vunpack.c.h.b16 %v377
    %v808 = vunpack.c.l.b16 %v378
    %v809 = vunpack.c.h.b16 %v378
    %v810 = vunpack.c.l.b16 %v379
    %v811 = vunpack.c.h.b16 %v379
    %v812 = vunpack.c.l.b16 %v380
    %v813 = vunpack.c.h.b16 %v380
    %v814 = vunpack.c.l.b16 %v381
    %v815 = vunpack.c.h.b16 %v381
    %v816 = vunpack.c.l.b16 %v382
    %v817 = vunpack.c.h.b16 %v382
    %v818 = vunpack.c.l.b16 %v383
    %v819 = vunpack.c.h.b16 %v383
    %v820 = vunpack.c.l.b16 %v384
    %v821 = vunpack.c.h.b16 %v384
    %v822 = vunpack.c.l.b16 %v385
    %v823 = vunpack.c.h.b16 %v385
    %v824 = vunpack.c.l.b16 %v386
    %v825 = vunpack.c.h.b16 %v386
    %v826 = vunpack.c.l.b16 %v387
    %v827 = vunpack.c.h.b16 %v387
    %v828 = vunpack.c.l.b16 %v388
    %v829 = vunpack.c.h.b16 %v388
    %v830 = vunpack.c.l.b16 %v389
    %v831 = vunpack.c.h.b16 %v389
    %v832 = vunpack.c.l.b16 %v390
    %v833 = vunpack.c.h.b16 %v390
    %v834 = vunpack.c.l.b16 %v391
    %v835 = vunpack.c.h.b16 %v391
    %v836 = vunpack.c.l.b16 %v392
    %v837 = vunpack.c.h.b16 %v392
    %v838 = vunpack.c.l.b16 %v393
    %v839 = vunpack.c.h.b16 %v393
    %v840 = vunpack.c.l.b16 %v394
    %v841 = vunpack.c.h.b16 %v394
    %v842 = vunpack.c.l.b16 %v395
    %v843 = vunpack.c.h.b16 %v395
    %v844 = vunpack.c.l.b16 %v396
    %v845 = vunpack.c.h.b16 %v396
    %v846 = vunpack.c.l.b16 %v397
    %v847 = vunpack.c.h.b16 %v397
    %v848 = vunpack.c.l.b16 %v398
    %v849 = vunpack.c.h.b16 %v398
    %v850 = vunpack.c.l.b16 %v399
    %v851 = vunpack.c.h.b16 %v399
    %v852 = vunpack.c.l.b16 %v400
    %v853 = vunpack.c.h.b16 %v400
    %v854 = vunpack.c.l.b16 %v401
    %v855 = vunpack.c.h.b16 %v401
    %v856 = vunpack.c.l.b16 %v402
    %v857 = vunpack.c.h.b16 %v402
    %v858 = vunpack.c.l.b16 %v403
    %v859 = vunpack.c.h.b16 %v403
    %v860 = vunpack.c.l.b16 %v404
    %v861 = vunpack.c.h.b16 %v404
    %v862 = vunpack.c.l.b16 %v405
    %v863 = vunpack.c.h.b16 %v405
    %v864 = vunpack.c.l.b16 %v406
    %v865 = vunpack.c.h.b16 %v406
    %v866 = vunpack.c.l.b16 %v407
    %v867 = vunpack.c.h.b16 %v407
    %v868 = vunpack.c.l.b16 %v408
    %v869 = vunpack.c.h.b16 %v408
    %v870 = vunpack.c.l.b16 %v409
    %v871 = vunpack.c.h.b16 %v409
    %v872 = vunpack.c.l.b16 %v410
    %v873 = vunpack.c.h.b16 %v410
    %v874 = vunpack.c.l.b16 %v411
    %v875 = vunpack.c.h.b16 %v411
    %v876 = vunpack.c.l.b16 %v412
    %v877 = vunpack.c.h.b16 %v412
    %v878 = vunpack.c.l.b16 %v413
    %v879 = vunpack.c.h.b16 %v413
    %v880 = vunpack.c.l.b16 %v414
    %v881 = vunpack.c.h.b16 %v414
    %v882 = vunpack.c.l.b16 %v415
    %v883 = vunpack.c.h.b16 %v415
    %v884 = vunpack.c.l.b16 %v416
    %v885 = vunpack.c.h.b16 %v416
    %v886 = vunpack.c.l.b16 %v417
    %v887 = vunpack.c.h.b16 %v417
    %v888 = vunpack.c.l.b16 %v418
    %v889 = vunpack.c.h.b16 %v418
    %v890 = vunpack.c.l.b16 %v419
    %v891 = vunpack.c.h.b16 %v419
    %v892 = vunpack.c.l.b16 %v420
    %v893 = vunpack.c.h.b16 %v420
    %v894 = vunpack.c.l.b16 %v421
    %v895 = vunpack.c.h.b16 %v421
    %v896 = vunpack.c.l.b16 %v422
    %v897 = vunpack.c.h.b16 %v422
    %v898 = vunpack.c.l.b16 %v423
    %v899 = vunpack.c.h.b16 %v423
    %v900 = vunpack.c.l.b16 %v424
    %v901 = vunpack.c.h.b16 %v424
    %v902 = vunpack.c.l.b16 %v425
    %v903 = vunpack.c.h.b16 %v425
    %v904 = vunpack.c.l.b16 %v426
    %v905 = vunpack.c.h.b16 %v426
    %v906 = vunpack.c.l.b16 %v427
    %v907 = vunpack.c.h.b16 %v427
    %v908 = vunpack.c.l.b16 %v428
    %v909 = vunpack.c.h.b16 %v428
    %v910 = vunpack.c.l.b16 %v429
    %v911 = vunpack.c.h.b16 %v429
    %v912 = vunpack.c.l.b16 %v430
    %v913 = vunpack.c.h.b16 %v430
    %v914 = vunpack.c.l.b16 %v431
    %v915 = vunpack.c.h.b16 %v431
    %v916 = vunpack.c.l.b16 %v432
    %v917 = vunpack.c.h.b16 %v432
    %v918 = vunpack.c.l.b16 %v433
    %v919 = vunpack.c.h.b16 %v433
    %v920 = vpack.c.b16 %v796, %v792
    %v921 = vpack.c.b16 %v797, %v793
    %v922 = vpack.c.b16 %v798, %v794
    %v923 = vpack.c.b16 %v799, %v795
    %v924 = vpack.c.b16 %v804, %v800
    %v925 = vpack.c.b16 %v805, %v801
    %v926 = vpack.c.b16 %v806, %v802
    %v927 = vpack.c.b16 %v807, %v803
    %v928 = vpack.c.b16 %v812, %v808
    %v929 = vpack.c.b16 %v813, %v809
    %v930 = vpack.c.b16 %v814, %v810
    %v931 = vpack.c.b16 %v815, %v811
    %v932 = vpack.c.b16 %v820, %v816
    %v933 = vpack.c.b16 %v821, %v817
    %v934 = vpack.c.b16 %v822, %v818
    %v935 = vpack.c.b16 %v823, %v819
    %v936 = vpack.c.b16 %v828, %v824
    %v937 = vpack.c.b16 %v829, %v825
    %v938 = vpack.c.b16 %v830, %v826
    %v939 = vpack.c.b16 %v831, %v827
    %v940 = vpack.c.b16 %v836, %v832
    %v941 = vpack.c.b16 %v837, %v833
    %v942 = vpack.c.b16 %v838, %v834
    %v943 = vpack.c.b16 %v839, %v835
    %v944 = vpack.c.b16 %v844, %v840
    %v945 = vpack.c.b16 %v845, %v841
    %v946 = vpack.c.b16 %v846, %v842
    %v947 = vpack.c.b16 %v847, %v843
    %v948 = vpack.c.b16 %v852, %v848
    %v949 = vpack.c.b16 %v853, %v849
    %v950 = vpack.c.b16 %v854, %v850
    %v951 = vpack.c.b16 %v855, %v851
    %v952 = vpack.c.b16 %v860, %v856
    %v953 = vpack.c.b16 %v861, %v857
    %v954 = vpack.c.b16 %v862, %v858
    %v955 = vpack.c.b16 %v863, %v859
    %v956 = vpack.c.b16 %v868, %v864
    %v957 = vpack.c.b16 %v869, %v865
    %v958 = vpack.c.b16 %v870, %v866
    %v959 = vpack.c.b16 %v871, %v867
    %v960 = vpack.c.b16 %v876, %v872
    %v961 = vpack.c.b16 %v877, %v873
    %v962 = vpack.c.b16 %v878, %v874
    %v963 = vpack.c.b16 %v879, %v875
    %v964 = vpack.c.b16 %v884, %v880
    %v965 = vpack.c.b16 %v885, %v881
    %v966 = vpack.c.b16 %v886, %v882
    %v967 = vpack.c.b16 %v887, %v883
    %v968 = vpack.c.b16 %v892, %v888
    %v969 = vpack.c.b16 %v893, %v889
    %v970 = vpack.c.b16 %v894, %v890
    %v971 = vpack.c.b16 %v895, %v891
    %v972 = vpack.c.b16 %v900, %v896
    %v973 = vpack.c.b16 %v901, %v897
    %v974 = vpack.c.b16 %v902, %v898
    %v975 = vpack.c.b16 %v903, %v899
    %v976 = vpack.c.b16 %v908, %v904
    %v977 = vpack.c.b16 %v909, %v905
    %v978 = vpack.c.b16 %v910, %v906
    %v979 = vpack.c.b16 %v911, %v907
    %v980 = vpack.c.b16 %v916, %v912
    %v981 = vpack.c.b16 %v917, %v913
    %v982 = vpack.c.b16 %v918, %v914
    %v983 = vpack.c.b16 %v919, %v915
    %1048 = vmatprep.subr.bf16.mxu0 %v921
    %1049 = vmatpush1.bf16.msra.mxu0 %v920
    %1050 = vmatprep.subr.bf16.mxu0 %v925
    %1051 = vmatpush1.bf16.msra.mxu0 %v924
    %1052 = vmatprep.subr.bf16.mxu0 %v929
    %1053 = vmatpush1.bf16.msra.mxu0 %v928
    %1054 = vmatprep.subr.bf16.mxu0 %v933
    %1055 = vmatpush1.bf16.msra.mxu0 %v932
    %1056 = vmatprep.subr.bf16.mxu0 %v937
    %1057 = vmatpush1.bf16.msra.mxu0 %v936
    %1058 = vmatprep.subr.bf16.mxu0 %v941
    %1059 = vmatpush1.bf16.msra.mxu0 %v940
    %1060 = vmatprep.subr.bf16.mxu0 %v945
    %1061 = vmatpush1.bf16.msra.mxu0 %v944
    %1062 = vmatprep.subr.bf16.mxu0 %v949
    %1063 = vmatpush1.bf16.msra.mxu0 %v948
    %1064 = vmatprep.subr.bf16.mxu0 %v953
    %1065 = vmatpush1.bf16.msra.mxu0 %v952
    %1066 = vmatprep.subr.bf16.mxu0 %v957
    %1067 = vmatpush1.bf16.msra.mxu0 %v956
    %1068 = vmatprep.subr.bf16.mxu0 %v961
    %1069 = vmatpush1.bf16.msra.mxu0 %v960
    %1070 = vmatprep.subr.bf16.mxu0 %v965
    %1071 = vmatpush1.bf16.msra.mxu0 %v964
    %1072 = vmatprep.subr.bf16.mxu0 %v969
    %1073 = vmatpush1.bf16.msra.mxu0 %v968
    %1074 = vmatprep.subr.bf16.mxu0 %v973
    %1075 = vmatpush1.bf16.msra.mxu0 %v972
    %1076 = vmatprep.subr.bf16.mxu0 %v977
    %1077 = vmatpush1.bf16.msra.mxu0 %v976
    %1078 = vmatprep.subr.bf16.mxu0 %v981
    %1079 = vmatpush1.bf16.msra.mxu0 %v980
    %1080 = vmatprep.mubr.bf16.mxu0 0
    %1081 = vmatmul.mubr.bf16.gmra.mrb[0].mxu0 %v727
    %v1082 = vpop.f32.mrb[0].mxu0
    %v1083 = vadd.f32 %v439, %v1082
    %v1084 = vpop.f32.mrb[0].mxu0
    %v1085 = vadd.f32 %v443, %v1084
    %v1086 = vpop.f32.mrb[0].mxu0
    %v1087 = vpop.f32.mrb[0].mxu0
    %1088 = vdwg.mxu0
    %1089 = vmatprep.subr.bf16.mxu0 %v923
    %1090 = vmatpush1.bf16.msra.mxu0 %v922
    %1091 = vmatprep.subr.bf16.mxu0 %v927
    %1092 = vmatpush1.bf16.msra.mxu0 %v926
    %1093 = vmatprep.subr.bf16.mxu0 %v931
    %1094 = vmatpush1.bf16.msra.mxu0 %v930
    %1095 = vmatprep.subr.bf16.mxu0 %v935
    %1096 = vmatpush1.bf16.msra.mxu0 %v934
    %1097 = vmatprep.subr.bf16.mxu0 %v939
    %1098 = vmatpush1.bf16.msra.mxu0 %v938
    %1099 = vmatprep.subr.bf16.mxu0 %v943
    %1100 = vmatpush1.bf16.msra.mxu0 %v942
    %1101 = vmatprep.subr.bf16.mxu0 %v947
    %1102 = vmatpush1.bf16.msra.mxu0 %v946
    %1103 = vmatprep.subr.bf16.mxu0 %v951
    %1104 = vmatpush1.bf16.msra.mxu0 %v950
    %1105 = vmatprep.subr.bf16.mxu0 %v955
    %1106 = vmatpush1.bf16.msra.mxu0 %v954
    %1107 = vmatprep.subr.bf16.mxu0 %v959
    %1108 = vmatpush1.bf16.msra.mxu0 %v958
    %1109 = vmatprep.subr.bf16.mxu0 %v963
    %1110 = vmatpush1.bf16.msra.mxu0 %v962
    %1111 = vmatprep.subr.bf16.mxu0 %v967
    %1112 = vmatpush1.bf16.msra.mxu0 %v966
    %1113 = vmatprep.subr.bf16.mxu0 %v971
    %1114 = vmatpush1.bf16.msra.mxu0 %v970
    %1115 = vmatprep.subr.bf16.mxu0 %v975
    %1116 = vmatpush1.bf16.msra.mxu0 %v974
    %1117 = vmatprep.subr.bf16.mxu0 %v979
    %1118 = vmatpush1.bf16.msra.mxu0 %v978
    %1119 = vmatprep.subr.bf16.mxu0 %v983
    %1120 = vmatpush1.bf16.msra.mxu0 %v982
    %1121 = vmatprep.mubr.bf16.mxu0 0
    %1122 = vmatmul.mubr.bf16.gmra.mrb[0].mxu0 %v727
    %v1123 = vpop.f32.mrb[0].mxu0
    %v1124 = vadd.f32 %v447, %v1123
    %v1125 = vpop.f32.mrb[0].mxu0
    %v1126 = vadd.f32 %v451, %v1125
    %v1127 = vpop.f32.mrb[0].mxu0
    %v1128 = vpop.f32.mrb[0].mxu0
    %1129 = vdwg.mxu0
    %v1130 = vmul.f32 %v1083, 0.5
    %v1131 = vmul.f32 %v1085, 0.5
    %v1132 = vmul.f32 %v1124, 0.5
    %v1133 = vtanh.pop %v1130
    %v1134 = vtanh.pop %v1131
    %v1135 = vtanh.pop %v1132
    %v1136 = vmul.f32 %v1133, 0.5
    %v1137 = vmul.f32 %v1134, 0.5
    %v1138 = vmul.f32 %v1135, 0.5
    %v1139 = vadd.f32 %v1136, 0.5
    %v1140 = vadd.f32 %v1137, 0.5
    %v1141 = vadd.f32 %v1138, 0.5
    %v1142 = vtanh.pop %v1126
    %v1143 = vmul.f32 %v1140, 0.0
    %v1144 = vmul.f32 %v1139, %v1142
    %v1145 = vadd.f32 %v1143, %v1144
    %v1146 = vtanh.pop %v1145
    %v1147 = vmul.f32 %v1141, %v1146
    %s1148 = smul.u32 1, 4
    %s1149 = smul.addr %s1148, 8
    %s1150 = scalar_lea.vmem [#allocation2], %s1149
    %v1151 = vld [vmem:[%s1150] sm:$0xff]
    %v1152 = vld [vmem:[%s1150 + $0x8] sm:$0xff]
    %v1153 = vld [vmem:[%s1150 + $0x10] sm:$0xff]
    %v1154 = vld [vmem:[%s1150 + $0x18] sm:$0xff]
    %1155 = vmatprep.subr.bf16.mxu0 %v560
    %1156 = vmatpush1.bf16.msra.mxu0 %v559
    %1157 = vmatprep.subr.bf16.mxu0 %v564
    %1158 = vmatpush1.bf16.msra.mxu0 %v563
    %1159 = vmatprep.subr.bf16.mxu0 %v568
    %1160 = vmatpush1.bf16.msra.mxu0 %v567
    %1161 = vmatprep.subr.bf16.mxu0 %v572
    %1162 = vmatpush1.bf16.msra.mxu0 %v571
    %1163 = vmatprep.subr.bf16.mxu0 %v576
    %1164 = vmatpush1.bf16.msra.mxu0 %v575
    %1165 = vmatprep.subr.bf16.mxu0 %v580
    %1166 = vmatpush1.bf16.msra.mxu0 %v579
    %1167 = vmatprep.subr.bf16.mxu0 %v584
    %1168 = vmatpush1.bf16.msra.mxu0 %v583
    %1169 = vmatprep.subr.bf16.mxu0 %v588
    %1170 = vmatpush1.bf16.msra.mxu0 %v587
    %1171 = vmatprep.subr.bf16.mxu0 0
    %1172 = vmatpush1.bf16.msra.mxu0 0
    %1173 = vmatprep.subr.bf16.mxu0 0
    %1174 = vmatpush1.bf16.msra.mxu0 0
    %1175 = vmatprep.subr.bf16.mxu0 0
    %1176 = vmatpush1.bf16.msra.mxu0 0
    %1177 = vmatprep.subr.bf16.mxu0 0
    %1178 = vmatpush1.bf16.msra.mxu0 0
    %1179 = vmatprep.subr.bf16.mxu0 0
    %1180 = vmatpush1.bf16.msra.mxu0 0
    %1181 = vmatprep.subr.bf16.mxu0 0
    %1182 = vmatpush1.bf16.msra.mxu0 0
    %1183 = vmatprep.subr.bf16.mxu0 0
    %1184 = vmatpush1.bf16.msra.mxu0 0
    %1185 = vmatprep.subr.bf16.mxu0 0
    %1186 = vmatpush1.bf16.msra.mxu0 0
    %1187 = vmatprep.mubr.bf16.mxu0 0
    %1188 = vmatmul.mubr.bf16.gmra.mrb[0].mxu0 %v727
    %v1189 = vpop.f32.mrb[0].mxu0
    %v1190 = vadd.f32 0.0, %v1189
    %v1191 = vpop.f32.mrb[0].mxu0
    %v1192 = vadd.f32 0.0, %v1191
    %v1193 = vpop.f32.mrb[0].mxu0
    %v1194 = vpop.f32.mrb[0].mxu0
    %1195 = vdwg.mxu0
    %1196 = vmatprep.subr.bf16.mxu0 %v562
    %1197 = vmatpush1.bf16.msra.mxu0 %v561
    %1198 = vmatprep.subr.bf16.mxu0 %v566
    %1199 = vmatpush1.bf16.msra.mxu0 %v565
    %1200 = vmatprep.subr.bf16.mxu0 %v570
    %1201 = vmatpush1.bf16.msra.mxu0 %v569
    %1202 = vmatprep.subr.bf16.mxu0 %v574
    %1203 = vmatpush1.bf16.msra.mxu0 %v573
    %1204 = vmatprep.subr.bf16.mxu0 %v578
    %1205 = vmatpush1.bf16.msra.mxu0 %v577
    %1206 = vmatprep.subr.bf16.mxu0 %v582
    %1207 = vmatpush1.bf16.msra.mxu0 %v581
    %1208 = vmatprep.subr.bf16.mxu0 %v586
    %1209 = vmatpush1.bf16.msra.mxu0 %v585
    %1210 = vmatprep.subr.bf16.mxu0 %v590
    %1211 = vmatpush1.bf16.msra.mxu0 %v589
    %1212 = vmatprep.subr.bf16.mxu0 0
    %1213 = vmatpush1.bf16.msra.mxu0 0
    %1214 = vmatprep.subr.bf16.mxu0 0
    %1215 = vmatpush1.bf16.msra.mxu0 0
    %1216 = vmatprep.subr.bf16.mxu0 0
    %1217 = vmatpush1.bf16.msra.mxu0 0
    %1218 = vmatprep.subr.bf16.mxu0 0
    %1219 = vmatpush1.bf16.msra.mxu0 0
    %1220 = vmatprep.subr.bf16.mxu0 0
    %1221 = vmatpush1.bf16.msra.mxu0 0
    %1222 = vmatprep.subr.bf16.mxu0 0
    %1223 = vmatpush1.bf16.msra.mxu0 0
    %1224 = vmatprep.subr.bf16.mxu0 0
    %1225 = vmatpush1.bf16.msra.mxu0 0
    %1226 = vmatprep.subr.bf16.mxu0 0
    %1227 = vmatpush1.bf16.msra.mxu0 0
    %1228 = vmatprep.mubr.bf16.mxu0 0
    %1229 = vmatmul.mubr.bf16.gmra.mrb[0].mxu0 %v727
    %v1230 = vpop.f32.mrb[0].mxu0
    %v1231 = vadd.f32 0.0, %v1230
    %v1232 = vpop.f32.mrb[0].mxu0
    %v1233 = vadd.f32 0.0, %v1232
    %v1234 = vpop.f32.mrb[0].mxu0
    %v1235 = vpop.f32.mrb[0].mxu0
    %1236 = vdwg.mxu0
    %v1237 = vadd.f32 %v1151, %v1190
    %v1238 = vadd.f32 %v1152, %v1192
    %v1239 = vadd.f32 %v1153, %v1231
    %v1240 = vadd.f32 %v1154, %v1233
    %v1241 = vmul.f32 %v1237, 0.5
    %v1242 = vmul.f32 %v1238, 0.5
    %v1243 = vmul.f32 %v1239, 0.5
    %v1244 = vtanh.pop %v1241
    %v1245 = vtanh.pop %v1242
    %v1246 = vtanh.pop %v1243
    %v1247 = vmul.f32 %v1244, 0.5
    %v1248 = vmul.f32 %v1245, 0.5
    %v1249 = vmul.f32 %v1246, 0.5
    %v1250 = vadd.f32 %v1247, 0.5
    %v1251 = vadd.f32 %v1248, 0.5
    %v1252 = vadd.f32 %v1249, 0.5
    %v1253 = vtanh.pop %v1240
    %v1254 = vmul.f32 %v1251, %v724
    %v1255 = vmul.f32 %v1250, %v1253
    %v1256 = vadd.f32 %v1254, %v1255
    %v1257 = vtanh.pop %v1256
    %v1258 = vmul.f32 %v1252, %v1257
    %v1259 = vpack.c.bf16 %v1258, %v1258
    %v1260 = vpack.c.bf16 %v1147, %v1147
    %1261 = vmatprep.subr.bf16.mxu0 %v921
    %1262 = vmatpush1.bf16.msra.mxu0 %v920
    %1263 = vmatprep.subr.bf16.mxu0 %v925
    %1264 = vmatpush1.bf16.msra.mxu0 %v924
    %1265 = vmatprep.subr.bf16.mxu0 %v929
    %1266 = vmatpush1.bf16.msra.mxu0 %v928
    %1267 = vmatprep.subr.bf16.mxu0 %v933
    %1268 = vmatpush1.bf16.msra.mxu0 %v932
    %1269 = vmatprep.subr.bf16.mxu0 %v937
    %1270 = vmatpush1.bf16.msra.mxu0 %v936
    %1271 = vmatprep.subr.bf16.mxu0 %v941
    %1272 = vmatpush1.bf16.msra.mxu0 %v940
    %1273 = vmatprep.subr.bf16.mxu0 %v945
    %1274 = vmatpush1.bf16.msra.mxu0 %v944
    %1275 = vmatprep.subr.bf16.mxu0 %v949
    %1276 = vmatpush1.bf16.msra.mxu0 %v948
    %1277 = vmatprep.subr.bf16.mxu0 %v953
    %1278 = vmatpush1.bf16.msra.mxu0 %v952
    %1279 = vmatprep.subr.bf16.mxu0 %v957
    %1280 = vmatpush1.bf16.msra.mxu0 %v956
    %1281 = vmatprep.subr.bf16.mxu0 %v961
    %1282 = vmatpush1.bf16.msra.mxu0 %v960
    %1283 = vmatprep.subr.bf16.mxu0 %v965
    %1284 = vmatpush1.bf16.msra.mxu0 %v964
    %1285 = vmatprep.subr.bf16.mxu0 %v969
    %1286 = vmatpush1.bf16.msra.mxu0 %v968
    %1287 = vmatprep.subr.bf16.mxu0 %v973
    %1288 = vmatpush1.bf16.msra.mxu0 %v972
    %1289 = vmatprep.subr.bf16.mxu0 %v977
    %1290 = vmatpush1.bf16.msra.mxu0 %v976
    %1291 = vmatprep.subr.bf16.mxu0 %v981
    %1292 = vmatpush1.bf16.msra.mxu0 %v980
    %1293 = vmatprep.mubr.bf16.mxu0 %v1260
    %1294 = vmatmul.mubr.bf16.gmra.mrb[0].mxu0 %v1259
    %v1295 = vpop.f32.mrb[0].mxu0
    %v1296 = vadd.f32 %v439, %v1295
    %v1297 = vpop.f32.mrb[0].mxu0
    %v1298 = vadd.f32 %v443, %v1297
    %v1299 = vpop.f32.mrb[0].mxu0
    %v1300 = vpop.f32.mrb[0].mxu0
    %1301 = vdwg.mxu0
    %1302 = vmatprep.subr.bf16.mxu0 %v923
    %1303 = vmatpush1.bf16.msra.mxu0 %v922
    %1304 = vmatprep.subr.bf16.mxu0 %v927
    %1305 = vmatpush1.bf16.msra.mxu0 %v926
    %1306 = vmatprep.subr.bf16.mxu0 %v931
    %1307 = vmatpush1.bf16.msra.mxu0 %v930
    %1308 = vmatprep.subr.bf16.mxu0 %v935
    %1309 = vmatpush1.bf16.msra.mxu0 %v934
    %1310 = vmatprep.subr.bf16.mxu0 %v939
    %1311 = vmatpush1.bf16.msra.mxu0 %v938
    %1312 = vmatprep.subr.bf16.mxu0 %v943
    %1313 = vmatpush1.bf16.msra.mxu0 %v942
    %1314 = vmatprep.subr.bf16.mxu0 %v947
    %1315 = vmatpush1.bf16.msra.mxu0 %v946
    %1316 = vmatprep.subr.bf16.mxu0 %v951
    %1317 = vmatpush1.bf16.msra.mxu0 %v950
    %1318 = vmatprep.subr.bf16.mxu0 %v955
    %1319 = vmatpush1.bf16.msra.mxu0 %v954
    %1320 = vmatprep.subr.bf16.mxu0 %v959
    %1321 = vmatpush1.bf16.msra.mxu0 %v958
    %1322 = vmatprep.subr.bf16.mxu0 %v963
    %1323 = vmatpush1.bf16.msra.mxu0 %v962
    %1324 = vmatprep.subr.bf16.mxu0 %v967
    %1325 = vmatpush1.bf16.msra.mxu0 %v966
    %1326 = vmatprep.subr.bf16.mxu0 %v971
    %1327 = vmatpush1.bf16.msra.mxu0 %v970
    %1328 = vmatprep.subr.bf16.mxu0 %v975
    %1329 = vmatpush1.bf16.msra.mxu0 %v974
    %1330 = vmatprep.subr.bf16.mxu0 %v979
    %1331 = vmatpush1.bf16.msra.mxu0 %v978
    %1332 = vmatprep.subr.bf16.mxu0 %v983
    %1333 = vmatpush1.bf16.msra.mxu0 %v982
    %1334 = vmatprep.mubr.bf16.mxu0 %v1260
    %1335 = vmatmul.mubr.bf16.gmra.mrb[0].mxu0 %v1259
    %v1336 = vpop.f32.mrb[0].mxu0
    %v1337 = vadd.f32 %v447, %v1336
    %v1338 = vpop.f32.mrb[0].mxu0
    %v1339 = vadd.f32 %v451, %v1338
    %v1340 = vpop.f32.mrb[0].mxu0
    %v1341 = vpop.f32.mrb[0].mxu0
    %1342 = vdwg.mxu0
    %v1343 = vmul.f32 %v1296, 0.5
    %v1344 = vmul.f32 %v1298, 0.5
    %v1345 = vmul.f32 %v1337, 0.5
    %v1346 = vtanh.pop %v1343
    %v1347 = vtanh.pop %v1344
    %v1348 = vtanh.pop %v1345
    %v1349 = vmul.f32 %v1346, 0.5
    %v1350 = vmul.f32 %v1347, 0.5
    %v1351 = vmul.f32 %v1348, 0.5
    %v1352 = vadd.f32 %v1349, 0.5
    %v1353 = vadd.f32 %v1350, 0.5
    %v1354 = vadd.f32 %v1351, 0.5
    %v1355 = vtanh.pop %v1339
    %v1356 = vmul.f32 %v1353, %v1145
    %v1357 = vmul.f32 %v1352, %v1355
    %v1358 = vadd.f32 %v1356, %v1357
    %v1359 = vtanh.pop %v1358
    %v1360 = vmul.f32 %v1354, %v1359
    %s1361 = smul.u32 2, 4
    %s1362 = smul.addr %s1361, 8
    %s1363 = scalar_lea.vmem [#allocation2], %s1362
    %v1364 = vld [vmem:[%s1363] sm:$0xff]
    %v1365 = vld [vmem:[%s1363 + $0x8] sm:$0xff]
    %v1366 = vld [vmem:[%s1363 + $0x10] sm:$0xff]
    %v1367 = vld [vmem:[%s1363 + $0x18] sm:$0xff]
    %1368 = vmatprep.subr.bf16.mxu0 %v560
    %1369 = vmatpush1.bf16.msra.mxu0 %v559
    %1370 = vmatprep.subr.bf16.mxu0 %v564
    %1371 = vmatpush1.bf16.msra.mxu0 %v563
    %1372 = vmatprep.subr.bf16.mxu0 %v568
    %1373 = vmatpush1.bf16.msra.mxu0 %v567
    %1374 = vmatprep.subr.bf16.mxu0 %v572
    %1375 = vmatpush1.bf16.msra.mxu0 %v571
    %1376 = vmatprep.subr.bf16.mxu0 %v576
    %1377 = vmatpush1.bf16.msra.mxu0 %v575
    %1378 = vmatprep.subr.bf16.mxu0 %v580
    %1379 = vmatpush1.bf16.msra.mxu0 %v579
    %1380 = vmatprep.subr.bf16.mxu0 %v584
    %1381 = vmatpush1.bf16.msra.mxu0 %v583
    %1382 = vmatprep.subr.bf16.mxu0 %v588
    %1383 = vmatpush1.bf16.msra.mxu0 %v587
    %1384 = vmatprep.subr.bf16.mxu0 0
    %1385 = vmatpush1.bf16.msra.mxu0 0
    %1386 = vmatprep.subr.bf16.mxu0 0
    %1387 = vmatpush1.bf16.msra.mxu0 0
    %1388 = vmatprep.subr.bf16.mxu0 0
    %1389 = vmatpush1.bf16.msra.mxu0 0
    %1390 = vmatprep.subr.bf16.mxu0 0
    %1391 = vmatpush1.bf16.msra.mxu0 0
    %1392 = vmatprep.subr.bf16.mxu0 0
    %1393 = vmatpush1.bf16.msra.mxu0 0
    %1394 = vmatprep.subr.bf16.mxu0 0
    %1395 = vmatpush1.bf16.msra.mxu0 0
    %1396 = vmatprep.subr.bf16.mxu0 0
    %1397 = vmatpush1.bf16.msra.mxu0 0
    %1398 = vmatprep.subr.bf16.mxu0 0
    %1399 = vmatpush1.bf16.msra.mxu0 0
    %1400 = vmatprep.mubr.bf16.mxu0 0
    %1401 = vmatmul.mubr.bf16.gmra.mrb[0].mxu0 %v1259
    %v1402 = vpop.f32.mrb[0].mxu0
    %v1403 = vadd.f32 0.0, %v1402
    %v1404 = vpop.f32.mrb[0].mxu0
    %v1405 = vadd.f32 0.0, %v1404
    %v1406 = vpop.f32.mrb[0].mxu0
    %v1407 = vpop.f32.mrb[0].mxu0
    %1408 = vdwg.mxu0
    %1409 = vmatprep.subr.bf16.mxu0 %v562
    %1410 = vmatpush1.bf16.msra.mxu0 %v561
    %1411 = vmatprep.subr.bf16.mxu0 %v566
    %1412 = vmatpush1.bf16.msra.mxu0 %v565
    %1413 = vmatprep.subr.bf16.mxu0 %v570
    %1414 = vmatpush1.bf16.msra.mxu0 %v569
    %1415 = vmatprep.subr.bf16.mxu0 %v574
    %1416 = vmatpush1.bf16.msra.mxu0 %v573
    %1417 = vmatprep.subr.bf16.mxu0 %v578
    %1418 = vmatpush1.bf16.msra.mxu0 %v577
    %1419 = vmatprep.subr.bf16.mxu0 %v582
    %1420 = vmatpush1.bf16.msra.mxu0 %v581
    %1421 = vmatprep.subr.bf16.mxu0 %v586
    %1422 = vmatpush1.bf16.msra.mxu0 %v585
    %1423 = vmatprep.subr.bf16.mxu0 %v590
    %1424 = vmatpush1.bf16.msra.mxu0 %v589
    %1425 = vmatprep.subr.bf16.mxu0 0
    %1426 = vmatpush1.bf16.msra.mxu0 0
    %1427 = vmatprep.subr.bf16.mxu0 0
    %1428 = vmatpush1.bf16.msra.mxu0 0
    %1429 = vmatprep.subr.bf16.mxu0 0
    %1430 = vmatpush1.bf16.msra.mxu0 0
    %1431 = vmatprep.subr.bf16.mxu0 0
    %1432 = vmatpush1.bf16.msra.mxu0 0
    %1433 = vmatprep.subr.bf16.mxu0 0
    %1434 = vmatpush1.bf16.msra.mxu0 0
    %1435 = vmatprep.subr.bf16.mxu0 0
    %1436 = vmatpush1.bf16.msra.mxu0 0
    %1437 = vmatprep.subr.bf16.mxu0 0
    %1438 = vmatpush1.bf16.msra.mxu0 0
    %1439 = vmatprep.subr.bf16.mxu0 0
    %1440 = vmatpush1.bf16.msra.mxu0 0
    %1441 = vmatprep.mubr.bf16.mxu0 0
    %1442 = vmatmul.mubr.bf16.gmra.mrb[0].mxu0 %v1259
    %v1443 = vpop.f32.mrb[0].mxu0
    %v1444 = vadd.f32 0.0, %v1443
    %v1445 = vpop.f32.mrb[0].mxu0
    %v1446 = vadd.f32 0.0, %v1445
    %v1447 = vpop.f32.mrb[0].mxu0
    %v1448 = vpop.f32.mrb[0].mxu0
    %1449 = vdwg.mxu0
    %v1450 = vadd.f32 %v1364, %v1403
    %v1451 = vadd.f32 %v1365, %v1405
    %v1452 = vadd.f32 %v1366, %v1444
    %v1453 = vadd.f32 %v1367, %v1446
    %v1454 = vmul.f32 %v1450, 0.5
    %v1455 = vmul.f32 %v1451, 0.5
    %v1456 = vmul.f32 %v1452, 0.5
    %v1457 = vtanh.pop %v1454
    %v1458 = vtanh.pop %v1455
    %v1459 = vtanh.pop %v1456
    %v1460 = vmul.f32 %v1457, 0.5
    %v1461 = vmul.f32 %v1458, 0.5
    %v1462 = vmul.f32 %v1459, 0.5
    %v1463 = vadd.f32 %v1460, 0.5
    %v1464 = vadd.f32 %v1461, 0.5
    %v1465 = vadd.f32 %v1462, 0.5
    %v1466 = vtanh.pop %v1453
    %v1467 = vmul.f32 %v1464, %v1256
    %v1468 = vmul.f32 %v1463, %v1466
    %v1469 = vadd.f32 %v1467, %v1468
    %v1470 = vtanh.pop %v1469
    %v1471 = vmul.f32 %v1465, %v1470
    %v1472 = vpack.c.bf16 %v1471, %v1471
    %v1473 = vpack.c.bf16 %v1360, %v1360
    %1474 = vmatprep.subr.bf16.mxu0 %v921
    %1475 = vmatpush1.bf16.msra.mxu0 %v920
    %1476 = vmatprep.subr.bf16.mxu0 %v925
    %1477 = vmatpush1.bf16.msra.mxu0 %v924
    %1478 = vmatprep.subr.bf16.mxu0 %v929
    %1479 = vmatpush1.bf16.msra.mxu0 %v928
    %1480 = vmatprep.subr.bf16.mxu0 %v933
    %1481 = vmatpush1.bf16.msra.mxu0 %v932
    %1482 = vmatprep.subr.bf16.mxu0 %v937
    %1483 = vmatpush1.bf16.msra.mxu0 %v936
    %1484 = vmatprep.subr.bf16.mxu0 %v941
    %1485 = vmatpush1.bf16.msra.mxu0 %v940
    %1486 = vmatprep.subr.bf16.mxu0 %v945
    %1487 = vmatpush1.bf16.msra.mxu0 %v944
    %1488 = vmatprep.subr.bf16.mxu0 %v949
    %1489 = vmatpush1.bf16.msra.mxu0 %v948
    %1490 = vmatprep.subr.bf16.mxu0 %v953
    %1491 = vmatpush1.bf16.msra.mxu0 %v952
    %1492 = vmatprep.subr.bf16.mxu0 %v957
    %1493 = vmatpush1.bf16.msra.mxu0 %v956
    %1494 = vmatprep.subr.bf16.mxu0 %v961
    %1495 = vmatpush1.bf16.msra.mxu0 %v960
    %1496 = vmatprep.subr.bf16.mxu0 %v965
    %1497 = vmatpush1.bf16.msra.mxu0 %v964
    %1498 = vmatprep.subr.bf16.mxu0 %v969
    %1499 = vmatpush1.bf16.msra.mxu0 %v968
    %1500 = vmatprep.subr.bf16.mxu0 %v973
    %1501 = vmatpush1.bf16.msra.mxu0 %v972
    %1502 = vmatprep.subr.bf16.mxu0 %v977
    %1503 = vmatpush1.bf16.msra.mxu0 %v976
    %1504 = vmatprep.subr.bf16.mxu0 %v981
    %1505 = vmatpush1.bf16.msra.mxu0 %v980
    %1506 = vmatprep.mubr.bf16.mxu0 %v1473
    %1507 = vmatmul.mubr.bf16.gmra.mrb[0].mxu0 %v1472
    %v1508 = vpop.f32.mrb[0].mxu0
    %v1509 = vadd.f32 %v439, %v1508
    %v1510 = vpop.f32.mrb[0].mxu0
    %v1511 = vadd.f32 %v443, %v1510
    %v1512 = vpop.f32.mrb[0].mxu0
    %v1513 = vpop.f32.mrb[0].mxu0
    %1514 = vdwg.mxu0
    %1515 = vmatprep.subr.bf16.mxu0 %v923
    %1516 = vmatpush1.bf16.msra.mxu0 %v922
    %1517 = vmatprep.subr.bf16.mxu0 %v927
    %1518 = vmatpush1.bf16.msra.mxu0 %v926
    %1519 = vmatprep.subr.bf16.mxu0 %v931
    %1520 = vmatpush1.bf16.msra.mxu0 %v930
    %1521 = vmatprep.subr.bf16.mxu0 %v935
    %1522 = vmatpush1.bf16.msra.mxu0 %v934
    %1523 = vmatprep.subr.bf16.mxu0 %v939
    %1524 = vmatpush1.bf16.msra.mxu0 %v938
    %1525 = vmatprep.subr.bf16.mxu0 %v943
    %1526 = vmatpush1.bf16.msra.mxu0 %v942
    %1527 = vmatprep.subr.bf16.mxu0 %v947
    %1528 = vmatpush1.bf16.msra.mxu0 %v946
    %1529 = vmatprep.subr.bf16.mxu0 %v951
    %1530 = vmatpush1.bf16.msra.mxu0 %v950
    %1531 = vmatprep.subr.bf16.mxu0 %v955
    %1532 = vmatpush1.bf16.msra.mxu0 %v954
    %1533 = vmatprep.subr.bf16.mxu0 %v959
    %1534 = vmatpush1.bf16.msra.mxu0 %v958
    %1535 = vmatprep.subr.bf16.mxu0 %v963
    %1536 = vmatpush1.bf16.msra.mxu0 %v962
    %1537 = vmatprep.subr.bf16.mxu0 %v967
    %1538 = vmatpush1.bf16.msra.mxu0 %v966
    %1539 = vmatprep.subr.bf16.mxu0 %v971
    %1540 = vmatpush1.bf16.msra.mxu0 %v970
    %1541 = vmatprep.subr.bf16.mxu0 %v975
    %1542 = vmatpush1.bf16.msra.mxu0 %v974
    %1543 = vmatprep.subr.bf16.mxu0 %v979
    %1544 = vmatpush1.bf16.msra.mxu0 %v978
    %1545 = vmatprep.subr.bf16.mxu0 %v983
    %1546 = vmatpush1.bf16.msra.mxu0 %v982
    %1547 = vmatprep.mubr.bf16.mxu0 %v1473
    %1548 = vmatmul.mubr.bf16.gmra.mrb[0].mxu0 %v1472
    %v1549 = vpop.f32.mrb[0].mxu0
    %v1550 = vadd.f32 %v447, %v1549
    %v1551 = vpop.f32.mrb[0].mxu0
    %v1552 = vadd.f32 %v451, %v1551
    %v1553 = vpop.f32.mrb[0].mxu0
    %v1554 = vpop.f32.mrb[0].mxu0
    %1555 = vdwg.mxu0
    %v1556 = vmul.f32 %v1509, 0.5
    %v1557 = vmul.f32 %v1511, 0.5
    %v1558 = vmul.f32 %v1550, 0.5
    %v1559 = vtanh.pop %v1556
    %v1560 = vtanh.pop %v1557
    %v1561 = vtanh.pop %v1558
    %v1562 = vmul.f32 %v1559, 0.5
    %v1563 = vmul.f32 %v1560, 0.5
    %v1564 = vmul.f32 %v1561, 0.5
    %v1565 = vadd.f32 %v1562, 0.5
    %v1566 = vadd.f32 %v1563, 0.5
    %v1567 = vadd.f32 %v1564, 0.5
    %v1568 = vtanh.pop %v1552
    %v1569 = vmul.f32 %v1566, %v1358
    %v1570 = vmul.f32 %v1565, %v1568
    %v1571 = vadd.f32 %v1569, %v1570
    %v1572 = vtanh.pop %v1571
    %v1573 = vmul.f32 %v1567, %v1572
    %s1574 = smul.u32 3, 4
    %s1575 = smul.addr %s1574, 8
    %s1576 = scalar_lea.vmem [#allocation2], %s1575
    %v1577 = vld [vmem:[%s1576] sm:$0xff]
    %v1578 = vld [vmem:[%s1576 + $0x8] sm:$0xff]
    %v1579 = vld [vmem:[%s1576 + $0x10] sm:$0xff]
    %v1580 = vld [vmem:[%s1576 + $0x18] sm:$0xff]
    %1581 = vmatprep.subr.bf16.mxu0 %v560
    %1582 = vmatpush1.bf16.msra.mxu0 %v559
    %1583 = vmatprep.subr.bf16.mxu0 %v564
    %1584 = vmatpush1.bf16.msra.mxu0 %v563
    %1585 = vmatprep.subr.bf16.mxu0 %v568
    %1586 = vmatpush1.bf16.msra.mxu0 %v567
    %1587 = vmatprep.subr.bf16.mxu0 %v572
    %1588 = vmatpush1.bf16.msra.mxu0 %v571
    %1589 = vmatprep.subr.bf16.mxu0 %v576
    %1590 = vmatpush1.bf16.msra.mxu0 %v575
    %1591 = vmatprep.subr.bf16.mxu0 %v580
    %1592 = vmatpush1.bf16.msra.mxu0 %v579
    %1593 = vmatprep.subr.bf16.mxu0 %v584
    %1594 = vmatpush1.bf16.msra.mxu0 %v583
    %1595 = vmatprep.subr.bf16.mxu0 %v588
    %1596 = vmatpush1.bf16.msra.mxu0 %v587
    %1597 = vmatprep.subr.bf16.mxu0 0
    %1598 = vmatpush1.bf16.msra.mxu0 0
    %1599 = vmatprep.subr.bf16.mxu0 0
    %1600 = vmatpush1.bf16.msra.mxu0 0
    %1601 = vmatprep.subr.bf16.mxu0 0
    %1602 = vmatpush1.bf16.msra.mxu0 0
    %1603 = vmatprep.subr.bf16.mxu0 0
    %1604 = vmatpush1.bf16.msra.mxu0 0
    %1605 = vmatprep.subr.bf16.mxu0 0
    %1606 = vmatpush1.bf16.msra.mxu0 0
    %1607 = vmatprep.subr.bf16.mxu0 0
    %1608 = vmatpush1.bf16.msra.mxu0 0
    %1609 = vmatprep.subr.bf16.mxu0 0
    %1610 = vmatpush1.bf16.msra.mxu0 0
    %1611 = vmatprep.subr.bf16.mxu0 0
    %1612 = vmatpush1.bf16.msra.mxu0 0
    %1613 = vmatprep.mubr.bf16.mxu0 0
    %1614 = vmatmul.mubr.bf16.gmra.mrb[0].mxu0 %v1472
    %v1615 = vpop.f32.mrb[0].mxu0
    %v1616 = vadd.f32 0.0, %v1615
    %v1617 = vpop.f32.mrb[0].mxu0
    %v1618 = vadd.f32 0.0, %v1617
    %v1619 = vpop.f32.mrb[0].mxu0
    %v1620 = vpop.f32.mrb[0].mxu0
    %1621 = vdwg.mxu0
    %1622 = vmatprep.subr.bf16.mxu0 %v562
    %1623 = vmatpush1.bf16.msra.mxu0 %v561
    %1624 = vmatprep.subr.bf16.mxu0 %v566
    %1625 = vmatpush1.bf16.msra.mxu0 %v565
    %1626 = vmatprep.subr.bf16.mxu0 %v570
    %1627 = vmatpush1.bf16.msra.mxu0 %v569
    %1628 = vmatprep.subr.bf16.mxu0 %v574
    %1629 = vmatpush1.bf16.msra.mxu0 %v573
    %1630 = vmatprep.subr.bf16.mxu0 %v578
    %1631 = vmatpush1.bf16.msra.mxu0 %v577
    %1632 = vmatprep.subr.bf16.mxu0 %v582
    %1633 = vmatpush1.bf16.msra.mxu0 %v581
    %1634 = vmatprep.subr.bf16.mxu0 %v586
    %1635 = vmatpush1.bf16.msra.mxu0 %v585
    %1636 = vmatprep.subr.bf16.mxu0 %v590
    %1637 = vmatpush1.bf16.msra.mxu0 %v589
    %1638 = vmatprep.subr.bf16.mxu0 0
    %1639 = vmatpush1.bf16.msra.mxu0 0
    %1640 = vmatprep.subr.bf16.mxu0 0
    %1641 = vmatpush1.bf16.msra.mxu0 0
    %1642 = vmatprep.subr.bf16.mxu0 0
    %1643 = vmatpush1.bf16.msra.mxu0 0
    %1644 = vmatprep.subr.bf16.mxu0 0
    %1645 = vmatpush1.bf16.msra.mxu0 0
    %1646 = vmatprep.subr.bf16.mxu0 0
    %1647 = vmatpush1.bf16.msra.mxu0 0
    %1648 = vmatprep.subr.bf16.mxu0 0
    %1649 = vmatpush1.bf16.msra.mxu0 0
    %1650 = vmatprep.subr.bf16.mxu0 0
    %1651 = vmatpush1.bf16.msra.mxu0 0
    %1652 = vmatprep.subr.bf16.mxu0 0
    %1653 = vmatpush1.bf16.msra.mxu0 0
    %1654 = vmatprep.mubr.bf16.mxu0 0
    %1655 = vmatmul.mubr.bf16.gmra.mrb[0].mxu0 %v1472
    %v1656 = vpop.f32.mrb[0].mxu0
    %v1657 = vadd.f32 0.0, %v1656
    %v1658 = vpop.f32.mrb[0].mxu0
    %v1659 = vadd.f32 0.0, %v1658
    %v1660 = vpop.f32.mrb[0].mxu0
    %v1661 = vpop.f32.mrb[0].mxu0
    %1662 = vdwg.mxu0
    %v1663 = vadd.f32 %v1577, %v1616
    %v1664 = vadd.f32 %v1578, %v1618
    %v1665 = vadd.f32 %v1579, %v1657
    %v1666 = vadd.f32 %v1580, %v1659
    %v1667 = vmul.f32 %v1663, 0.5
    %v1668 = vmul.f32 %v1664, 0.5
    %v1669 = vmul.f32 %v1665, 0.5
    %v1670 = vtanh.pop %v1667
    %v1671 = vtanh.pop %v1668
    %v1672 = vtanh.pop %v1669
    %v1673 = vmul.f32 %v1670, 0.5
    %v1674 = vmul.f32 %v1671, 0.5
    %v1675 = vmul.f32 %v1672, 0.5
    %v1676 = vadd.f32 %v1673, 0.5
    %v1677 = vadd.f32 %v1674, 0.5
    %v1678 = vadd.f32 %v1675, 0.5
    %v1679 = vtanh.pop %v1666
    %v1680 = vmul.f32 %v1677, %v1469
    %v1681 = vmul.f32 %v1676, %v1679
    %v1682 = vadd.f32 %v1680, %v1681
    %v1683 = vtanh.pop %v1682
    %v1684 = vmul.f32 %v1678, %v1683
    %v1685 = vpack.c.bf16 %v1684, %v1684
    %v1686 = vpack.c.bf16 %v1573, %v1573
    %1687 = vmatprep.subr.bf16.mxu0 %v921
    %1688 = vmatpush1.bf16.msra.mxu0 %v920
    %1689 = vmatprep.subr.bf16.mxu0 %v925
    %1690 = vmatpush1.bf16.msra.mxu0 %v924
    %1691 = vmatprep.subr.bf16.mxu0 %v929
    %1692 = vmatpush1.bf16.msra.mxu0 %v928
    %1693 = vmatprep.subr.bf16.mxu0 %v933
    %1694 = vmatpush1.bf16.msra.mxu0 %v932
    %1695 = vmatprep.subr.bf16.mxu0 %v937
    %1696 = vmatpush1.bf16.msra.mxu0 %v936
    %1697 = vmatprep.subr.bf16.mxu0 %v941
    %1698 = vmatpush1.bf16.msra.mxu0 %v940
    %1699 = vmatprep.subr.bf16.mxu0 %v945
    %1700 = vmatpush1.bf16.msra.mxu0 %v944
    %1701 = vmatprep.subr.bf16.mxu0 %v949
    %1702 = vmatpush1.bf16.msra.mxu0 %v948
    %1703 = vmatprep.subr.bf16.mxu0 %v953
    %1704 = vmatpush1.bf16.msra.mxu0 %v952
    %1705 = vmatprep.subr.bf16.mxu0 %v957
    %1706 = vmatpush1.bf16.msra.mxu0 %v956
    %1707 = vmatprep.subr.bf16.mxu0 %v961
    %1708 = vmatpush1.bf16.msra.mxu0 %v960
    %1709 = vmatprep.subr.bf16.mxu0 %v965
    %1710 = vmatpush1.bf16.msra.mxu0 %v964
    %1711 = vmatprep.subr.bf16.mxu0 %v969
    %1712 = vmatpush1.bf16.msra.mxu0 %v968
    %1713 = vmatprep.subr.bf16.mxu0 %v973
    %1714 = vmatpush1.bf16.msra.mxu0 %v972
    %1715 = vmatprep.subr.bf16.mxu0 %v977
    %1716 = vmatpush1.bf16.msra.mxu0 %v976
    %1717 = vmatprep.subr.bf16.mxu0 %v981
    %1718 = vmatpush1.bf16.msra.mxu0 %v980
    %1719 = vmatprep.mubr.bf16.mxu0 %v1686
    %1720 = vmatmul.mubr.bf16.gmra.mrb[0].mxu0 %v1685
    %v1721 = vpop.f32.mrb[0].mxu0
    %v1722 = vadd.f32 %v439, %v1721
    %v1723 = vpop.f32.mrb[0].mxu0
    %v1724 = vadd.f32 %v443, %v1723
    %v1725 = vpop.f32.mrb[0].mxu0
    %v1726 = vpop.f32.mrb[0].mxu0
    %1727 = vdwg.mxu0
    %1728 = vmatprep.subr.bf16.mxu0 %v923
    %1729 = vmatpush1.bf16.msra.mxu0 %v922
    %1730 = vmatprep.subr.bf16.mxu0 %v927
    %1731 = vmatpush1.bf16.msra.mxu0 %v926
    %1732 = vmatprep.subr.bf16.mxu0 %v931
    %1733 = vmatpush1.bf16.msra.mxu0 %v930
    %1734 = vmatprep.subr.bf16.mxu0 %v935
    %1735 = vmatpush1.bf16.msra.mxu0 %v934
    %1736 = vmatprep.subr.bf16.mxu0 %v939
    %1737 = vmatpush1.bf16.msra.mxu0 %v938
    %1738 = vmatprep.subr.bf16.mxu0 %v943
    %1739 = vmatpush1.bf16.msra.mxu0 %v942
    %1740 = vmatprep.subr.bf16.mxu0 %v947
    %1741 = vmatpush1.bf16.msra.mxu0 %v946
    %1742 = vmatprep.subr.bf16.mxu0 %v951
    %1743 = vmatpush1.bf16.msra.mxu0 %v950
    %1744 = vmatprep.subr.bf16.mxu0 %v955
    %1745 = vmatpush1.bf16.msra.mxu0 %v954
    %1746 = vmatprep.subr.bf16.mxu0 %v959
    %1747 = vmatpush1.bf16.msra.mxu0 %v958
    %1748 = vmatprep.subr.bf16.mxu0 %v963
    %1749 = vmatpush1.bf16.msra.mxu0 %v962
    %1750 = vmatprep.subr.bf16.mxu0 %v967
    %1751 = vmatpush1.bf16.msra.mxu0 %v966
    %1752 = vmatprep.subr.bf16.mxu0 %v971
    %1753 = vmatpush1.bf16.msra.mxu0 %v970
    %1754 = vmatprep.subr.bf16.mxu0 %v975
    %1755 = vmatpush1.bf16.msra.mxu0 %v974
    %1756 = vmatprep.subr.bf16.mxu0 %v979
    %1757 = vmatpush1.bf16.msra.mxu0 %v978
    %1758 = vmatprep.subr.bf16.mxu0 %v983
    %1759 = vmatpush1.bf16.msra.mxu0 %v982
    %1760 = vmatprep.mubr.bf16.mxu0 %v1686
    %1761 = vmatmul.mubr.bf16.gmra.mrb[0].mxu0 %v1685
    %v1762 = vpop.f32.mrb[0].mxu0
    %v1763 = vadd.f32 %v447, %v1762
    %v1764 = vpop.f32.mrb[0].mxu0
    %v1765 = vadd.f32 %v451, %v1764
    %v1766 = vpop.f32.mrb[0].mxu0
    %v1767 = vpop.f32.mrb[0].mxu0
    %1768 = vdwg.mxu0
    %v1769 = vmul.f32 %v1722, 0.5
    %v1770 = vmul.f32 %v1724, 0.5
    %v1771 = vmul.f32 %v1763, 0.5
    %v1772 = vtanh.pop %v1769
    %v1773 = vtanh.pop %v1770
    %v1774 = vtanh.pop %v1771
    %v1775 = vmul.f32 %v1772, 0.5
    %v1776 = vmul.f32 %v1773, 0.5
    %v1777 = vmul.f32 %v1774, 0.5
    %v1778 = vadd.f32 %v1775, 0.5
    %v1779 = vadd.f32 %v1776, 0.5
    %v1780 = vadd.f32 %v1777, 0.5
    %v1781 = vtanh.pop %v1765
    %v1782 = vmul.f32 %v1779, %v1571
    %v1783 = vmul.f32 %v1778, %v1781
    %v1784 = vadd.f32 %v1782, %v1783
    %v1785 = vtanh.pop %v1784
    %v1786 = vmul.f32 %v1780, %v1785
    %s1787 = smul.u32 4, 4
    %s1788 = smul.addr %s1787, 8
    %s1789 = scalar_lea.vmem [#allocation2], %s1788
    %v1790 = vld [vmem:[%s1789] sm:$0xff]
    %v1791 = vld [vmem:[%s1789 + $0x8] sm:$0xff]
    %v1792 = vld [vmem:[%s1789 + $0x10] sm:$0xff]
    %v1793 = vld [vmem:[%s1789 + $0x18] sm:$0xff]
    %1794 = vmatprep.subr.bf16.mxu0 %v560
    %1795 = vmatpush1.bf16.msra.mxu0 %v559
    %1796 = vmatprep.subr.bf16.mxu0 %v564
    %1797 = vmatpush1.bf16.msra.mxu0 %v563
    %1798 = vmatprep.subr.bf16.mxu0 %v568
    %1799 = vmatpush1.bf16.msra.mxu0 %v567
    %1800 = vmatprep.subr.bf16.mxu0 %v572
    %1801 = vmatpush1.bf16.msra.mxu0 %v571
    %1802 = vmatprep.subr.bf16.mxu0 %v576
    %1803 = vmatpush1.bf16.msra.mxu0 %v575
    %1804 = vmatprep.subr.bf16.mxu0 %v580
    %1805 = vmatpush1.bf16.msra.mxu0 %v579
    %1806 = vmatprep.subr.bf16.mxu0 %v584
    %1807 = vmatpush1.bf16.msra.mxu0 %v583
    %1808 = vmatprep.subr.bf16.mxu0 %v588
    %1809 = vmatpush1.bf16.msra.mxu0 %v587
    %1810 = vmatprep.subr.bf16.mxu0 0
    %1811 = vmatpush1.bf16.msra.mxu0 0
    %1812 = vmatprep.subr.bf16.mxu0 0
    %1813 = vmatpush1.bf16.msra.mxu0 0
    %1814 = vmatprep.subr.bf16.mxu0 0
    %1815 = vmatpush1.bf16.msra.mxu0 0
    %1816 = vmatprep.subr.bf16.mxu0 0
    %1817 = vmatpush1.bf16.msra.mxu0 0
    %1818 = vmatprep.subr.bf16.mxu0 0
    %1819 = vmatpush1.bf16.msra.mxu0 0
    %1820 = vmatprep.subr.bf16.mxu0 0
    %1821 = vmatpush1.bf16.msra.mxu0 0
    %1822 = vmatprep.subr.bf16.mxu0 0
    %1823 = vmatpush1.bf16.msra.mxu0 0
    %1824 = vmatprep.subr.bf16.mxu0 0
    %1825 = vmatpush1.bf16.msra.mxu0 0
    %1826 = vmatprep.mubr.bf16.mxu0 0
    %1827 = vmatmul.mubr.bf16.gmra.mrb[0].mxu0 %v1685
    %v1828 = vpop.f32.mrb[0].mxu0
    %v1829 = vadd.f32 0.0, %v1828
    %v1830 = vpop.f32.mrb[0].mxu0
    %v1831 = vadd.f32 0.0, %v1830
    %v1832 = vpop.f32.mrb[0].mxu0
    %v1833 = vpop.f32.mrb[0].mxu0
    %1834 = vdwg.mxu0
    %1835 = vmatprep.subr.bf16.mxu0 %v562
    %1836 = vmatpush1.bf16.msra.mxu0 %v561
    %1837 = vmatprep.subr.bf16.mxu0 %v566
    %1838 = vmatpush1.bf16.msra.mxu0 %v565
    %1839 = vmatprep.subr.bf16.mxu0 %v570
    %1840 = vmatpush1.bf16.msra.mxu0 %v569
    %1841 = vmatprep.subr.bf16.mxu0 %v574
    %1842 = vmatpush1.bf16.msra.mxu0 %v573
    %1843 = vmatprep.subr.bf16.mxu0 %v578
    %1844 = vmatpush1.bf16.msra.mxu0 %v577
    %1845 = vmatprep.subr.bf16.mxu0 %v582
    %1846 = vmatpush1.bf16.msra.mxu0 %v581
    %1847 = vmatprep.subr.bf16.mxu0 %v586
    %1848 = vmatpush1.bf16.msra.mxu0 %v585
    %1849 = vmatprep.subr.bf16.mxu0 %v590
    %1850 = vmatpush1.bf16.msra.mxu0 %v589
    %1851 = vmatprep.subr.bf16.mxu0 0
    %1852 = vmatpush1.bf16.msra.mxu0 0
    %1853 = vmatprep.subr.bf16.mxu0 0
    %1854 = vmatpush1.bf16.msra.mxu0 0
    %1855 = vmatprep.subr.bf16.mxu0 0
    %1856 = vmatpush1.bf16.msra.mxu0 0
    %1857 = vmatprep.subr.bf16.mxu0 0
    %1858 = vmatpush1.bf16.msra.mxu0 0
    %1859 = vmatprep.subr.bf16.mxu0 0
    %1860 = vmatpush1.bf16.msra.mxu0 0
    %1861 = vmatprep.subr.bf16.mxu0 0
    %1862 = vmatpush1.bf16.msra.mxu0 0
    %1863 = vmatprep.subr.bf16.mxu0 0
    %1864 = vmatpush1.bf16.msra.mxu0 0
    %1865 = vmatprep.subr.bf16.mxu0 0
    %1866 = vmatpush1.bf16.msra.mxu0 0
    %1867 = vmatprep.mubr.bf16.mxu0 0
    %1868 = vmatmul.mubr.bf16.gmra.mrb[0].mxu0 %v1685
    %v1869 = vpop.f32.mrb[0].mxu0
    %v1870 = vadd.f32 0.0, %v1869
    %v1871 = vpop.f32.mrb[0].mxu0
    %v1872 = vadd.f32 0.0, %v1871
    %v1873 = vpop.f32.mrb[0].mxu0
    %v1874 = vpop.f32.mrb[0].mxu0
    %1875 = vdwg.mxu0
    %v1876 = vadd.f32 %v1790, %v1829
    %v1877 = vadd.f32 %v1791, %v1831
    %v1878 = vadd.f32 %v1792, %v1870
    %v1879 = vadd.f32 %v1793, %v1872
    %v1880 = vmul.f32 %v1876, 0.5
    %v1881 = vmul.f32 %v1877, 0.5
    %v1882 = vmul.f32 %v1878, 0.5
    %v1883 = vtanh.pop %v1880
    %v1884 = vtanh.pop %v1881
    %v1885 = vtanh.pop %v1882
    %v1886 = vmul.f32 %v1883, 0.5
    %v1887 = vmul.f32 %v1884, 0.5
    %v1888 = vmul.f32 %v1885, 0.5
    %v1889 = vadd.f32 %v1886, 0.5
    %v1890 = vadd.f32 %v1887, 0.5
    %v1891 = vadd.f32 %v1888, 0.5
    %v1892 = vtanh.pop %v1879
    %v1893 = vmul.f32 %v1890, %v1682
    %v1894 = vmul.f32 %v1889, %v1892
    %v1895 = vadd.f32 %v1893, %v1894
    %v1896 = vtanh.pop %v1895
    %v1897 = vmul.f32 %v1891, %v1896
    %v1898 = vpack.c.bf16 %v1897, %v1897
    %v1899 = vpack.c.bf16 %v1786, %v1786
    %1900 = vmatprep.subr.bf16.mxu0 %v921
    %1901 = vmatpush1.bf16.msra.mxu0 %v920
    %1902 = vmatprep.subr.bf16.mxu0 %v925
    %1903 = vmatpush1.bf16.msra.mxu0 %v924
    %1904 = vmatprep.subr.bf16.mxu0 %v929
    %1905 = vmatpush1.bf16.msra.mxu0 %v928
    %1906 = vmatprep.subr.bf16.mxu0 %v933
    %1907 = vmatpush1.bf16.msra.mxu0 %v932
    %1908 = vmatprep.subr.bf16.mxu0 %v937
    %1909 = vmatpush1.bf16.msra.mxu0 %v936
    %1910 = vmatprep.subr.bf16.mxu0 %v941
    %1911 = vmatpush1.bf16.msra.mxu0 %v940
    %1912 = vmatprep.subr.bf16.mxu0 %v945
    %1913 = vmatpush1.bf16.msra.mxu0 %v944
    %1914 = vmatprep.subr.bf16.mxu0 %v949
    %1915 = vmatpush1.bf16.msra.mxu0 %v948
    %1916 = vmatprep.subr.bf16.mxu0 %v953
    %1917 = vmatpush1.bf16.msra.mxu0 %v952
    %1918 = vmatprep.subr.bf16.mxu0 %v957
    %1919 = vmatpush1.bf16.msra.mxu0 %v956
    %1920 = vmatprep.subr.bf16.mxu0 %v961
    %1921 = vmatpush1.bf16.msra.mxu0 %v960
    %1922 = vmatprep.subr.bf16.mxu0 %v965
    %1923 = vmatpush1.bf16.msra.mxu0 %v964
    %1924 = vmatprep.subr.bf16.mxu0 %v969
    %1925 = vmatpush1.bf16.msra.mxu0 %v968
    %1926 = vmatprep.subr.bf16.mxu0 %v973
    %1927 = vmatpush1.bf16.msra.mxu0 %v972
    %1928 = vmatprep.subr.bf16.mxu0 %v977
    %1929 = vmatpush1.bf16.msra.mxu0 %v976
    %1930 = vmatprep.subr.bf16.mxu0 %v981
    %1931 = vmatpush1.bf16.msra.mxu0 %v980
    %1932 = vmatprep.mubr.bf16.mxu0 %v1899
    %1933 = vmatmul.mubr.bf16.gmra.mrb[0].mxu0 %v1898
    %v1934 = vpop.f32.mrb[0].mxu0
    %v1935 = vadd.f32 %v439, %v1934
    %v1936 = vpop.f32.mrb[0].mxu0
    %v1937 = vadd.f32 %v443, %v1936
    %v1938 = vpop.f32.mrb[0].mxu0
    %v1939 = vpop.f32.mrb[0].mxu0
    %1940 = vdwg.mxu0
    %1941 = vmatprep.subr.bf16.mxu0 %v923
    %1942 = vmatpush1.bf16.msra.mxu0 %v922
    %1943 = vmatprep.subr.bf16.mxu0 %v927
    %1944 = vmatpush1.bf16.msra.mxu0 %v926
    %1945 = vmatprep.subr.bf16.mxu0 %v931
    %1946 = vmatpush1.bf16.msra.mxu0 %v930
    %1947 = vmatprep.subr.bf16.mxu0 %v935
    %1948 = vmatpush1.bf16.msra.mxu0 %v934
    %1949 = vmatprep.subr.bf16.mxu0 %v939
    %1950 = vmatpush1.bf16.msra.mxu0 %v938
    %1951 = vmatprep.subr.bf16.mxu0 %v943
    %1952 = vmatpush1.bf16.msra.mxu0 %v942
    %1953 = vmatprep.subr.bf16.mxu0 %v947
    %1954 = vmatpush1.bf16.msra.mxu0 %v946
    %1955 = vmatprep.subr.bf16.mxu0 %v951
    %1956 = vmatpush1.bf16.msra.mxu0 %v950
    %1957 = vmatprep.subr.bf16.mxu0 %v955
    %1958 = vmatpush1.bf16.msra.mxu0 %v954
    %1959 = vmatprep.subr.bf16.mxu0 %v959
    %1960 = vmatpush1.bf16.msra.mxu0 %v958
    %1961 = vmatprep.subr.bf16.mxu0 %v963
    %1962 = vmatpush1.bf16.msra.mxu0 %v962
    %1963 = vmatprep.subr.bf16.mxu0 %v967
    %1964 = vmatpush1.bf16.msra.mxu0 %v966
    %1965 = vmatprep.subr.bf16.mxu0 %v971
    %1966 = vmatpush1.bf16.msra.mxu0 %v970
    %1967 = vmatprep.subr.bf16.mxu0 %v975
    %1968 = vmatpush1.bf16.msra.mxu0 %v974
    %1969 = vmatprep.subr.bf16.mxu0 %v979
    %1970 = vmatpush1.bf16.msra.mxu0 %v978
    %1971 = vmatprep.subr.bf16.mxu0 %v983
    %1972 = vmatpush1.bf16.msra.mxu0 %v982
    %1973 = vmatprep.mubr.bf16.mxu0 %v1899
    %1974 = vmatmul.mubr.bf16.gmra.mrb[0].mxu0 %v1898
    %v1975 = vpop.f32.mrb[0].mxu0
    %v1976 = vadd.f32 %v447, %v1975
    %v1977 = vpop.f32.mrb[0].mxu0
    %v1978 = vadd.f32 %v451, %v1977
    %v1979 = vpop.f32.mrb[0].mxu0
    %v1980 = vpop.f32.mrb[0].mxu0
    %1981 = vdwg.mxu0
    %v1982 = vmul.f32 %v1935, 0.5
    %v1983 = vmul.f32 %v1937, 0.5
    %v1984 = vmul.f32 %v1976, 0.5
    %v1985 = vtanh.pop %v1982
    %v1986 = vtanh.pop %v1983
    %v1987 = vtanh.pop %v1984
    %v1988 = vmul.f32 %v1985, 0.5
    %v1989 = vmul.f32 %v1986, 0.5
    %v1990 = vmul.f32 %v1987, 0.5
    %v1991 = vadd.f32 %v1988, 0.5
    %v1992 = vadd.f32 %v1989, 0.5
    %v1993 = vadd.f32 %v1990, 0.5
    %v1994 = vtanh.pop %v1978
    %v1995 = vmul.f32 %v1992, %v1784
    %v1996 = vmul.f32 %v1991, %v1994
    %v1997 = vadd.f32 %v1995, %v1996
    %v1998 = vtanh.pop %v1997
    %v1999 = vmul.f32 %v1993, %v1998
    %s2000 = smul.u32 5, 4
    %s2001 = smul.addr %s2000, 8
    %s2002 = scalar_lea.vmem [#allocation2], %s2001
    %v2003 = vld [vmem:[%s2002] sm:$0xff]
    %v2004 = vld [vmem:[%s2002 + $0x8] sm:$0xff]
    %v2005 = vld [vmem:[%s2002 + $0x10] sm:$0xff]
    %v2006 = vld [vmem:[%s2002 + $0x18] sm:$0xff]
    %2007 = vmatprep.subr.bf16.mxu0 %v560
    %2008 = vmatpush1.bf16.msra.mxu0 %v559
    %2009 = vmatprep.subr.bf16.mxu0 %v564
    %2010 = vmatpush1.bf16.msra.mxu0 %v563
    %2011 = vmatprep.subr.bf16.mxu0 %v568
    %2012 = vmatpush1.bf16.msra.mxu0 %v567
    %2013 = vmatprep.subr.bf16.mxu0 %v572
    %2014 = vmatpush1.bf16.msra.mxu0 %v571
    %2015 = vmatprep.subr.bf16.mxu0 %v576
    %2016 = vmatpush1.bf16.msra.mxu0 %v575
    %2017 = vmatprep.subr.bf16.mxu0 %v580
    %2018 = vmatpush1.bf16.msra.mxu0 %v579
    %2019 = vmatprep.subr.bf16.mxu0 %v584
    %2020 = vmatpush1.bf16.msra.mxu0 %v583
    %2021 = vmatprep.subr.bf16.mxu0 %v588
    %2022 = vmatpush1.bf16.msra.mxu0 %v587
    %2023 = vmatprep.subr.bf16.mxu0 0
    %2024 = vmatpush1.bf16.msra.mxu0 0
    %2025 = vmatprep.subr.bf16.mxu0 0
    %2026 = vmatpush1.bf16.msra.mxu0 0
    %2027 = vmatprep.subr.bf16.mxu0 0
    %2028 = vmatpush1.bf16.msra.mxu0 0
    %2029 = vmatprep.subr.bf16.mxu0 0
    %2030 = vmatpush1.bf16.msra.mxu0 0
    %2031 = vmatprep.subr.bf16.mxu0 0
    %2032 = vmatpush1.bf16.msra.mxu0 0
    %2033 = vmatprep.subr.bf16.mxu0 0
    %2034 = vmatpush1.bf16.msra.mxu0 0
    %2035 = vmatprep.subr.bf16.mxu0 0
    %2036 = vmatpush1.bf16.msra.mxu0 0
    %2037 = vmatprep.subr.bf16.mxu0 0
    %2038 = vmatpush1.bf16.msra.mxu0 0
    %2039 = vmatprep.mubr.bf16.mxu0 0
    %2040 = vmatmul.mubr.bf16.gmra.mrb[0].mxu0 %v1898
    %v2041 = vpop.f32.mrb[0].mxu0
    %v2042 = vadd.f32 0.0, %v2041
    %v2043 = vpop.f32.mrb[0].mxu0
    %v2044 = vadd.f32 0.0, %v2043
    %v2045 = vpop.f32.mrb[0].mxu0
    %v2046 = vpop.f32.mrb[0].mxu0
    %2047 = vdwg.mxu0
    %2048 = vmatprep.subr.bf16.mxu0 %v562
    %2049 = vmatpush1.bf16.msra.mxu0 %v561
    %2050 = vmatprep.subr.bf16.mxu0 %v566
    %2051 = vmatpush1.bf16.msra.mxu0 %v565
    %2052 = vmatprep.subr.bf16.mxu0 %v570
    %2053 = vmatpush1.bf16.msra.mxu0 %v569
    %2054 = vmatprep.subr.bf16.mxu0 %v574
    %2055 = vmatpush1.bf16.msra.mxu0 %v573
    %2056 = vmatprep.subr.bf16.mxu0 %v578
    %2057 = vmatpush1.bf16.msra.mxu0 %v577
    %2058 = vmatprep.subr.bf16.mxu0 %v582
    %2059 = vmatpush1.bf16.msra.mxu0 %v581
    %2060 = vmatprep.subr.bf16.mxu0 %v586
    %2061 = vmatpush1.bf16.msra.mxu0 %v585
    %2062 = vmatprep.subr.bf16.mxu0 %v590
    %2063 = vmatpush1.bf16.msra.mxu0 %v589
    %2064 = vmatprep.subr.bf16.mxu0 0
    %2065 = vmatpush1.bf16.msra.mxu0 0
    %2066 = vmatprep.subr.bf16.mxu0 0
    %2067 = vmatpush1.bf16.msra.mxu0 0
    %2068 = vmatprep.subr.bf16.mxu0 0
    %2069 = vmatpush1.bf16.msra.mxu0 0
    %2070 = vmatprep.subr.bf16.mxu0 0
    %2071 = vmatpush1.bf16.msra.mxu0 0
    %2072 = vmatprep.subr.bf16.mxu0 0
    %2073 = vmatpush1.bf16.msra.mxu0 0
    %2074 = vmatprep.subr.bf16.mxu0 0
    %2075 = vmatpush1.bf16.msra.mxu0 0
    %2076 = vmatprep.subr.bf16.mxu0 0
    %2077 = vmatpush1.bf16.msra.mxu0 0
    %2078 = vmatprep.subr.bf16.mxu0 0
    %2079 = vmatpush1.bf16.msra.mxu0 0
    %2080 = vmatprep.mubr.bf16.mxu0 0
    %2081 = vmatmul.mubr.bf16.gmra.mrb[0].mxu0 %v1898
    %v2082 = vpop.f32.mrb[0].mxu0
    %v2083 = vadd.f32 0.0, %v2082
    %v2084 = vpop.f32.mrb[0].mxu0
    %v2085 = vadd.f32 0.0, %v2084
    %v2086 = vpop.f32.mrb[0].mxu0
    %v2087 = vpop.f32.mrb[0].mxu0
    %2088 = vdwg.mxu0
    %v2089 = vadd.f32 %v2003, %v2042
    %v2090 = vadd.f32 %v2004, %v2044
    %v2091 = vadd.f32 %v2005, %v2083
    %v2092 = vadd.f32 %v2006, %v2085
    %v2093 = vmul.f32 %v2089, 0.5
    %v2094 = vmul.f32 %v2090, 0.5
    %v2095 = vmul.f32 %v2091, 0.5
    %v2096 = vtanh.pop %v2093
    %v2097 = vtanh.pop %v2094
    %v2098 = vtanh.pop %v2095
    %v2099 = vmul.f32 %v2096, 0.5
    %v2100 = vmul.f32 %v2097, 0.5
    %v2101 = vmul.f32 %v2098, 0.5
    %v2102 = vadd.f32 %v2099, 0.5
    %v2103 = vadd.f32 %v2100, 0.5
    %v2104 = vadd.f32 %v2101, 0.5
    %v2105 = vtanh.pop %v2092
    %v2106 = vmul.f32 %v2103, %v1895
    %v2107 = vmul.f32 %v2102, %v2105
    %v2108 = vadd.f32 %v2106, %v2107
    %v2109 = vtanh.pop %v2108
    %v2110 = vmul.f32 %v2104, %v2109
    %v2111 = vpack.c.bf16 %v2110, %v2110
    %v2112 = vpack.c.bf16 %v1999, %v1999
    %2113 = vmatprep.subr.bf16.mxu0 %v921
    %2114 = vmatpush1.bf16.msra.mxu0 %v920
    %2115 = vmatprep.subr.bf16.mxu0 %v925
    %2116 = vmatpush1.bf16.msra.mxu0 %v924
    %2117 = vmatprep.subr.bf16.mxu0 %v929
    %2118 = vmatpush1.bf16.msra.mxu0 %v928
    %2119 = vmatprep.subr.bf16.mxu0 %v933
    %2120 = vmatpush1.bf16.msra.mxu0 %v932
    %2121 = vmatprep.subr.bf16.mxu0 %v937
    %2122 = vmatpush1.bf16.msra.mxu0 %v936
    %2123 = vmatprep.subr.bf16.mxu0 %v941
    %2124 = vmatpush1.bf16.msra.mxu0 %v940
    %2125 = vmatprep.subr.bf16.mxu0 %v945
    %2126 = vmatpush1.bf16.msra.mxu0 %v944
    %2127 = vmatprep.subr.bf16.mxu0 %v949
    %2128 = vmatpush1.bf16.msra.mxu0 %v948
    %2129 = vmatprep.subr.bf16.mxu0 %v953
    %2130 = vmatpush1.bf16.msra.mxu0 %v952
    %2131 = vmatprep.subr.bf16.mxu0 %v957
    %2132 = vmatpush1.bf16.msra.mxu0 %v956
    %2133 = vmatprep.subr.bf16.mxu0 %v961
    %2134 = vmatpush1.bf16.msra.mxu0 %v960
    %2135 = vmatprep.subr.bf16.mxu0 %v965
    %2136 = vmatpush1.bf16.msra.mxu0 %v964
    %2137 = vmatprep.subr.bf16.mxu0 %v969
    %2138 = vmatpush1.bf16.msra.mxu0 %v968
    %2139 = vmatprep.subr.bf16.mxu0 %v973
    %2140 = vmatpush1.bf16.msra.mxu0 %v972
    %2141 = vmatprep.subr.bf16.mxu0 %v977
    %2142 = vmatpush1.bf16.msra.mxu0 %v976
    %2143 = vmatprep.subr.bf16.mxu0 %v981
    %2144 = vmatpush1.bf16.msra.mxu0 %v980
    %2145 = vmatprep.mubr.bf16.mxu0 %v2112
    %2146 = vmatmul.mubr.bf16.gmra.mrb[0].mxu0 %v2111
    %v2147 = vpop.f32.mrb[0].mxu0
    %v2148 = vadd.f32 %v439, %v2147
    %v2149 = vpop.f32.mrb[0].mxu0
    %v2150 = vadd.f32 %v443, %v2149
    %v2151 = vpop.f32.mrb[0].mxu0
    %v2152 = vpop.f32.mrb[0].mxu0
    %2153 = vdwg.mxu0
    %2154 = vmatprep.subr.bf16.mxu0 %v923
    %2155 = vmatpush1.bf16.msra.mxu0 %v922
    %2156 = vmatprep.subr.bf16.mxu0 %v927
    %2157 = vmatpush1.bf16.msra.mxu0 %v926
    %2158 = vmatprep.subr.bf16.mxu0 %v931
    %2159 = vmatpush1.bf16.msra.mxu0 %v930
    %2160 = vmatprep.subr.bf16.mxu0 %v935
    %2161 = vmatpush1.bf16.msra.mxu0 %v934
    %2162 = vmatprep.subr.bf16.mxu0 %v939
    %2163 = vmatpush1.bf16.msra.mxu0 %v938
    %2164 = vmatprep.subr.bf16.mxu0 %v943
    %2165 = vmatpush1.bf16.msra.mxu0 %v942
    %2166 = vmatprep.subr.bf16.mxu0 %v947
    %2167 = vmatpush1.bf16.msra.mxu0 %v946
    %2168 = vmatprep.subr.bf16.mxu0 %v951
    %2169 = vmatpush1.bf16.msra.mxu0 %v950
    %2170 = vmatprep.subr.bf16.mxu0 %v955
    %2171 = vmatpush1.bf16.msra.mxu0 %v954
    %2172 = vmatprep.subr.bf16.mxu0 %v959
    %2173 = vmatpush1.bf16.msra.mxu0 %v958
    %2174 = vmatprep.subr.bf16.mxu0 %v963
    %2175 = vmatpush1.bf16.msra.mxu0 %v962
    %2176 = vmatprep.subr.bf16.mxu0 %v967
    %2177 = vmatpush1.bf16.msra.mxu0 %v966
    %2178 = vmatprep.subr.bf16.mxu0 %v971
    %2179 = vmatpush1.bf16.msra.mxu0 %v970
    %2180 = vmatprep.subr.bf16.mxu0 %v975
    %2181 = vmatpush1.bf16.msra.mxu0 %v974
    %2182 = vmatprep.subr.bf16.mxu0 %v979
    %2183 = vmatpush1.bf16.msra.mxu0 %v978
    %2184 = vmatprep.subr.bf16.mxu0 %v983
    %2185 = vmatpush1.bf16.msra.mxu0 %v982
    %2186 = vmatprep.mubr.bf16.mxu0 %v2112
    %2187 = vmatmul.mubr.bf16.gmra.mrb[0].mxu0 %v2111
    %v2188 = vpop.f32.mrb[0].mxu0
    %v2189 = vadd.f32 %v447, %v2188
    %v2190 = vpop.f32.mrb[0].mxu0
    %v2191 = vadd.f32 %v451, %v2190
    %v2192 = vpop.f32.mrb[0].mxu0
    %v2193 = vpop.f32.mrb[0].mxu0
    %2194 = vdwg.mxu0
    %v2195 = vmul.f32 %v2148, 0.5
    %v2196 = vmul.f32 %v2150, 0.5
    %v2197 = vmul.f32 %v2189, 0.5
    %v2198 = vtanh.pop %v2195
    %v2199 = vtanh.pop %v2196
    %v2200 = vtanh.pop %v2197
    %v2201 = vmul.f32 %v2198, 0.5
    %v2202 = vmul.f32 %v2199, 0.5
    %v2203 = vmul.f32 %v2200, 0.5
    %v2204 = vadd.f32 %v2201, 0.5
    %v2205 = vadd.f32 %v2202, 0.5
    %v2206 = vadd.f32 %v2203, 0.5
    %v2207 = vtanh.pop %v2191
    %v2208 = vmul.f32 %v2205, %v1997
    %v2209 = vmul.f32 %v2204, %v2207
    %v2210 = vadd.f32 %v2208, %v2209
    %v2211 = vtanh.pop %v2210
    %v2212 = vmul.f32 %v2206, %v2211
    %s2213 = smul.u32 6, 4
    %s2214 = smul.addr %s2213, 8
    %s2215 = scalar_lea.vmem [#allocation2], %s2214
    %v2216 = vld [vmem:[%s2215] sm:$0xff]
    %v2217 = vld [vmem:[%s2215 + $0x8] sm:$0xff]
    %v2218 = vld [vmem:[%s2215 + $0x10] sm:$0xff]
    %v2219 = vld [vmem:[%s2215 + $0x18] sm:$0xff]
    %2220 = vmatprep.subr.bf16.mxu0 %v560
    %2221 = vmatpush1.bf16.msra.mxu0 %v559
    %2222 = vmatprep.subr.bf16.mxu0 %v564
    %2223 = vmatpush1.bf16.msra.mxu0 %v563
    %2224 = vmatprep.subr.bf16.mxu0 %v568
    %2225 = vmatpush1.bf16.msra.mxu0 %v567
    %2226 = vmatprep.subr.bf16.mxu0 %v572
    %2227 = vmatpush1.bf16.msra.mxu0 %v571
    %2228 = vmatprep.subr.bf16.mxu0 %v576
    %2229 = vmatpush1.bf16.msra.mxu0 %v575
    %2230 = vmatprep.subr.bf16.mxu0 %v580
    %2231 = vmatpush1.bf16.msra.mxu0 %v579
    %2232 = vmatprep.subr.bf16.mxu0 %v584
    %2233 = vmatpush1.bf16.msra.mxu0 %v583
    %2234 = vmatprep.subr.bf16.mxu0 %v588
    %2235 = vmatpush1.bf16.msra.mxu0 %v587
    %2236 = vmatprep.subr.bf16.mxu0 0
    %2237 = vmatpush1.bf16.msra.mxu0 0
    %2238 = vmatprep.subr.bf16.mxu0 0
    %2239 = vmatpush1.bf16.msra.mxu0 0
    %2240 = vmatprep.subr.bf16.mxu0 0
    %2241 = vmatpush1.bf16.msra.mxu0 0
    %2242 = vmatprep.subr.bf16.mxu0 0
    %2243 = vmatpush1.bf16.msra.mxu0 0
    %2244 = vmatprep.subr.bf16.mxu0 0
    %2245 = vmatpush1.bf16.msra.mxu0 0
    %2246 = vmatprep.subr.bf16.mxu0 0
    %2247 = vmatpush1.bf16.msra.mxu0 0
    %2248 = vmatprep.subr.bf16.mxu0 0
    %2249 = vmatpush1.bf16.msra.mxu0 0
    %2250 = vmatprep.subr.bf16.mxu0 0
    %2251 = vmatpush1.bf16.msra.mxu0 0
    %2252 = vmatprep.mubr.bf16.mxu0 0
    %2253 = vmatmul.mubr.bf16.gmra.mrb[0].mxu0 %v2111
    %v2254 = vpop.f32.mrb[0].mxu0
    %v2255 = vadd.f32 0.0, %v2254
    %v2256 = vpop.f32.mrb[0].mxu0
    %v2257 = vadd.f32 0.0, %v2256
    %v2258 = vpop.f32.mrb[0].mxu0
    %v2259 = vpop.f32.mrb[0].mxu0
    %2260 = vdwg.mxu0
    %2261 = vmatprep.subr.bf16.mxu0 %v562
    %2262 = vmatpush1.bf16.msra.mxu0 %v561
    %2263 = vmatprep.subr.bf16.mxu0 %v566
    %2264 = vmatpush1.bf16.msra.mxu0 %v565
    %2265 = vmatprep.subr.bf16.mxu0 %v570
    %2266 = vmatpush1.bf16.msra.mxu0 %v569
    %2267 = vmatprep.subr.bf16.mxu0 %v574
    %2268 = vmatpush1.bf16.msra.mxu0 %v573
    %2269 = vmatprep.subr.bf16.mxu0 %v578
    %2270 = vmatpush1.bf16.msra.mxu0 %v577
    %2271 = vmatprep.subr.bf16.mxu0 %v582
    %2272 = vmatpush1.bf16.msra.mxu0 %v581
    %2273 = vmatprep.subr.bf16.mxu0 %v586
    %2274 = vmatpush1.bf16.msra.mxu0 %v585
    %2275 = vmatprep.subr.bf16.mxu0 %v590
    %2276 = vmatpush1.bf16.msra.mxu0 %v589
    %2277 = vmatprep.subr.bf16.mxu0 0
    %2278 = vmatpush1.bf16.msra.mxu0 0
    %2279 = vmatprep.subr.bf16.mxu0 0
    %2280 = vmatpush1.bf16.msra.mxu0 0
    %2281 = vmatprep.subr.bf16.mxu0 0
    %2282 = vmatpush1.bf16.msra.mxu0 0
    %2283 = vmatprep.subr.bf16.mxu0 0
    %2284 = vmatpush1.bf16.msra.mxu0 0
    %2285 = vmatprep.subr.bf16.mxu0 0
    %2286 = vmatpush1.bf16.msra.mxu0 0
    %2287 = vmatprep.subr.bf16.mxu0 0
    %2288 = vmatpush1.bf16.msra.mxu0 0
    %2289 = vmatprep.subr.bf16.mxu0 0
    %2290 = vmatpush1.bf16.msra.mxu0 0
    %2291 = vmatprep.subr.bf16.mxu0 0
    %2292 = vmatpush1.bf16.msra.mxu0 0
    %2293 = vmatprep.mubr.bf16.mxu0 0
    %2294 = vmatmul.mubr.bf16.gmra.mrb[0].mxu0 %v2111
    %v2295 = vpop.f32.mrb[0].mxu0
    %v2296 = vadd.f32 0.0, %v2295
    %v2297 = vpop.f32.mrb[0].mxu0
    %v2298 = vadd.f32 0.0, %v2297
    %v2299 = vpop.f32.mrb[0].mxu0
    %v2300 = vpop.f32.mrb[0].mxu0
    %2301 = vdwg.mxu0
    %v2302 = vadd.f32 %v2216, %v2255
    %v2303 = vadd.f32 %v2217, %v2257
    %v2304 = vadd.f32 %v2218, %v2296
    %v2305 = vadd.f32 %v2219, %v2298
    %v2306 = vmul.f32 %v2302, 0.5
    %v2307 = vmul.f32 %v2303, 0.5
    %v2308 = vmul.f32 %v2304, 0.5
    %v2309 = vtanh.pop %v2306
    %v2310 = vtanh.pop %v2307
    %v2311 = vtanh.pop %v2308
    %v2312 = vmul.f32 %v2309, 0.5
    %v2313 = vmul.f32 %v2310, 0.5
    %v2314 = vmul.f32 %v2311, 0.5
    %v2315 = vadd.f32 %v2312, 0.5
    %v2316 = vadd.f32 %v2313, 0.5
    %v2317 = vadd.f32 %v2314, 0.5
    %v2318 = vtanh.pop %v2305
    %v2319 = vmul.f32 %v2316, %v2108
    %v2320 = vmul.f32 %v2315, %v2318
    %v2321 = vadd.f32 %v2319, %v2320
    %v2322 = vtanh.pop %v2321
    %v2323 = vmul.f32 %v2317, %v2322
    %v2324 = vpack.c.bf16 %v2323, %v2323
    %v2325 = vpack.c.bf16 %v2212, %v2212
    %2326 = vmatprep.subr.bf16.mxu0 %v921
    %2327 = vmatpush1.bf16.msra.mxu0 %v920
    %2328 = vmatprep.subr.bf16.mxu0 %v925
    %2329 = vmatpush1.bf16.msra.mxu0 %v924
    %2330 = vmatprep.subr.bf16.mxu0 %v929
    %2331 = vmatpush1.bf16.msra.mxu0 %v928
    %2332 = vmatprep.subr.bf16.mxu0 %v933
    %2333 = vmatpush1.bf16.msra.mxu0 %v932
    %2334 = vmatprep.subr.bf16.mxu0 %v937
    %2335 = vmatpush1.bf16.msra.mxu0 %v936
    %2336 = vmatprep.subr.bf16.mxu0 %v941
    %2337 = vmatpush1.bf16.msra.mxu0 %v940
    %2338 = vmatprep.subr.bf16.mxu0 %v945
    %2339 = vmatpush1.bf16.msra.mxu0 %v944
    %2340 = vmatprep.subr.bf16.mxu0 %v949
    %2341 = vmatpush1.bf16.msra.mxu0 %v948
    %2342 = vmatprep.subr.bf16.mxu0 %v953
    %2343 = vmatpush1.bf16.msra.mxu0 %v952
    %2344 = vmatprep.subr.bf16.mxu0 %v957
    %2345 = vmatpush1.bf16.msra.mxu0 %v956
    %2346 = vmatprep.subr.bf16.mxu0 %v961
    %2347 = vmatpush1.bf16.msra.mxu0 %v960
    %2348 = vmatprep.subr.bf16.mxu0 %v965
    %2349 = vmatpush1.bf16.msra.mxu0 %v964
    %2350 = vmatprep.subr.bf16.mxu0 %v969
    %2351 = vmatpush1.bf16.msra.mxu0 %v968
    %2352 = vmatprep.subr.bf16.mxu0 %v973
    %2353 = vmatpush1.bf16.msra.mxu0 %v972
    %2354 = vmatprep.subr.bf16.mxu0 %v977
    %2355 = vmatpush1.bf16.msra.mxu0 %v976
    %2356 = vmatprep.subr.bf16.mxu0 %v981
    %2357 = vmatpush1.bf16.msra.mxu0 %v980
    %2358 = vmatprep.mubr.bf16.mxu0 %v2325
    %2359 = vmatmul.mubr.bf16.gmra.mrb[0].mxu0 %v2324
    %v2360 = vpop.f32.mrb[0].mxu0
    %v2361 = vadd.f32 %v439, %v2360
    %v2362 = vpop.f32.mrb[0].mxu0
    %v2363 = vadd.f32 %v443, %v2362
    %v2364 = vpop.f32.mrb[0].mxu0
    %v2365 = vpop.f32.mrb[0].mxu0
    %2366 = vdwg.mxu0
    %2367 = vmatprep.subr.bf16.mxu0 %v923
    %2368 = vmatpush1.bf16.msra.mxu0 %v922
    %2369 = vmatprep.subr.bf16.mxu0 %v927
    %2370 = vmatpush1.bf16.msra.mxu0 %v926
    %2371 = vmatprep.subr.bf16.mxu0 %v931
    %2372 = vmatpush1.bf16.msra.mxu0 %v930
    %2373 = vmatprep.subr.bf16.mxu0 %v935
    %2374 = vmatpush1.bf16.msra.mxu0 %v934
    %2375 = vmatprep.subr.bf16.mxu0 %v939
    %2376 = vmatpush1.bf16.msra.mxu0 %v938
    %2377 = vmatprep.subr.bf16.mxu0 %v943
    %2378 = vmatpush1.bf16.msra.mxu0 %v942
    %2379 = vmatprep.subr.bf16.mxu0 %v947
    %2380 = vmatpush1.bf16.msra.mxu0 %v946
    %2381 = vmatprep.subr.bf16.mxu0 %v951
    %2382 = vmatpush1.bf16.msra.mxu0 %v950
    %2383 = vmatprep.subr.bf16.mxu0 %v955
    %2384 = vmatpush1.bf16.msra.mxu0 %v954
    %2385 = vmatprep.subr.bf16.mxu0 %v959
    %2386 = vmatpush1.bf16.msra.mxu0 %v958
    %2387 = vmatprep.subr.bf16.mxu0 %v963
    %2388 = vmatpush1.bf16.msra.mxu0 %v962
    %2389 = vmatprep.subr.bf16.mxu0 %v967
    %2390 = vmatpush1.bf16.msra.mxu0 %v966
    %2391 = vmatprep.subr.bf16.mxu0 %v971
    %2392 = vmatpush1.bf16.msra.mxu0 %v970
    %2393 = vmatprep.subr.bf16.mxu0 %v975
    %2394 = vmatpush1.bf16.msra.mxu0 %v974
    %2395 = vmatprep.subr.bf16.mxu0 %v979
    %2396 = vmatpush1.bf16.msra.mxu0 %v978
    %2397 = vmatprep.subr.bf16.mxu0 %v983
    %2398 = vmatpush1.bf16.msra.mxu0 %v982
    %2399 = vmatprep.mubr.bf16.mxu0 %v2325
    %2400 = vmatmul.mubr.bf16.gmra.mrb[0].mxu0 %v2324
    %v2401 = vpop.f32.mrb[0].mxu0
    %v2402 = vadd.f32 %v447, %v2401
    %v2403 = vpop.f32.mrb[0].mxu0
    %v2404 = vadd.f32 %v451, %v2403
    %v2405 = vpop.f32.mrb[0].mxu0
    %v2406 = vpop.f32.mrb[0].mxu0
    %2407 = vdwg.mxu0
    %v2408 = vmul.f32 %v2361, 0.5
    %v2409 = vmul.f32 %v2363, 0.5
    %v2410 = vmul.f32 %v2402, 0.5
    %v2411 = vtanh.pop %v2408
    %v2412 = vtanh.pop %v2409
    %v2413 = vtanh.pop %v2410
    %v2414 = vmul.f32 %v2411, 0.5
    %v2415 = vmul.f32 %v2412, 0.5
    %v2416 = vmul.f32 %v2413, 0.5
    %v2417 = vadd.f32 %v2414, 0.5
    %v2418 = vadd.f32 %v2415, 0.5
    %v2419 = vadd.f32 %v2416, 0.5
    %v2420 = vtanh.pop %v2404
    %v2421 = vmul.f32 %v2418, %v2210
    %v2422 = vmul.f32 %v2417, %v2420
    %v2423 = vadd.f32 %v2421, %v2422
    %v2424 = vtanh.pop %v2423
    %v2425 = vmul.f32 %v2419, %v2424
    %s2426 = smul.u32 7, 4
    %s2427 = smul.addr %s2426, 8
    %s2428 = scalar_lea.vmem [#allocation2], %s2427
    %v2429 = vld [vmem:[%s2428] sm:$0xff]
    %v2430 = vld [vmem:[%s2428 + $0x8] sm:$0xff]
    %v2431 = vld [vmem:[%s2428 + $0x10] sm:$0xff]
    %v2432 = vld [vmem:[%s2428 + $0x18] sm:$0xff]
    %2433 = vmatprep.subr.bf16.mxu0 %v560
    %2434 = vmatpush1.bf16.msra.mxu0 %v559
    %2435 = vmatprep.subr.bf16.mxu0 %v564
    %2436 = vmatpush1.bf16.msra.mxu0 %v563
    %2437 = vmatprep.subr.bf16.mxu0 %v568
    %2438 = vmatpush1.bf16.msra.mxu0 %v567
    %2439 = vmatprep.subr.bf16.mxu0 %v572
    %2440 = vmatpush1.bf16.msra.mxu0 %v571
    %2441 = vmatprep.subr.bf16.mxu0 %v576
    %2442 = vmatpush1.bf16.msra.mxu0 %v575
    %2443 = vmatprep.subr.bf16.mxu0 %v580
    %2444 = vmatpush1.bf16.msra.mxu0 %v579
    %2445 = vmatprep.subr.bf16.mxu0 %v584
    %2446 = vmatpush1.bf16.msra.mxu0 %v583
    %2447 = vmatprep.subr.bf16.mxu0 %v588
    %2448 = vmatpush1.bf16.msra.mxu0 %v587
    %2449 = vmatprep.subr.bf16.mxu0 0
    %2450 = vmatpush1.bf16.msra.mxu0 0
    %2451 = vmatprep.subr.bf16.mxu0 0
    %2452 = vmatpush1.bf16.msra.mxu0 0
    %2453 = vmatprep.subr.bf16.mxu0 0
    %2454 = vmatpush1.bf16.msra.mxu0 0
    %2455 = vmatprep.subr.bf16.mxu0 0
    %2456 = vmatpush1.bf16.msra.mxu0 0
    %2457 = vmatprep.subr.bf16.mxu0 0
    %2458 = vmatpush1.bf16.msra.mxu0 0
    %2459 = vmatprep.subr.bf16.mxu0 0
    %2460 = vmatpush1.bf16.msra.mxu0 0
    %2461 = vmatprep.subr.bf16.mxu0 0
    %2462 = vmatpush1.bf16.msra.mxu0 0
    %2463 = vmatprep.subr.bf16.mxu0 0
    %2464 = vmatpush1.bf16.msra.mxu0 0
    %2465 = vmatprep.mubr.bf16.mxu0 0
    %2466 = vmatmul.mubr.bf16.gmra.mrb[0].mxu0 %v2324
    %v2467 = vpop.f32.mrb[0].mxu0
    %v2468 = vadd.f32 0.0, %v2467
    %v2469 = vpop.f32.mrb[0].mxu0
    %v2470 = vadd.f32 0.0, %v2469
    %v2471 = vpop.f32.mrb[0].mxu0
    %v2472 = vpop.f32.mrb[0].mxu0
    %2473 = vdwg.mxu0
    %2474 = vmatprep.subr.bf16.mxu0 %v562
    %2475 = vmatpush1.bf16.msra.mxu0 %v561
    %2476 = vmatprep.subr.bf16.mxu0 %v566
    %2477 = vmatpush1.bf16.msra.mxu0 %v565
    %2478 = vmatprep.subr.bf16.mxu0 %v570
    %2479 = vmatpush1.bf16.msra.mxu0 %v569
    %2480 = vmatprep.subr.bf16.mxu0 %v574
    %2481 = vmatpush1.bf16.msra.mxu0 %v573
    %2482 = vmatprep.subr.bf16.mxu0 %v578
    %2483 = vmatpush1.bf16.msra.mxu0 %v577
    %2484 = vmatprep.subr.bf16.mxu0 %v582
    %2485 = vmatpush1.bf16.msra.mxu0 %v581
    %2486 = vmatprep.subr.bf16.mxu0 %v586
    %2487 = vmatpush1.bf16.msra.mxu0 %v585
    %2488 = vmatprep.subr.bf16.mxu0 %v590
    %2489 = vmatpush1.bf16.msra.mxu0 %v589
    %2490 = vmatprep.subr.bf16.mxu0 0
    %2491 = vmatpush1.bf16.msra.mxu0 0
    %2492 = vmatprep.subr.bf16.mxu0 0
    %2493 = vmatpush1.bf16.msra.mxu0 0
    %2494 = vmatprep.subr.bf16.mxu0 0
    %2495 = vmatpush1.bf16.msra.mxu0 0
    %2496 = vmatprep.subr.bf16.mxu0 0
    %2497 = vmatpush1.bf16.msra.mxu0 0
    %2498 = vmatprep.subr.bf16.mxu0 0
    %2499 = vmatpush1.bf16.msra.mxu0 0
    %2500 = vmatprep.subr.bf16.mxu0 0
    %2501 = vmatpush1.bf16.msra.mxu0 0
    %2502 = vmatprep.subr.bf16.mxu0 0
    %2503 = vmatpush1.bf16.msra.mxu0 0
    %2504 = vmatprep.subr.bf16.mxu0 0
    %2505 = vmatpush1.bf16.msra.mxu0 0
    %2506 = vmatprep.mubr.bf16.mxu0 0
    %2507 = vmatmul.mubr.bf16.gmra.mrb[0].mxu0 %v2324
    %v2508 = vpop.f32.mrb[0].mxu0
    %v2509 = vadd.f32 0.0, %v2508
    %v2510 = vpop.f32.mrb[0].mxu0
    %v2511 = vadd.f32 0.0, %v2510
    %v2512 = vpop.f32.mrb[0].mxu0
    %v2513 = vpop.f32.mrb[0].mxu0
    %2514 = vdwg.mxu0
    %v2515 = vadd.f32 %v2429, %v2468
    %v2516 = vadd.f32 %v2430, %v2470
    %v2517 = vadd.f32 %v2431, %v2509
    %v2518 = vadd.f32 %v2432, %v2511
    %v2519 = vmul.f32 %v2515, 0.5
    %v2520 = vmul.f32 %v2516, 0.5
    %v2521 = vmul.f32 %v2517, 0.5
    %v2522 = vtanh.pop %v2519
    %v2523 = vtanh.pop %v2520
    %v2524 = vtanh.pop %v2521
    %v2525 = vmul.f32 %v2522, 0.5
    %v2526 = vmul.f32 %v2523, 0.5
    %v2527 = vmul.f32 %v2524, 0.5
    %v2528 = vadd.f32 %v2525, 0.5
    %v2529 = vadd.f32 %v2526, 0.5
    %v2530 = vadd.f32 %v2527, 0.5
    %v2531 = vtanh.pop %v2518
    %v2532 = vmul.f32 %v2529, %v2321
    %v2533 = vmul.f32 %v2528, %v2531
    %v2534 = vadd.f32 %v2532, %v2533
    %v2535 = vtanh.pop %v2534
    %v2536 = vmul.f32 %v2530, %v2535
    %v2537 = vpack.c.bf16 %v2536, %v2536
    %v2538 = vpack.c.bf16 %v2425, %v2425
    %2539 = vmatprep.subr.bf16.mxu0 %v921
    %2540 = vmatpush1.bf16.msra.mxu0 %v920
    %2541 = vmatprep.subr.bf16.mxu0 %v925
    %2542 = vmatpush1.bf16.msra.mxu0 %v924
    %2543 = vmatprep.subr.bf16.mxu0 %v929
    %2544 = vmatpush1.bf16.msra.mxu0 %v928
    %2545 = vmatprep.subr.bf16.mxu0 %v933
    %2546 = vmatpush1.bf16.msra.mxu0 %v932
    %2547 = vmatprep.subr.bf16.mxu0 %v937
    %2548 = vmatpush1.bf16.msra.mxu0 %v936
    %2549 = vmatprep.subr.bf16.mxu0 %v941
    %2550 = vmatpush1.bf16.msra.mxu0 %v940
    %2551 = vmatprep.subr.bf16.mxu0 %v945
    %2552 = vmatpush1.bf16.msra.mxu0 %v944
    %2553 = vmatprep.subr.bf16.mxu0 %v949
    %2554 = vmatpush1.bf16.msra.mxu0 %v948
    %2555 = vmatprep.subr.bf16.mxu0 %v953
    %2556 = vmatpush1.bf16.msra.mxu0 %v952
    %2557 = vmatprep.subr.bf16.mxu0 %v957
    %2558 = vmatpush1.bf16.msra.mxu0 %v956
    %2559 = vmatprep.subr.bf16.mxu0 %v961
    %2560 = vmatpush1.bf16.msra.mxu0 %v960
    %2561 = vmatprep.subr.bf16.mxu0 %v965
    %2562 = vmatpush1.bf16.msra.mxu0 %v964
    %2563 = vmatprep.subr.bf16.mxu0 %v969
    %2564 = vmatpush1.bf16.msra.mxu0 %v968
    %2565 = vmatprep.subr.bf16.mxu0 %v973
    %2566 = vmatpush1.bf16.msra.mxu0 %v972
    %2567 = vmatprep.subr.bf16.mxu0 %v977
    %2568 = vmatpush1.bf16.msra.mxu0 %v976
    %2569 = vmatprep.subr.bf16.mxu0 %v981
    %2570 = vmatpush1.bf16.msra.mxu0 %v980
    %2571 = vmatprep.mubr.bf16.mxu0 %v2538
    %2572 = vmatmul.mubr.bf16.gmra.mrb[0].mxu0 %v2537
    %v2573 = vpop.f32.mrb[0].mxu0
    %v2574 = vadd.f32 %v439, %v2573
    %v2575 = vpop.f32.mrb[0].mxu0
    %v2576 = vadd.f32 %v443, %v2575
    %v2577 = vpop.f32.mrb[0].mxu0
    %v2578 = vpop.f32.mrb[0].mxu0
    %2579 = vdwg.mxu0
    %2580 = vmatprep.subr.bf16.mxu0 %v923
    %2581 = vmatpush1.bf16.msra.mxu0 %v922
    %2582 = vmatprep.subr.bf16.mxu0 %v927
    %2583 = vmatpush1.bf16.msra.mxu0 %v926
    %2584 = vmatprep.subr.bf16.mxu0 %v931
    %2585 = vmatpush1.bf16.msra.mxu0 %v930
    %2586 = vmatprep.subr.bf16.mxu0 %v935
    %2587 = vmatpush1.bf16.msra.mxu0 %v934
    %2588 = vmatprep.subr.bf16.mxu0 %v939
    %2589 = vmatpush1.bf16.msra.mxu0 %v938
    %2590 = vmatprep.subr.bf16.mxu0 %v943
    %2591 = vmatpush1.bf16.msra.mxu0 %v942
    %2592 = vmatprep.subr.bf16.mxu0 %v947
    %2593 = vmatpush1.bf16.msra.mxu0 %v946
    %2594 = vmatprep.subr.bf16.mxu0 %v951
    %2595 = vmatpush1.bf16.msra.mxu0 %v950
    %2596 = vmatprep.subr.bf16.mxu0 %v955
    %2597 = vmatpush1.bf16.msra.mxu0 %v954
    %2598 = vmatprep.subr.bf16.mxu0 %v959
    %2599 = vmatpush1.bf16.msra.mxu0 %v958
    %2600 = vmatprep.subr.bf16.mxu0 %v963
    %2601 = vmatpush1.bf16.msra.mxu0 %v962
    %2602 = vmatprep.subr.bf16.mxu0 %v967
    %2603 = vmatpush1.bf16.msra.mxu0 %v966
    %2604 = vmatprep.subr.bf16.mxu0 %v971
    %2605 = vmatpush1.bf16.msra.mxu0 %v970
    %2606 = vmatprep.subr.bf16.mxu0 %v975
    %2607 = vmatpush1.bf16.msra.mxu0 %v974
    %2608 = vmatprep.subr.bf16.mxu0 %v979
    %2609 = vmatpush1.bf16.msra.mxu0 %v978
    %2610 = vmatprep.subr.bf16.mxu0 %v983
    %2611 = vmatpush1.bf16.msra.mxu0 %v982
    %2612 = vmatprep.mubr.bf16.mxu0 %v2538
    %2613 = vmatmul.mubr.bf16.gmra.mrb[0].mxu0 %v2537
    %v2614 = vpop.f32.mrb[0].mxu0
    %v2615 = vadd.f32 %v447, %v2614
    %v2616 = vpop.f32.mrb[0].mxu0
    %v2617 = vadd.f32 %v451, %v2616
    %v2618 = vpop.f32.mrb[0].mxu0
    %v2619 = vpop.f32.mrb[0].mxu0
    %2620 = vdwg.mxu0
    %v2621 = vmul.f32 %v2574, 0.5
    %v2622 = vmul.f32 %v2576, 0.5
    %v2623 = vmul.f32 %v2615, 0.5
    %v2624 = vtanh.pop %v2621
    %v2625 = vtanh.pop %v2622
    %v2626 = vtanh.pop %v2623
    %v2627 = vmul.f32 %v2624, 0.5
    %v2628 = vmul.f32 %v2625, 0.5
    %v2629 = vmul.f32 %v2626, 0.5
    %v2630 = vadd.f32 %v2627, 0.5
    %v2631 = vadd.f32 %v2628, 0.5
    %v2632 = vadd.f32 %v2629, 0.5
    %v2633 = vtanh.pop %v2617
    %v2634 = vmul.f32 %v2631, %v2423
    %v2635 = vmul.f32 %v2630, %v2633
    %v2636 = vadd.f32 %v2634, %v2635
    %v2637 = vtanh.pop %v2636
    %v2638 = vmul.f32 %v2632, %v2637
    %v2639 = vpack.c.bf16 %v2638, %v2638
    %v2640 = vld [vmem:[#allocation8] sm:$0xf]
    %v2641 = vld [vmem:[#allocation8 + $0x4] sm:$0xf]
    %v2642 = vld [vmem:[#allocation8 + $0x8] sm:$0xf]
    %v2643 = vld [vmem:[#allocation8 + $0xc] sm:$0xf]
    %v2644 = vld [vmem:[#allocation8 + $0x10] sm:$0xf]
    %v2645 = vld [vmem:[#allocation8 + $0x14] sm:$0xf]
    %v2646 = vld [vmem:[#allocation8 + $0x18] sm:$0xf]
    %v2647 = vld [vmem:[#allocation8 + $0x1c] sm:$0xf]
    %v2648 = vld [vmem:[#allocation8 + $0x20] sm:$0xf]
    %v2649 = vld [vmem:[#allocation8 + $0x24] sm:$0xf]
    %v2650 = vld [vmem:[#allocation8 + $0x28] sm:$0xf]
    %v2651 = vld [vmem:[#allocation8 + $0x2c] sm:$0xf]
    %v2652 = vld [vmem:[#allocation8 + $0x30] sm:$0xf]
    %v2653 = vld [vmem:[#allocation8 + $0x34] sm:$0xf]
    %v2654 = vld [vmem:[#allocation8 + $0x38] sm:$0xf]
    %v2655 = vld [vmem:[#allocation8 + $0x3c] sm:$0xf]
    %v2656 = vld [vmem:[%s7] sm:$0x1]
    %v2658 = vlaneseq
    %v2659 = vshrl.u32 %v2658, 7
    %v2660 = vsub.s32 0, %v2659
    %v2661 = vrot.slane %v2656, %v2660
    %v2679 = vunpack.c.l.b16 %v2640
    %v2680 = vunpack.c.l.b16 %v2641
    %v2681 = vunpack.c.l.b16 %v2642
    %v2682 = vunpack.c.l.b16 %v2643
    %v2683 = vunpack.c.l.b16 %v2644
    %v2684 = vunpack.c.l.b16 %v2645
    %v2685 = vunpack.c.l.b16 %v2646
    %v2686 = vunpack.c.l.b16 %v2647
    %v2687 = vunpack.c.l.b16 %v2648
    %v2688 = vunpack.c.l.b16 %v2649
    %v2689 = vunpack.c.l.b16 %v2650
    %v2690 = vunpack.c.l.b16 %v2651
    %v2691 = vunpack.c.l.b16 %v2652
    %v2692 = vunpack.c.l.b16 %v2653
    %v2693 = vunpack.c.l.b16 %v2654
    %v2694 = vunpack.c.l.b16 %v2655
    %v2695 = vpack.c.b16 %v2680, %v2679
    %v2696 = vpack.c.b16 %v2682, %v2681
    %v2697 = vpack.c.b16 %v2684, %v2683
    %v2698 = vpack.c.b16 %v2686, %v2685
    %v2699 = vpack.c.b16 %v2688, %v2687
    %v2700 = vpack.c.b16 %v2690, %v2689
    %v2701 = vpack.c.b16 %v2692, %v2691
    %v2702 = vpack.c.b16 %v2694, %v2693
    %2711 = vmatprep.subr.bf16.mxu0 0
    %2712 = vmatpush1.bf16.msra.mxu0 %v2695
    %2713 = vmatprep.subr.bf16.mxu0 0
    %2714 = vmatpush1.bf16.msra.mxu0 %v2696
    %2715 = vmatprep.subr.bf16.mxu0 0
    %2716 = vmatpush1.bf16.msra.mxu0 %v2697
    %2717 = vmatprep.subr.bf16.mxu0 0
    %2718 = vmatpush1.bf16.msra.mxu0 %v2698
    %2719 = vmatprep.subr.bf16.mxu0 0
    %2720 = vmatpush1.bf16.msra.mxu0 %v2699
    %2721 = vmatprep.subr.bf16.mxu0 0
    %2722 = vmatpush1.bf16.msra.mxu0 %v2700
    %2723 = vmatprep.subr.bf16.mxu0 0
    %2724 = vmatpush1.bf16.msra.mxu0 %v2701
    %2725 = vmatprep.subr.bf16.mxu0 0
    %2726 = vmatpush1.bf16.msra.mxu0 %v2702
    %2727 = vmatprep.subr.bf16.mxu0 0
    %2728 = vmatpush1.bf16.msra.mxu0 0
    %2729 = vmatprep.subr.bf16.mxu0 0
    %2730 = vmatpush1.bf16.msra.mxu0 0
    %2731 = vmatprep.subr.bf16.mxu0 0
    %2732 = vmatpush1.bf16.msra.mxu0 0
    %2733 = vmatprep.subr.bf16.mxu0 0
    %2734 = vmatpush1.bf16.msra.mxu0 0
    %2735 = vmatprep.subr.bf16.mxu0 0
    %2736 = vmatpush1.bf16.msra.mxu0 0
    %2737 = vmatprep.subr.bf16.mxu0 0
    %2738 = vmatpush1.bf16.msra.mxu0 0
    %2739 = vmatprep.subr.bf16.mxu0 0
    %2740 = vmatpush1.bf16.msra.mxu0 0
    %2741 = vmatprep.subr.bf16.mxu0 0
    %2742 = vmatpush1.bf16.msra.mxu0 0
    %2743 = vmatprep.mubr.bf16.mxu0 0
    %2744 = vmatmul.mubr.bf16.gmra.mrb[0].mxu0 %v2639
    %v2745 = vpop.f32.mrb[0].mxu0
    %v2746 = vadd.f32 %v2661, %v2745
    %v2747 = vpop.f32.mrb[0].mxu0
    %v2748 = vpop.f32.mrb[0].mxu0
    %v2749 = vpop.f32.mrb[0].mxu0
    %2750 = vdwg.mxu0
    %2751 = vst [vmem:[#allocation9] sm:$0xff] %v2746
    // Predicated region
    $region46: #{tpu_custom_call.1} parent=1 // pred_check
      _
    $region47: #{tpu_custom_call.1} parent=1 // pred_check_branch
      %2753 = sbr.rel (0) target = $region49
    $region48: #{tpu_custom_call.1} parent=1 // pred_region
      %s2755 = ssub.s32 128, 128
      %2756 = vsyncadd [#allocation5], %s2755
      %s2758 = sshll.u32 [#allocation9], 4
      %s2759 = int_to_ptr.vmem [resolvable:$true] %s2758
      %2761 = dma.vmem_to_hbm [thread:$0]  %s2759, 128, %s8, [#allocation5]
    $region49: #{tpu_custom_call.1} parent=1 // pred_fallthru
      _
    // Predicated region
    $region50: #{tpu_custom_call.1} parent=1 // pred_check
      _
    $region51: #{tpu_custom_call.1} parent=1 // pred_check_branch
      %2763 = sbr.rel (0) target = $region53
    $region52: #{tpu_custom_call.1} parent=1 // pred_region
      %2764 = dma.done [#allocation5], 128
    $region53: #{tpu_custom_call.1} parent=1 // pred_fallthru
      _
    %2765 = vsyncpa [#allocation4], 1
    %2766 = vsyncpa [#allocation7], 1
    %2767 = vsyncpa [#allocation5], 1

</llo_original>
